<compile_context>
chip_gen: v7x
topology: tpu7x:2x2x1
jax: 0.10.0
libtpu: 0.0.40
codegen_flags: <defaults>
</compile_context>

<pallas_src>
import functools

import jax
import jax.numpy as jnp
from jax.experimental import pallas as pl
from jax.experimental.pallas import tpu as pltpu


def _round_up(v, m):
    return (v + m - 1) // m * m


@functools.lru_cache(maxsize=None)
def _vmem_limit_bytes():
    """Generation-aware scoped-VMEM budget, leaving room for double-buffering."""
    cap = 64 * 1024 * 1024
    try:
        info_fn = getattr(pltpu, "get_tpu_info", None)
        if info_fn is not None:
            cap = int(getattr(info_fn(), "vmem_capacity_bytes", cap))
    except Exception:
        pass
    return min(cap * 3 // 4, 100 * 1024 * 1024)


def _sigmoid_approx(x):
    # exp + approximate reciprocal both go to the EUP slot, keeping the VALU
    # free for the fg*c + ig*tanh(g) chain.  Error ~2^-12 (fine for gates).
    return pl.reciprocal(1.0 + jnp.exp(-x), approx=True)


def _fill_cols(cols_ref, x, mask_ref, *, k, pad, img_w, c):
    """Write im2col rows (tap-major, channel-minor) of `x` ((c, N), N flattened
    in (b, y, x) order) for a stride-1 'same' kxk conv into the VMEM scratch
    `cols_ref` ((k*k*c, N)).

    Taps are realized with pltpu.roll on the lane axis (XLU slot) and zeroed at
    image boundaries via precomputed tap-major channel-broadcast masks, so the
    conv becomes a single (O, k*k*c) @ (k*k*c, N) MXU matmul downstream.
    """
    n = x.shape[-1]
    for ky in range(k):
        for kx in range(k):
            tap = ky * k + kx
            dy, dx = ky - pad, kx - pad
            s = dy * img_w + dx
            row0 = tap * c
            if s == 0:
                cols_ref[row0:row0 + c, :] = x            # center tap: always valid
            else:
                rolled = pltpu.roll(x, (-s) % n, axis=1)
                cols_ref[row0:row0 + c, :] = rolled * mask_ref[row0:row0 + c, :]


# ----------------------------------------------------------------------------
# Fused per-layer kernel: (inline BN of previous layer) + x-conv + recurrent
# h-conv + LSTM gates + BN batch-statistics accumulation.
# ----------------------------------------------------------------------------
def _layer_scan_kernel(x_ref, wx_ref, wh_ref, b_ref, wci_ref, wcf_ref, wco_ref,
                       maskx_ref, maskh_ref, scale_ref, offset_ref,
                       hseq_ref, sum_ref, ssq_ref,
                       h_sc, c_sc, colsx_sc, colsh_sc,
                       *, k, pad, img_w, cin_pad, cout):
    t = pl.program_id(1)

    @pl.when(t == 0)
    def _():
        h_sc[...] = jnp.zeros_like(h_sc)
        c_sc[...] = jnp.zeros_like(c_sc)
        sum_ref[...] = jnp.zeros_like(sum_ref)
        ssq_ref[...] = jnp.zeros_like(ssq_ref)

    # Previous layer's BatchNorm applied inline as a per-channel affine
    # (identity for layer 0).  Zero-padding semantics of the conv are preserved
    # because out-of-image taps are masked AFTER the affine.
    x = x_ref[0] * scale_ref[...] + offset_ref[...]                 # (Cin_pad, N')
    _fill_cols(colsx_sc, x, maskx_ref, k=k, pad=pad, img_w=img_w, c=cin_pad)

    h = h_sc[...]                                                   # (Cout, N')
    c = c_sc[...]
    _fill_cols(colsh_sc, h, maskh_ref, k=k, pad=pad, img_w=img_w, c=cout)

    # bf16 operands feed the MXU; accumulation and all gate math stay in f32.
    gates = (jnp.dot(wx_ref[...], colsx_sc[...].astype(jnp.bfloat16),
                     preferred_element_type=jnp.float32)
             + jnp.dot(wh_ref[...], colsh_sc[...].astype(jnp.bfloat16),
                       preferred_element_type=jnp.float32)
             + b_ref[...])                                          # (4Cout, N')

    i_g = _sigmoid_approx(gates[0 * cout:1 * cout] + wci_ref[...] * c)
    f_g = _sigmoid_approx(gates[1 * cout:2 * cout] + wcf_ref[...] * c)
    c_new = f_g * c + i_g * jnp.tanh(gates[2 * cout:3 * cout])      # activation='tanh'
    o_g = _sigmoid_approx(gates[3 * cout:4 * cout] + wco_ref[...] * c_new)
    h_new = o_g * jnp.tanh(c_new)

    h_sc[...] = h_new
    c_sc[...] = c_new
    hseq_ref[0] = h_new

    # BatchNorm3d batch statistics (per channel, over T and N), accumulated in
    # the VMEM-resident tiny stat outputs.
    sum_ref[0] = sum_ref[0] + jnp.sum(h_new, axis=-1, keepdims=True)
    ssq_ref[0] = ssq_ref[0] + jnp.sum(h_new * h_new, axis=-1, keepdims=True)


def convlstm_layer_scan(x_seq, w_x, w_h, b, wci, wcf, wco, maskx, maskh,
                        scale, offset, *, k, pad, img_w, batch_chunks):
    t_len, cin_pad, n = x_seq.shape
    cout = w_x.shape[0] // 4
    n_chunk = n // batch_chunks
    kern = functools.partial(_layer_scan_kernel, k=k, pad=pad, img_w=img_w,
                             cin_pad=cin_pad, cout=cout)
    const2 = lambda bc, t: (0, 0)
    return pl.pallas_call(
        kern,
        out_shape=(
            jax.ShapeDtypeStruct((t_len, cout, n), jnp.float32),          # h sequence
            jax.ShapeDtypeStruct((batch_chunks, cout, 1), jnp.float32),   # BN sum
            jax.ShapeDtypeStruct((batch_chunks, cout, 1), jnp.float32),   # BN sum sq
        ),
        grid_spec=pltpu.PrefetchScalarGridSpec(
            num_scalar_prefetch=0,
            grid=(batch_chunks, t_len),
            in_specs=[
                pl.BlockSpec((1, cin_pad, n_chunk), lambda bc, t: (t, 0, bc)),
                pl.BlockSpec(w_x.shape, const2),        # resident, bf16
                pl.BlockSpec(w_h.shape, const2),        # resident, bf16
                pl.BlockSpec(b.shape, const2),          # resident
                pl.BlockSpec(wci.shape, const2),        # resident
                pl.BlockSpec(wcf.shape, const2),        # resident
                pl.BlockSpec(wco.shape, const2),        # resident
                pl.BlockSpec(maskx.shape, const2),      # resident
                pl.BlockSpec(maskh.shape, const2),      # resident
                pl.BlockSpec(scale.shape, const2),      # resident
                pl.BlockSpec(offset.shape, const2),     # resident
            ],
            out_specs=[
                pl.BlockSpec((1, cout, n_chunk), lambda bc, t: (t, 0, bc)),
                pl.BlockSpec((1, cout, 1), lambda bc, t: (bc, 0, 0)),
                pl.BlockSpec((1, cout, 1), lambda bc, t: (bc, 0, 0)),
            ],
            scratch_shapes=[
                pltpu.VMEM((cout, n_chunk), jnp.float32),              # h state
                pltpu.VMEM((cout, n_chunk), jnp.float32),              # c state
                pltpu.VMEM((k * k * cin_pad, n_chunk), jnp.float32),   # x im2col
                pltpu.VMEM((k * k * cout, n_chunk), jnp.float32),      # h im2col
            ],
        ),
        compiler_params=pltpu.CompilerParams(
            dimension_semantics=("parallel", "arbitrary"),
            vmem_limit_bytes=_vmem_limit_bytes()),
    )(x_seq, w_x, w_h, b, wci, wcf, wco, maskx, maskh, scale, offset)


# ----------------------------------------------------------------------------
# Final Conv2d + Sigmoid on the last timestep (previous BN applied inline).
# ----------------------------------------------------------------------------
def _final_conv_kernel(x_ref, scale_ref, offset_ref, w_ref, b_ref, mask_ref,
                       o_ref, cols_sc, *, k, pad, img_w, cin):
    x = x_ref[...] * scale_ref[...] + offset_ref[...]
    _fill_cols(cols_sc, x, mask_ref, k=k, pad=pad, img_w=img_w, c=cin)
    y = jnp.dot(w_ref[...], cols_sc[...].astype(jnp.bfloat16),
                preferred_element_type=jnp.float32) + b_ref[...]
    # Exact sigmoid for the public output (per review correctness note).
    o_ref[...] = jax.nn.sigmoid(y)


def final_conv_sigmoid(x_last, scale, offset, w, b, masks, *, k, pad, img_w):
    cin, n = x_last.shape
    cnum = w.shape[0]
    return pl.pallas_call(
        functools.partial(_final_conv_kernel, k=k, pad=pad, img_w=img_w, cin=cin),
        out_shape=jax.ShapeDtypeStruct((cnum, n), jnp.float32),
        in_specs=[pl.BlockSpec(memory_space=pltpu.MemorySpace.VMEM)] * 6,
        out_specs=pl.BlockSpec(memory_space=pltpu.MemorySpace.VMEM),
        scratch_shapes=[pltpu.VMEM((k * k * cin, n), jnp.float32)],
        compiler_params=pltpu.CompilerParams(vmem_limit_bytes=_vmem_limit_bytes()),
    )(x_last, scale, offset, w, b, masks)


# ----------------------------------------------------------------------------
# Host-side helpers: conv boundary masks, parameter init / conversion, forward.
# ----------------------------------------------------------------------------
def make_conv_masks(batch, h, w, k, pad):
    """(k*k, batch*h*w) validity masks for the roll-based 'same' conv taps."""
    n = batch * h * w
    idx = jnp.arange(n, dtype=jnp.int32)
    xx = idx % w
    yy = (idx // w) % h
    rows = []
    for ky in range(k):
        for kx in range(k):
            dy, dx = ky - pad, kx - pad
            valid = ((yy + dy >= 0) & (yy + dy < h) &
                     (xx + dx >= 0) & (xx + dx < w))
            rows.append(valid.astype(jnp.float32))
    return jnp.stack(rows, axis=0)


def _conv_weight_to_mat(w):
    """PyTorch (O, C, kh, kw) -> (O, kh*kw*C), matching tap-major im2col rows."""
    o, c, kh, kw = w.shape
    return jnp.transpose(w, (0, 2, 3, 1)).reshape(o, kh * kw * c)


def init_params(key, num_channels, num_kernels, kernel_size, frame_size, num_layers):
    """PyTorch-layout parameters (used by the pure-JAX reference)."""
    k = kernel_size
    h, w = frame_size

    def conv_init(rng, cin, cout):
        kw_, kb_ = jax.random.split(rng)
        fan_in = cin * k * k
        bound = 1.0 / (fan_in ** 0.5)
        wgt = jax.random.uniform(kw_, (cout, cin, k, k), jnp.float32, -bound, bound)
        bias = jax.random.uniform(kb_, (cout,), jnp.float32, -bound, bound)
        return wgt, bias

    keys = jax.random.split(key, num_layers + 1)
    layers = []
    cin = num_channels
    for l in range(num_layers):
        k1, k2, k3, k4 = jax.random.split(keys[l], 4)
        w_conv, b_conv = conv_init(k1, cin + num_kernels, 4 * num_kernels)
        # Peephole weights are uninitialized nn.Parameter in PyTorch -> small normals.
        wci = 0.1 * jax.random.normal(k2, (num_kernels, h, w), jnp.float32)
        wcf = 0.1 * jax.random.normal(k3, (num_kernels, h, w), jnp.float32)
        wco = 0.1 * jax.random.normal(k4, (num_kernels, h, w), jnp.float32)
        layers.append(dict(w_conv=w_conv, b_conv=b_conv, wci=wci, wcf=wcf, wco=wco,
                           gamma=jnp.ones((num_kernels,), jnp.float32),
                           beta=jnp.zeros((num_kernels,), jnp.float32)))
        cin = num_kernels
    wf, bf = conv_init(keys[-1], num_kernels, num_channels)
    return {"layers": layers, "final": dict(w_conv=wf, b_conv=bf)}


def prepare_kernel_params(tparams):
    """Convert PyTorch-layout params to the kernel layout (bf16 MXU weights)."""
    layers = []
    for lp in tparams["layers"]:
        w_full = lp["w_conv"]                     # (4Co, Cin+Co, k, k)
        co4, c_all, k, _ = w_full.shape
        co = co4 // 4
        cin = c_all - co
        cin_pad = _round_up(cin, 8)
        # Split the cat([X, H]) conv into X-part and H-part; pad X channels to a
        # sublane multiple so the tap writes into the cols scratch stay aligned.
        w_xp = jnp.zeros((co4, cin_pad, k, k), jnp.float32).at[:, :cin].set(
            w_full[:, :cin])
        layers.append(dict(
            w_x=_conv_weight_to_mat(w_xp).astype(jnp.bfloat16),
            w_h=_conv_weight_to_mat(w_full[:, cin:]).astype(jnp.bfloat16),
            b=lp["b_conv"].reshape(co4, 1).astype(jnp.float32),
            wci=lp["wci"].reshape(co, -1),
            wcf=lp["wcf"].reshape(co, -1),
            wco=lp["wco"].reshape(co, -1),
            gamma=lp["gamma"], beta=lp["beta"]))
    wf = tparams["final"]["w_conv"]
    final = dict(w=_conv_weight_to_mat(wf).astype(jnp.bfloat16),
                 b=tparams["final"]["b_conv"].reshape(wf.shape[0], 1))
    return {"layers": layers, "final": final}


def seq2seq_forward(params, x, *, kernel_size, padding, batch_chunks=1, eps=1e-5):
    b, c0, t_len, hgt, wid = x.shape
    k, p = kernel_size, padding
    assert b % batch_chunks == 0
    b_chunk = b // batch_chunks
    n = b * hgt * wid
    n_chunk = b_chunk * hgt * wid
    assert n_chunk % 128 == 0, "per-chunk lane width must be a multiple of 128"

    base_masks = make_conv_masks(b_chunk, hgt, wid, k, p)         # (k*k, n_chunk)

    # Public NCDHW -> internal lane-dense (T, C, B*H*W).  Layout transposes only
    # happen here and at the final output.
    cur = jnp.transpose(x, (2, 1, 0, 3, 4)).reshape(t_len, c0, n)
    scale = jnp.ones((c0, 1), jnp.float32)        # layer-0 "BN" = identity
    offset = jnp.zeros((c0, 1), jnp.float32)

    for lp in params["layers"]:
        cout = lp["wci"].shape[0]
        cin = cur.shape[1]
        cin_pad = _round_up(cin, 8)
        if cin_pad != cin:
            cur = jnp.pad(cur, ((0, 0), (0, cin_pad - cin), (0, 0)))
            scale = jnp.pad(scale, ((0, cin_pad - cin), (0, 0)))
            offset = jnp.pad(offset, ((0, cin_pad - cin), (0, 0)))

        # Tap-major, channel-broadcast masks (no sublane broadcasts in-kernel).
        maskx = jnp.repeat(base_masks, cin_pad, axis=0)            # (k*k*Cin_pad, n')
        maskh = jnp.repeat(base_masks, cout, axis=0)               # (k*k*Co, n')
        # Peepholes broadcast over the per-chunk batch once; resident in VMEM.
        wci = jnp.broadcast_to(lp["wci"][:, None, :],
                               (cout, b_chunk, hgt * wid)).reshape(cout, n_chunk)
        wcf = jnp.broadcast_to(lp["wcf"][:, None, :],
                               (cout, b_chunk, hgt * wid)).reshape(cout, n_chunk)
        wco = jnp.broadcast_to(lp["wco"][:, None, :],
                               (cout, b_chunk, hgt * wid)).reshape(cout, n_chunk)

        h_seq, ssum, ssq = convlstm_layer_scan(
            cur, lp["w_x"], lp["w_h"], lp["b"], wci, wcf, wco, maskx, maskh,
            scale, offset, k=k, pad=p, img_w=wid, batch_chunks=batch_chunks)

        # BatchNorm3d (training mode, biased variance) from the in-kernel stats;
        # applied as a per-channel affine inside the NEXT kernel's prologue.
        cnt = float(t_len * n)
        mean = jnp.sum(ssum, axis=0) / cnt                         # (Co, 1)
        var = jnp.maximum(jnp.sum(ssq, axis=0) / cnt - mean * mean, 0.0)
        scale = lp["gamma"].reshape(cout, 1) * jax.lax.rsqrt(var + eps)
        offset = lp["beta"].reshape(cout, 1) - mean * scale
        cur = h_seq

    # Final Conv2d + Sigmoid on the last timestep (last layer's BN applied inline).
    cin_f = cur.shape[1]
    maskf = jnp.repeat(make_conv_masks(b, hgt, wid, k, p), cin_f, axis=0)
    y = final_conv_sigmoid(cur[-1], scale, offset, params["final"]["w"],
                           params["final"]["b"], maskf, k=k, pad=p, img_w=wid)
    cnum = y.shape[0]
    return jnp.transpose(y.reshape(cnum, b, hgt, wid), (1, 0, 2, 3))


# ----------------------------------------------------------------------------
# Pure-JAX reference (mirrors the PyTorch module) for a correctness check.
# ----------------------------------------------------------------------------
def reference_forward(tparams, x, *, kernel_size, padding, eps=1e-5):
    p = padding
    b, _, t_len, hgt, wid = x.shape
    prec = jax.lax.Precision.HIGHEST

    def conv2d(z, w, bias):
        y = jax.lax.conv_general_dilated(
            z, w, (1, 1), [(p, p), (p, p)],
            dimension_numbers=("NCHW", "OIHW", "NCHW"), precision=prec)
        return y + bias[None, :, None, None]

    cur = x
    for lp in tparams["layers"]:
        co = lp["wci"].shape[0]
        H = jnp.zeros((b, co, hgt, wid), jnp.float32)
        C = jnp.zeros_like(H)
        outs = []
        for t in range(t_len):
            conv = conv2d(jnp.concatenate([cur[:, :, t], H], axis=1),
                          lp["w_conv"], lp["b_conv"])
            i_c, f_c, g_c, o_c = jnp.split(conv, 4, axis=1)
            ig = jax.nn.sigmoid(i_c + lp["wci"][None] * C)
            fg = jax.nn.sigmoid(f_c + lp["wcf"][None] * C)
            C = fg * C + ig * jnp.tanh(g_c)
            og = jax.nn.sigmoid(o_c + lp["wco"][None] * C)
            H = og * jnp.tanh(C)
            outs.append(H)
        seq = jnp.stack(outs, axis=2)                              # (B, Co, T, H, W)
        mean = jnp.mean(seq, axis=(0, 2, 3, 4), keepdims=True)
        var = jnp.mean((seq - mean) ** 2, axis=(0, 2, 3, 4), keepdims=True)
        cur = ((seq - mean) * jax.lax.rsqrt(var + eps)
               * lp["gamma"][None, :, None, None, None]
               + lp["beta"][None, :, None, None, None])
    y = conv2d(cur[:, :, -1], tparams["final"]["w_conv"], tparams["final"]["b_conv"])
    return jax.nn.sigmoid(y)


if __name__ == "__main__":
    num_channels = 2
    num_kernels = 8
    kernel_size = 3
    padding = 1
    frame_size = (16, 16)
    num_layers = 2
    batch, seq_len = 2, 4

    key = jax.random.PRNGKey(0)
    kp, kx = jax.random.split(key)
    tparams = init_params(kp, num_channels, num_kernels, kernel_size,
                          frame_size, num_layers)
    kparams = prepare_kernel_params(tparams)
    x = jax.random.normal(kx, (batch, num_channels, seq_len, *frame_size),
                          jnp.float32)

    # Single-chunk path (one TensorCore: v5e / v6e).
    fwd1 = jax.jit(functools.partial(seq2seq_forward, kernel_size=kernel_size,
                                     padding=padding, batch_chunks=1))
    y1 = fwd1(kparams, x)
    jax.block_until_ready(y1)

    # Batch-chunked path: leading "parallel" grid axis -> both TCs on v7x.
    fwd2 = jax.jit(functools.partial(seq2seq_forward, kernel_size=kernel_size,
                                     padding=padding, batch_chunks=2))
    y2 = fwd2(kparams, x)
    jax.block_until_ready(y2)

    y_ref = jax.jit(functools.partial(reference_forward, kernel_size=kernel_size,
                                      padding=padding))(tparams, x)
    jax.block_until_ready(y_ref)

    assert y1.shape == (batch, num_channels, *frame_size)
    assert y2.shape == (batch, num_channels, *frame_size)
    assert bool(jnp.all(jnp.isfinite(y1))) and bool(jnp.all(jnp.isfinite(y2)))

    err1 = float(jnp.max(jnp.abs(y1 - y_ref)))
    err2 = float(jnp.max(jnp.abs(y2 - y_ref)))
    errc = float(jnp.max(jnp.abs(y1 - y2)))
    # bf16 MXU operands vs. an f32 reference -> loose but meaningful tolerance.
    assert err1 < 0.1 and err2 < 0.1 and errc < 5e-3, (err1, err2, errc)
    print("KERNEL_OK")
</pallas_src>

<mosaic_0001>
module attributes {stable_mosaic.version = 11 : i64} {
  func.func @_final_conv_kernel(%arg0: memref<8x512xf32, #tpu.memory_space<vmem>>, %arg1: memref<8x1xf32, #tpu.memory_space<vmem>>, %arg2: memref<8x1xf32, #tpu.memory_space<vmem>>, %arg3: memref<2x72xbf16, #tpu.memory_space<vmem>>, %arg4: memref<2x1xf32, #tpu.memory_space<vmem>>, %arg5: memref<72x512xf32, #tpu.memory_space<vmem>>, %arg6: memref<2x512xf32, #tpu.memory_space<vmem>>, %arg7: memref<72x512xf32, #tpu.memory_space<vmem>>) attributes {dimension_semantics = [], scalar_prefetch = 0 : i64, scratch_operands = 1 : i64, tpu.core_type = #tpu.core_type<tc>} {
    %c0 = arith.constant 0 : index
    %c0_0 = arith.constant 0 : index
    %0 = vector.load %arg0[%c0, %c0_0] : memref<8x512xf32, #tpu.memory_space<vmem>>, vector<8x512xf32>
    %c0_1 = arith.constant 0 : index
    %c0_2 = arith.constant 0 : index
    %1 = vector.load %arg1[%c0_1, %c0_2] : memref<8x1xf32, #tpu.memory_space<vmem>>, vector<8x1xf32>
    %2 = vector.broadcast %1 : vector<8x1xf32> to vector<8x512xf32>
    %3 = arith.mulf %0, %2 : vector<8x512xf32>
    %c0_3 = arith.constant 0 : index
    %c0_4 = arith.constant 0 : index
    %4 = vector.load %arg2[%c0_3, %c0_4] : memref<8x1xf32, #tpu.memory_space<vmem>>, vector<8x1xf32>
    %5 = vector.broadcast %4 : vector<8x1xf32> to vector<8x512xf32>
    %6 = arith.addf %3, %5 : vector<8x512xf32>
    %c17_i32 = arith.constant 17 : i32
    %7 = tpu.dynamic_rotate %6 by %c17_i32 dim 1 : vector<8x512xf32>, i32 -> vector<8x512xf32>
    %c0_5 = arith.constant 0 : index
    %c0_6 = arith.constant 0 : index
    %8 = vector.load %arg5[%c0_5, %c0_6] : memref<72x512xf32, #tpu.memory_space<vmem>>, vector<8x512xf32>
    %9 = arith.mulf %7, %8 : vector<8x512xf32>
    %c0_7 = arith.constant 0 : index
    %c0_8 = arith.constant 0 : index
    %10 = vector.load %arg7[%c0_7, %c0_8] : memref<72x512xf32, #tpu.memory_space<vmem>>, vector<8x512xf32>
    tpu.vector_store %arg7[%c0_7, %c0_8], %9 {strides = array<i32>} : memref<72x512xf32, #tpu.memory_space<vmem>>, vector<8x512xf32>,
    %c16_i32 = arith.constant 16 : i32
    %11 = tpu.dynamic_rotate %6 by %c16_i32 dim 1 : vector<8x512xf32>, i32 -> vector<8x512xf32>
    %c8 = arith.constant 8 : index
    %c0_9 = arith.constant 0 : index
    %12 = vector.load %arg5[%c8, %c0_9] : memref<72x512xf32, #tpu.memory_space<vmem>>, vector<8x512xf32>
    %13 = arith.mulf %11, %12 : vector<8x512xf32>
    %c8_10 = arith.constant 8 : index
    %c0_11 = arith.constant 0 : index
    %14 = vector.load %arg7[%c8_10, %c0_11] : memref<72x512xf32, #tpu.memory_space<vmem>>, vector<8x512xf32>
    tpu.vector_store %arg7[%c8_10, %c0_11], %13 {strides = array<i32>} : memref<72x512xf32, #tpu.memory_space<vmem>>, vector<8x512xf32>,
    %c15_i32 = arith.constant 15 : i32
    %15 = tpu.dynamic_rotate %6 by %c15_i32 dim 1 : vector<8x512xf32>, i32 -> vector<8x512xf32>
    %c16 = arith.constant 16 : index
    %c0_12 = arith.constant 0 : index
    %16 = vector.load %arg5[%c16, %c0_12] : memref<72x512xf32, #tpu.memory_space<vmem>>, vector<8x512xf32>
    %17 = arith.mulf %15, %16 : vector<8x512xf32>
    %c16_13 = arith.constant 16 : index
    %c0_14 = arith.constant 0 : index
    %18 = vector.load %arg7[%c16_13, %c0_14] : memref<72x512xf32, #tpu.memory_space<vmem>>, vector<8x512xf32>
    tpu.vector_store %arg7[%c16_13, %c0_14], %17 {strides = array<i32>} : memref<72x512xf32, #tpu.memory_space<vmem>>, vector<8x512xf32>,
    %c1_i32 = arith.constant 1 : i32
    %19 = tpu.dynamic_rotate %6 by %c1_i32 dim 1 : vector<8x512xf32>, i32 -> vector<8x512xf32>
    %c24 = arith.constant 24 : index
    %c0_15 = arith.constant 0 : index
    %20 = vector.load %arg5[%c24, %c0_15] : memref<72x512xf32, #tpu.memory_space<vmem>>, vector<8x512xf32>
    %21 = arith.mulf %19, %20 : vector<8x512xf32>
    %c24_16 = arith.constant 24 : index
    %c0_17 = arith.constant 0 : index
    %22 = vector.load %arg7[%c24_16, %c0_17] : memref<72x512xf32, #tpu.memory_space<vmem>>, vector<8x512xf32>
    tpu.vector_store %arg7[%c24_16, %c0_17], %21 {strides = array<i32>} : memref<72x512xf32, #tpu.memory_space<vmem>>, vector<8x512xf32>,
    %c32 = arith.constant 32 : index
    %c0_18 = arith.constant 0 : index
    %23 = vector.load %arg7[%c32, %c0_18] : memref<72x512xf32, #tpu.memory_space<vmem>>, vector<8x512xf32>
    tpu.vector_store %arg7[%c32, %c0_18], %6 {strides = array<i32>} : memref<72x512xf32, #tpu.memory_space<vmem>>, vector<8x512xf32>,
    %c511_i32 = arith.constant 511 : i32
    %24 = tpu.dynamic_rotate %6 by %c511_i32 dim 1 : vector<8x512xf32>, i32 -> vector<8x512xf32>
    %c40 = arith.constant 40 : index
    %c0_19 = arith.constant 0 : index
    %25 = vector.load %arg5[%c40, %c0_19] : memref<72x512xf32, #tpu.memory_space<vmem>>, vector<8x512xf32>
    %26 = arith.mulf %24, %25 : vector<8x512xf32>
    %c40_20 = arith.constant 40 : index
    %c0_21 = arith.constant 0 : index
    %27 = vector.load %arg7[%c40_20, %c0_21] : memref<72x512xf32, #tpu.memory_space<vmem>>, vector<8x512xf32>
    tpu.vector_store %arg7[%c40_20, %c0_21], %26 {strides = array<i32>} : memref<72x512xf32, #tpu.memory_space<vmem>>, vector<8x512xf32>,
    %c497_i32 = arith.constant 497 : i32
    %28 = tpu.dynamic_rotate %6 by %c497_i32 dim 1 : vector<8x512xf32>, i32 -> vector<8x512xf32>
    %c48 = arith.constant 48 : index
    %c0_22 = arith.constant 0 : index
    %29 = vector.load %arg5[%c48, %c0_22] : memref<72x512xf32, #tpu.memory_space<vmem>>, vector<8x512xf32>
    %30 = arith.mulf %28, %29 : vector<8x512xf32>
    %c48_23 = arith.constant 48 : index
    %c0_24 = arith.constant 0 : index
    %31 = vector.load %arg7[%c48_23, %c0_24] : memref<72x512xf32, #tpu.memory_space<vmem>>, vector<8x512xf32>
    tpu.vector_store %arg7[%c48_23, %c0_24], %30 {strides = array<i32>} : memref<72x512xf32, #tpu.memory_space<vmem>>, vector<8x512xf32>,
    %c496_i32 = arith.constant 496 : i32
    %32 = tpu.dynamic_rotate %6 by %c496_i32 dim 1 : vector<8x512xf32>, i32 -> vector<8x512xf32>
    %c56 = arith.constant 56 : index
    %c0_25 = arith.constant 0 : index
    %33 = vector.load %arg5[%c56, %c0_25] : memref<72x512xf32, #tpu.memory_space<vmem>>, vector<8x512xf32>
    %34 = arith.mulf %32, %33 : vector<8x512xf32>
    %c56_26 = arith.constant 56 : index
    %c0_27 = arith.constant 0 : index
    %35 = vector.load %arg7[%c56_26, %c0_27] : memref<72x512xf32, #tpu.memory_space<vmem>>, vector<8x512xf32>
    tpu.vector_store %arg7[%c56_26, %c0_27], %34 {strides = array<i32>} : memref<72x512xf32, #tpu.memory_space<vmem>>, vector<8x512xf32>,
    %c495_i32 = arith.constant 495 : i32
    %36 = tpu.dynamic_rotate %6 by %c495_i32 dim 1 : vector<8x512xf32>, i32 -> vector<8x512xf32>
    %c64 = arith.constant 64 : index
    %c0_28 = arith.constant 0 : index
    %37 = vector.load %arg5[%c64, %c0_28] : memref<72x512xf32, #tpu.memory_space<vmem>>, vector<8x512xf32>
    %38 = arith.mulf %36, %37 : vector<8x512xf32>
    %c64_29 = arith.constant 64 : index
    %c0_30 = arith.constant 0 : index
    %39 = vector.load %arg7[%c64_29, %c0_30] : memref<72x512xf32, #tpu.memory_space<vmem>>, vector<8x512xf32>
    tpu.vector_store %arg7[%c64_29, %c0_30], %38 {strides = array<i32>} : memref<72x512xf32, #tpu.memory_space<vmem>>, vector<8x512xf32>,
    %c0_31 = arith.constant 0 : index
    %c0_32 = arith.constant 0 : index
    %40 = vector.load %arg3[%c0_31, %c0_32] : memref<2x72xbf16, #tpu.memory_space<vmem>>, vector<2x72xbf16>
    %c0_33 = arith.constant 0 : index
    %c0_34 = arith.constant 0 : index
    %41 = vector.load %arg7[%c0_33, %c0_34] : memref<72x512xf32, #tpu.memory_space<vmem>>, vector<72x512xf32>
    %42 = arith.truncf %41 : vector<72x512xf32> to vector<72x512xbf16>
    %cst = arith.constant dense<0.000000e+00> : vector<2x512xf32>
    %43 = tpu.matmul %40, %42, %cst {dimension_numbers = #tpu.dot_dimension_numbers<[1], [0], [0], [1], [0, 0, 1, 1], [], []>} : vector<2x72xbf16>, vector<72x512xbf16>, vector<2x512xf32> -> vector<2x512xf32>
    %c0_35 = arith.constant 0 : index
    %c0_36 = arith.constant 0 : index
    %44 = vector.load %arg4[%c0_35, %c0_36] : memref<2x1xf32, #tpu.memory_space<vmem>>, vector<2x1xf32>
    %45 = vector.broadcast %44 : vector<2x1xf32> to vector<2x512xf32>
    %46 = arith.addf %43, %45 : vector<2x512xf32>
    %47 = arith.negf %46 : vector<2x512xf32>
    %48 = math.exp %47 : vector<2x512xf32>
    %cst_37 = arith.constant 1.000000e+00 : f32
    %49 = vector.broadcast %cst_37 : f32 to vector<2x512xf32>
    %50 = arith.addf %49, %48 : vector<2x512xf32>
    %51 = arith.divf %49, %50 : vector<2x512xf32>
    %c0_38 = arith.constant 0 : index
    %c0_39 = arith.constant 0 : index
    %52 = vector.load %arg6[%c0_38, %c0_39] : memref<2x512xf32, #tpu.memory_space<vmem>>, vector<2x512xf32>
    tpu.vector_store %arg6[%c0_38, %c0_39], %51 {strides = array<i32>} : memref<2x512xf32, #tpu.memory_space<vmem>>, vector<2x512xf32>,
    return
  }
}

module attributes {stable_mosaic.version = 11 : i64} {
  func.func @_layer_scan_kernel(%arg0: i32, %arg1: i32, %arg2: memref<1x8x512xf32, #tpu.memory_space<vmem>>, %arg3: memref<32x72xbf16, #tpu.memory_space<vmem>>, %arg4: memref<32x72xbf16, #tpu.memory_space<vmem>>, %arg5: memref<32x1xf32, #tpu.memory_space<vmem>>, %arg6: memref<8x512xf32, #tpu.memory_space<vmem>>, %arg7: memref<8x512xf32, #tpu.memory_space<vmem>>, %arg8: memref<8x512xf32, #tpu.memory_space<vmem>>, %arg9: memref<72x512xf32, #tpu.memory_space<vmem>>, %arg10: memref<72x512xf32, #tpu.memory_space<vmem>>, %arg11: memref<8x1xf32, #tpu.memory_space<vmem>>, %arg12: memref<8x1xf32, #tpu.memory_space<vmem>>, %arg13: memref<1x8x512xf32, #tpu.memory_space<vmem>>, %arg14: memref<1x8x1xf32, #tpu.memory_space<vmem>>, %arg15: memref<1x8x1xf32, #tpu.memory_space<vmem>>, %arg16: memref<8x512xf32, #tpu.memory_space<vmem>>, %arg17: memref<8x512xf32, #tpu.memory_space<vmem>>, %arg18: memref<72x512xf32, #tpu.memory_space<vmem>>, %arg19: memref<72x512xf32, #tpu.memory_space<vmem>>) attributes {dimension_semantics = [#tpu.dimension_semantics<parallel>, #tpu.dimension_semantics<arbitrary>], iteration_bounds = array<i64: 1, 4>, scalar_prefetch = 0 : i64, scratch_operands = 4 : i64, tpu.core_type = #tpu.core_type<tc>, window_params = [{transform_indices = @transform_0, window_bounds = array<i64: 1, 8, 512>}, {pipeline_mode = #tpu.pipeline_mode<synchronous>, transform_indices = @transform_1, window_bounds = array<i64: 32, 72>}, {pipeline_mode = #tpu.pipeline_mode<synchronous>, transform_indices = @transform_2, window_bounds = array<i64: 32, 72>}, {pipeline_mode = #tpu.pipeline_mode<synchronous>, transform_indices = @transform_3, window_bounds = array<i64: 32, 1>}, {pipeline_mode = #tpu.pipeline_mode<synchronous>, transform_indices = @transform_4, window_bounds = array<i64: 8, 512>}, {pipeline_mode = #tpu.pipeline_mode<synchronous>, transform_indices = @transform_5, window_bounds = array<i64: 8, 512>}, {pipeline_mode = #tpu.pipeline_mode<synchronous>, transform_indices = @transform_6, window_bounds = array<i64: 8, 512>}, {pipeline_mode = #tpu.pipeline_mode<synchronous>, transform_indices = @transform_7, window_bounds = array<i64: 72, 512>}, {pipeline_mode = #tpu.pipeline_mode<synchronous>, transform_indices = @transform_8, window_bounds = array<i64: 72, 512>}, {pipeline_mode = #tpu.pipeline_mode<synchronous>, transform_indices = @transform_9, window_bounds = array<i64: 8, 1>}, {pipeline_mode = #tpu.pipeline_mode<synchronous>, transform_indices = @transform_10, window_bounds = array<i64: 8, 1>}, {transform_indices = @transform_11, window_bounds = array<i64: 1, 8, 512>}, {transform_indices = @transform_12, window_bounds = array<i64: 1, 8, 1>}, {transform_indices = @transform_13, window_bounds = array<i64: 1, 8, 1>}]} {
    %c0_i32 = arith.constant 0 : i32
    %0 = arith.cmpi eq, %arg1, %c0_i32 : i32
    %1 = arith.extui %0 : i1 to i32
    %c0_i32_0 = arith.constant 0 : i32
    %2 = arith.cmpi ne, %1, %c0_i32_0 : i32
    scf.if %2 {
      %cst_123 = arith.constant 0.000000e+00 : f32
      %150 = vector.broadcast %cst_123 : f32 to vector<8x512xf32>
      %c0_124 = arith.constant 0 : index
      %c0_125 = arith.constant 0 : index
      %151 = vector.load %arg16[%c0_124, %c0_125] : memref<8x512xf32, #tpu.memory_space<vmem>>, vector<8x512xf32>
      tpu.vector_store %arg16[%c0_124, %c0_125], %150 {strides = array<i32>} : memref<8x512xf32, #tpu.memory_space<vmem>>, vector<8x512xf32>,
      %cst_126 = arith.constant 0.000000e+00 : f32
      %152 = vector.broadcast %cst_126 : f32 to vector<8x512xf32>
      %c0_127 = arith.constant 0 : index
      %c0_128 = arith.constant 0 : index
      %153 = vector.load %arg17[%c0_127, %c0_128] : memref<8x512xf32, #tpu.memory_space<vmem>>, vector<8x512xf32>
      tpu.vector_store %arg17[%c0_127, %c0_128], %152 {strides = array<i32>} : memref<8x512xf32, #tpu.memory_space<vmem>>, vector<8x512xf32>,
      %cst_129 = arith.constant 0.000000e+00 : f32
      %154 = vector.broadcast %cst_129 : f32 to vector<1x8x1xf32>
      %c0_130 = arith.constant 0 : index
      %c0_131 = arith.constant 0 : index
      %c0_132 = arith.constant 0 : index
      %155 = vector.load %arg14[%c0_130, %c0_131, %c0_132] : memref<1x8x1xf32, #tpu.memory_space<vmem>>, vector<1x8x1xf32>
      tpu.vector_store %arg14[%c0_130, %c0_131, %c0_132], %154 {strides = array<i32>} : memref<1x8x1xf32, #tpu.memory_space<vmem>>, vector<1x8x1xf32>,
      %cst_133 = arith.constant 0.000000e+00 : f32
      %156 = vector.broadcast %cst_133 : f32 to vector<1x8x1xf32>
      %c0_134 = arith.constant 0 : index
      %c0_135 = arith.constant 0 : index
      %c0_136 = arith.constant 0 : index
      %157 = vector.load %arg15[%c0_134, %c0_135, %c0_136] : memref<1x8x1xf32, #tpu.memory_space<vmem>>, vector<1x8x1xf32>
      tpu.vector_store %arg15[%c0_134, %c0_135, %c0_136], %156 {strides = array<i32>} : memref<1x8x1xf32, #tpu.memory_space<vmem>>, vector<1x8x1xf32>,
    } else {
    }
    %c0 = arith.constant 0 : index
    %c0_1 = arith.constant 0 : index
    %c0_2 = arith.constant 0 : index
    %3 = vector.load %arg2[%c0, %c0_1, %c0_2] : memref<1x8x512xf32, #tpu.memory_space<vmem>>, vector<1x8x512xf32>
    %4 = vector.shape_cast %3 : vector<1x8x512xf32> to vector<8x512xf32>
    %c0_3 = arith.constant 0 : index
    %c0_4 = arith.constant 0 : index
    %5 = vector.load %arg11[%c0_3, %c0_4] : memref<8x1xf32, #tpu.memory_space<vmem>>, vector<8x1xf32>
    %6 = vector.broadcast %5 : vector<8x1xf32> to vector<8x512xf32>
    %7 = arith.mulf %4, %6 : vector<8x512xf32>
    %c0_5 = arith.constant 0 : index
    %c0_6 = arith.constant 0 : index
    %8 = vector.load %arg12[%c0_5, %c0_6] : memref<8x1xf32, #tpu.memory_space<vmem>>, vector<8x1xf32>
    %9 = vector.broadcast %8 : vector<8x1xf32> to vector<8x512xf32>
    %10 = arith.addf %7, %9 : vector<8x512xf32>
    %c17_i32 = arith.constant 17 : i32
    %11 = tpu.dynamic_rotate %10 by %c17_i32 dim 1 : vector<8x512xf32>, i32 -> vector<8x512xf32>
    %c0_7 = arith.constant 0 : index
    %c0_8 = arith.constant 0 : index
    %12 = vector.load %arg9[%c0_7, %c0_8] : memref<72x512xf32, #tpu.memory_space<vmem>>, vector<8x512xf32>
    %13 = arith.mulf %11, %12 : vector<8x512xf32>
    %c0_9 = arith.constant 0 : index
    %c0_10 = arith.constant 0 : index
    %14 = vector.load %arg18[%c0_9, %c0_10] : memref<72x512xf32, #tpu.memory_space<vmem>>, vector<8x512xf32>
    tpu.vector_store %arg18[%c0_9, %c0_10], %13 {strides = array<i32>} : memref<72x512xf32, #tpu.memory_space<vmem>>, vector<8x512xf32>,
    %c16_i32 = arith.constant 16 : i32
    %15 = tpu.dynamic_rotate %10 by %c16_i32 dim 1 : vector<8x512xf32>, i32 -> vector<8x512xf32>
    %c8 = arith.constant 8 : index
    %c0_11 = arith.constant 0 : index
    %16 = vector.load %arg9[%c8, %c0_11] : memref<72x512xf32, #tpu.memory_space<vmem>>, vector<8x512xf32>
    %17 = arith.mulf %15, %16 : vector<8x512xf32>
    %c8_12 = arith.constant 8 : index
    %c0_13 = arith.constant 0 : index
    %18 = vector.load %arg18[%c8_12, %c0_13] : memref<72x512xf32, #tpu.memory_space<vmem>>, vector<8x512xf32>
    tpu.vector_store %arg18[%c8_12, %c0_13], %17 {strides = array<i32>} : memref<72x512xf32, #tpu.memory_space<vmem>>, vector<8x512xf32>,
    %c15_i32 = arith.constant 15 : i32
    %19 = tpu.dynamic_rotate %10 by %c15_i32 dim 1 : vector<8x512xf32>, i32 -> vector<8x512xf32>
    %c16 = arith.constant 16 : index
    %c0_14 = arith.constant 0 : index
    %20 = vector.load %arg9[%c16, %c0_14] : memref<72x512xf32, #tpu.memory_space<vmem>>, vector<8x512xf32>
    %21 = arith.mulf %19, %20 : vector<8x512xf32>
    %c16_15 = arith.constant 16 : index
    %c0_16 = arith.constant 0 : index
    %22 = vector.load %arg18[%c16_15, %c0_16] : memref<72x512xf32, #tpu.memory_space<vmem>>, vector<8x512xf32>
    tpu.vector_store %arg18[%c16_15, %c0_16], %21 {strides = array<i32>} : memref<72x512xf32, #tpu.memory_space<vmem>>, vector<8x512xf32>,
    %c1_i32 = arith.constant 1 : i32
    %23 = tpu.dynamic_rotate %10 by %c1_i32 dim 1 : vector<8x512xf32>, i32 -> vector<8x512xf32>
    %c24 = arith.constant 24 : index
    %c0_17 = arith.constant 0 : index
    %24 = vector.load %arg9[%c24, %c0_17] : memref<72x512xf32, #tpu.memory_space<vmem>>, vector<8x512xf32>
    %25 = arith.mulf %23, %24 : vector<8x512xf32>
    %c24_18 = arith.constant 24 : index
    %c0_19 = arith.constant 0 : index
    %26 = vector.load %arg18[%c24_18, %c0_19] : memref<72x512xf32, #tpu.memory_space<vmem>>, vector<8x512xf32>
    tpu.vector_store %arg18[%c24_18, %c0_19], %25 {strides = array<i32>} : memref<72x512xf32, #tpu.memory_space<vmem>>, vector<8x512xf32>,
    %c32 = arith.constant 32 : index
    %c0_20 = arith.constant 0 : index
    %27 = vector.load %arg18[%c32, %c0_20] : memref<72x512xf32, #tpu.memory_space<vmem>>, vector<8x512xf32>
    tpu.vector_store %arg18[%c32, %c0_20], %10 {strides = array<i32>} : memref<72x512xf32, #tpu.memory_space<vmem>>, vector<8x512xf32>,
    %c511_i32 = arith.constant 511 : i32
    %28 = tpu.dynamic_rotate %10 by %c511_i32 dim 1 : vector<8x512xf32>, i32 -> vector<8x512xf32>
    %c40 = arith.constant 40 : index
    %c0_21 = arith.constant 0 : index
    %29 = vector.load %arg9[%c40, %c0_21] : memref<72x512xf32, #tpu.memory_space<vmem>>, vector<8x512xf32>
    %30 = arith.mulf %28, %29 : vector<8x512xf32>
    %c40_22 = arith.constant 40 : index
    %c0_23 = arith.constant 0 : index
    %31 = vector.load %arg18[%c40_22, %c0_23] : memref<72x512xf32, #tpu.memory_space<vmem>>, vector<8x512xf32>
    tpu.vector_store %arg18[%c40_22, %c0_23], %30 {strides = array<i32>} : memref<72x512xf32, #tpu.memory_space<vmem>>, vector<8x512xf32>,
    %c497_i32 = arith.constant 497 : i32
    %32 = tpu.dynamic_rotate %10 by %c497_i32 dim 1 : vector<8x512xf32>, i32 -> vector<8x512xf32>
    %c48 = arith.constant 48 : index
    %c0_24 = arith.constant 0 : index
    %33 = vector.load %arg9[%c48, %c0_24] : memref<72x512xf32, #tpu.memory_space<vmem>>, vector<8x512xf32>
    %34 = arith.mulf %32, %33 : vector<8x512xf32>
    %c48_25 = arith.constant 48 : index
    %c0_26 = arith.constant 0 : index
    %35 = vector.load %arg18[%c48_25, %c0_26] : memref<72x512xf32, #tpu.memory_space<vmem>>, vector<8x512xf32>
    tpu.vector_store %arg18[%c48_25, %c0_26], %34 {strides = array<i32>} : memref<72x512xf32, #tpu.memory_space<vmem>>, vector<8x512xf32>,
    %c496_i32 = arith.constant 496 : i32
    %36 = tpu.dynamic_rotate %10 by %c496_i32 dim 1 : vector<8x512xf32>, i32 -> vector<8x512xf32>
    %c56 = arith.constant 56 : index
    %c0_27 = arith.constant 0 : index
    %37 = vector.load %arg9[%c56, %c0_27] : memref<72x512xf32, #tpu.memory_space<vmem>>, vector<8x512xf32>
    %38 = arith.mulf %36, %37 : vector<8x512xf32>
    %c56_28 = arith.constant 56 : index
    %c0_29 = arith.constant 0 : index
    %39 = vector.load %arg18[%c56_28, %c0_29] : memref<72x512xf32, #tpu.memory_space<vmem>>, vector<8x512xf32>
    tpu.vector_store %arg18[%c56_28, %c0_29], %38 {strides = array<i32>} : memref<72x512xf32, #tpu.memory_space<vmem>>, vector<8x512xf32>,
    %c495_i32 = arith.constant 495 : i32
    %40 = tpu.dynamic_rotate %10 by %c495_i32 dim 1 : vector<8x512xf32>, i32 -> vector<8x512xf32>
    %c64 = arith.constant 64 : index
    %c0_30 = arith.constant 0 : index
    %41 = vector.load %arg9[%c64, %c0_30] : memref<72x512xf32, #tpu.memory_space<vmem>>, vector<8x512xf32>
    %42 = arith.mulf %40, %41 : vector<8x512xf32>
    %c64_31 = arith.constant 64 : index
    %c0_32 = arith.constant 0 : index
    %43 = vector.load %arg18[%c64_31, %c0_32] : memref<72x512xf32, #tpu.memory_space<vmem>>, vector<8x512xf32>
    tpu.vector_store %arg18[%c64_31, %c0_32], %42 {strides = array<i32>} : memref<72x512xf32, #tpu.memory_space<vmem>>, vector<8x512xf32>,
    %c0_33 = arith.constant 0 : index
    %c0_34 = arith.constant 0 : index
    %44 = vector.load %arg16[%c0_33, %c0_34] : memref<8x512xf32, #tpu.memory_space<vmem>>, vector<8x512xf32>
    %c0_35 = arith.constant 0 : index
    %c0_36 = arith.constant 0 : index
    %45 = vector.load %arg17[%c0_35, %c0_36] : memref<8x512xf32, #tpu.memory_space<vmem>>, vector<8x512xf32>
    %c17_i32_37 = arith.constant 17 : i32
    %46 = tpu.dynamic_rotate %44 by %c17_i32_37 dim 1 : vector<8x512xf32>, i32 -> vector<8x512xf32>
    %c0_38 = arith.constant 0 : index
    %c0_39 = arith.constant 0 : index
    %47 = vector.load %arg10[%c0_38, %c0_39] : memref<72x512xf32, #tpu.memory_space<vmem>>, vector<8x512xf32>
    %48 = arith.mulf %46, %47 : vector<8x512xf32>
    %c0_40 = arith.constant 0 : index
    %c0_41 = arith.constant 0 : index
    %49 = vector.load %arg19[%c0_40, %c0_41] : memref<72x512xf32, #tpu.memory_space<vmem>>, vector<8x512xf32>
    tpu.vector_store %arg19[%c0_40, %c0_41], %48 {strides = array<i32>} : memref<72x512xf32, #tpu.memory_space<vmem>>, vector<8x512xf32>,
    %c16_i32_42 = arith.constant 16 : i32
    %50 = tpu.dynamic_rotate %44 by %c16_i32_42 dim 1 : vector<8x512xf32>, i32 -> vector<8x512xf32>
    %c8_43 = arith.constant 8 : index
    %c0_44 = arith.constant 0 : index
    %51 = vector.load %arg10[%c8_43, %c0_44] : memref<72x512xf32, #tpu.memory_space<vmem>>, vector<8x512xf32>
    %52 = arith.mulf %50, %51 : vector<8x512xf32>
    %c8_45 = arith.constant 8 : index
    %c0_46 = arith.constant 0 : index
    %53 = vector.load %arg19[%c8_45, %c0_46] : memref<72x512xf32, #tpu.memory_space<vmem>>, vector<8x512xf32>
    tpu.vector_store %arg19[%c8_45, %c0_46], %52 {strides = array<i32>} : memref<72x512xf32, #tpu.memory_space<vmem>>, vector<8x512xf32>,
    %c15_i32_47 = arith.constant 15 : i32
    %54 = tpu.dynamic_rotate %44 by %c15_i32_47 dim 1 : vector<8x512xf32>, i32 -> vector<8x512xf32>
    %c16_48 = arith.constant 16 : index
    %c0_49 = arith.constant 0 : index
    %55 = vector.load %arg10[%c16_48, %c0_49] : memref<72x512xf32, #tpu.memory_space<vmem>>, vector<8x512xf32>
    %56 = arith.mulf %54, %55 : vector<8x512xf32>
    %c16_50 = arith.constant 16 : index
    %c0_51 = arith.constant 0 : index
    %57 = vector.load %arg19[%c16_50, %c0_51] : memref<72x512xf32, #tpu.memory_space<vmem>>, vector<8x512xf32>
    tpu.vector_store %arg19[%c16_50, %c0_51], %56 {strides = array<i32>} : memref<72x512xf32, #tpu.memory_space<vmem>>, vector<8x512xf32>,
    %c1_i32_52 = arith.constant 1 : i32
    %58 = tpu.dynamic_rotate %44 by %c1_i32_52 dim 1 : vector<8x512xf32>, i32 -> vector<8x512xf32>
    %c24_53 = arith.constant 24 : index
    %c0_54 = arith.constant 0 : index
    %59 = vector.load %arg10[%c24_53, %c0_54] : memref<72x512xf32, #tpu.memory_space<vmem>>, vector<8x512xf32>
    %60 = arith.mulf %58, %59 : vector<8x512xf32>
    %c24_55 = arith.constant 24 : index
    %c0_56 = arith.constant 0 : index
    %61 = vector.load %arg19[%c24_55, %c0_56] : memref<72x512xf32, #tpu.memory_space<vmem>>, vector<8x512xf32>
    tpu.vector_store %arg19[%c24_55, %c0_56], %60 {strides = array<i32>} : memref<72x512xf32, #tpu.memory_space<vmem>>, vector<8x512xf32>,
    %c32_57 = arith.constant 32 : index
    %c0_58 = arith.constant 0 : index
    %62 = vector.load %arg19[%c32_57, %c0_58] : memref<72x512xf32, #tpu.memory_space<vmem>>, vector<8x512xf32>
    tpu.vector_store %arg19[%c32_57, %c0_58], %44 {strides = array<i32>} : memref<72x512xf32, #tpu.memory_space<vmem>>, vector<8x512xf32>,
    %c511_i32_59 = arith.constant 511 : i32
    %63 = tpu.dynamic_rotate %44 by %c511_i32_59 dim 1 : vector<8x512xf32>, i32 -> vector<8x512xf32>
    %c40_60 = arith.constant 40 : index
    %c0_61 = arith.constant 0 : index
    %64 = vector.load %arg10[%c40_60, %c0_61] : memref<72x512xf32, #tpu.memory_space<vmem>>, vector<8x512xf32>
    %65 = arith.mulf %63, %64 : vector<8x512xf32>
    %c40_62 = arith.constant 40 : index
    %c0_63 = arith.constant 0 : index
    %66 = vector.load %arg19[%c40_62, %c0_63] : memref<72x512xf32, #tpu.memory_space<vmem>>, vector<8x512xf32>
    tpu.vector_store %arg19[%c40_62, %c0_63], %65 {strides = array<i32>} : memref<72x512xf32, #tpu.memory_space<vmem>>, vector<8x512xf32>,
    %c497_i32_64 = arith.constant 497 : i32
    %67 = tpu.dynamic_rotate %44 by %c497_i32_64 dim 1 : vector<8x512xf32>, i32 -> vector<8x512xf32>
    %c48_65 = arith.constant 48 : index
    %c0_66 = arith.constant 0 : index
    %68 = vector.load %arg10[%c48_65, %c0_66] : memref<72x512xf32, #tpu.memory_space<vmem>>, vector<8x512xf32>
    %69 = arith.mulf %67, %68 : vector<8x512xf32>
    %c48_67 = arith.constant 48 : index
    %c0_68 = arith.constant 0 : index
    %70 = vector.load %arg19[%c48_67, %c0_68] : memref<72x512xf32, #tpu.memory_space<vmem>>, vector<8x512xf32>
    tpu.vector_store %arg19[%c48_67, %c0_68], %69 {strides = array<i32>} : memref<72x512xf32, #tpu.memory_space<vmem>>, vector<8x512xf32>,
    %c496_i32_69 = arith.constant 496 : i32
    %71 = tpu.dynamic_rotate %44 by %c496_i32_69 dim 1 : vector<8x512xf32>, i32 -> vector<8x512xf32>
    %c56_70 = arith.constant 56 : index
    %c0_71 = arith.constant 0 : index
    %72 = vector.load %arg10[%c56_70, %c0_71] : memref<72x512xf32, #tpu.memory_space<vmem>>, vector<8x512xf32>
    %73 = arith.mulf %71, %72 : vector<8x512xf32>
    %c56_72 = arith.constant 56 : index
    %c0_73 = arith.constant 0 : index
    %74 = vector.load %arg19[%c56_72, %c0_73] : memref<72x512xf32, #tpu.memory_space<vmem>>, vector<8x512xf32>
    tpu.vector_store %arg19[%c56_72, %c0_73], %73 {strides = array<i32>} : memref<72x512xf32, #tpu.memory_space<vmem>>, vector<8x512xf32>,
    %c495_i32_74 = arith.constant 495 : i32
    %75 = tpu.dynamic_rotate %44 by %c495_i32_74 dim 1 : vector<8x512xf32>, i32 -> vector<8x512xf32>
    %c64_75 = arith.constant 64 : index
    %c0_76 = arith.constant 0 : index
    %76 = vector.load %arg10[%c64_75, %c0_76] : memref<72x512xf32, #tpu.memory_space<vmem>>, vector<8x512xf32>
    %77 = arith.mulf %75, %76 : vector<8x512xf32>
    %c64_77 = arith.constant 64 : index
    %c0_78 = arith.constant 0 : index
    %78 = vector.load %arg19[%c64_77, %c0_78] : memref<72x512xf32, #tpu.memory_space<vmem>>, vector<8x512xf32>
    tpu.vector_store %arg19[%c64_77, %c0_78], %77 {strides = array<i32>} : memref<72x512xf32, #tpu.memory_space<vmem>>, vector<8x512xf32>,
    %c0_79 = arith.constant 0 : index
    %c0_80 = arith.constant 0 : index
    %79 = vector.load %arg3[%c0_79, %c0_80] : memref<32x72xbf16, #tpu.memory_space<vmem>>, vector<32x72xbf16>
    %c0_81 = arith.constant 0 : index
    %c0_82 = arith.constant 0 : index
    %80 = vector.load %arg18[%c0_81, %c0_82] : memref<72x512xf32, #tpu.memory_space<vmem>>, vector<72x512xf32>
    %81 = arith.truncf %80 : vector<72x512xf32> to vector<72x512xbf16>
    %cst = arith.constant dense<0.000000e+00> : vector<32x512xf32>
    %82 = tpu.matmul %79, %81, %cst {dimension_numbers = #tpu.dot_dimension_numbers<[1], [0], [0], [1], [0, 0, 1, 1], [], []>} : vector<32x72xbf16>, vector<72x512xbf16>, vector<32x512xf32> -> vector<32x512xf32>
    %c0_83 = arith.constant 0 : index
    %c0_84 = arith.constant 0 : index
    %83 = vector.load %arg4[%c0_83, %c0_84] : memref<32x72xbf16, #tpu.memory_space<vmem>>, vector<32x72xbf16>
    %c0_85 = arith.constant 0 : index
    %c0_86 = arith.constant 0 : index
    %84 = vector.load %arg19[%c0_85, %c0_86] : memref<72x512xf32, #tpu.memory_space<vmem>>, vector<72x512xf32>
    %85 = arith.truncf %84 : vector<72x512xf32> to vector<72x512xbf16>
    %cst_87 = arith.constant dense<0.000000e+00> : vector<32x512xf32>
    %86 = tpu.matmul %83, %85, %cst_87 {dimension_numbers = #tpu.dot_dimension_numbers<[1], [0], [0], [1], [0, 0, 1, 1], [], []>} : vector<32x72xbf16>, vector<72x512xbf16>, vector<32x512xf32> -> vector<32x512xf32>
    %87 = arith.addf %82, %86 : vector<32x512xf32>
    %c0_88 = arith.constant 0 : index
    %c0_89 = arith.constant 0 : index
    %88 = vector.load %arg5[%c0_88, %c0_89] : memref<32x1xf32, #tpu.memory_space<vmem>>, vector<32x1xf32>
    %89 = vector.broadcast %88 : vector<32x1xf32> to vector<32x512xf32>
    %90 = arith.addf %87, %89 : vector<32x512xf32>
    %91 = vector.extract_strided_slice %90 {offsets = [0, 0], sizes = [8, 512], strides = [1, 1]} : vector<32x512xf32> to vector<8x512xf32>
    %c0_90 = arith.constant 0 : index
    %c0_91 = arith.constant 0 : index
    %92 = vector.load %arg6[%c0_90, %c0_91] : memref<8x512xf32, #tpu.memory_space<vmem>>, vector<8x512xf32>
    %93 = arith.mulf %92, %45 : vector<8x512xf32>
    %94 = arith.addf %91, %93 : vector<8x512xf32>
    %cst_92 = arith.constant 0.000000e+00 : f32
    %95 = vector.broadcast %cst_92 : f32 to vector<8x512xf32>
    %96 = arith.subf %95, %94 : vector<8x512xf32>
    %97 = math.exp %96 : vector<8x512xf32>
    %cst_93 = arith.constant 1.000000e+00 : f32
    %98 = vector.broadcast %cst_93 : f32 to vector<8x512xf32>
    %99 = arith.addf %98, %97 : vector<8x512xf32>
    %100 = tpu.reciprocal %99 {approx = true} : vector<8x512xf32> -> vector<8x512xf32>
    %101 = vector.extract_strided_slice %90 {offsets = [8, 0], sizes = [8, 512], strides = [1, 1]} : vector<32x512xf32> to vector<8x512xf32>
    %c0_94 = arith.constant 0 : index
    %c0_95 = arith.constant 0 : index
    %102 = vector.load %arg7[%c0_94, %c0_95] : memref<8x512xf32, #tpu.memory_space<vmem>>, vector<8x512xf32>
    %103 = arith.mulf %102, %45 : vector<8x512xf32>
    %104 = arith.addf %101, %103 : vector<8x512xf32>
    %cst_96 = arith.constant 0.000000e+00 : f32
    %105 = vector.broadcast %cst_96 : f32 to vector<8x512xf32>
    %106 = arith.subf %105, %104 : vector<8x512xf32>
    %107 = math.exp %106 : vector<8x512xf32>
    %cst_97 = arith.constant 1.000000e+00 : f32
    %108 = vector.broadcast %cst_97 : f32 to vector<8x512xf32>
    %109 = arith.addf %108, %107 : vector<8x512xf32>
    %110 = tpu.reciprocal %109 {approx = true} : vector<8x512xf32> -> vector<8x512xf32>
    %111 = arith.mulf %110, %45 : vector<8x512xf32>
    %112 = vector.extract_strided_slice %90 {offsets = [16, 0], sizes = [8, 512], strides = [1, 1]} : vector<32x512xf32> to vector<8x512xf32>
    %113 = math.tanh %112 : vector<8x512xf32>
    %114 = arith.mulf %100, %113 : vector<8x512xf32>
    %115 = arith.addf %111, %114 : vector<8x512xf32>
    %116 = vector.extract_strided_slice %90 {offsets = [24, 0], sizes = [8, 512], strides = [1, 1]} : vector<32x512xf32> to vector<8x512xf32>
    %c0_98 = arith.constant 0 : index
    %c0_99 = arith.constant 0 : index
    %117 = vector.load %arg8[%c0_98, %c0_99] : memref<8x512xf32, #tpu.memory_space<vmem>>, vector<8x512xf32>
    %118 = arith.mulf %117, %115 : vector<8x512xf32>
    %119 = arith.addf %116, %118 : vector<8x512xf32>
    %cst_100 = arith.constant 0.000000e+00 : f32
    %120 = vector.broadcast %cst_100 : f32 to vector<8x512xf32>
    %121 = arith.subf %120, %119 : vector<8x512xf32>
    %122 = math.exp %121 : vector<8x512xf32>
    %cst_101 = arith.constant 1.000000e+00 : f32
    %123 = vector.broadcast %cst_101 : f32 to vector<8x512xf32>
    %124 = arith.addf %123, %122 : vector<8x512xf32>
    %125 = tpu.reciprocal %124 {approx = true} : vector<8x512xf32> -> vector<8x512xf32>
    %126 = math.tanh %115 : vector<8x512xf32>
    %127 = arith.mulf %125, %126 : vector<8x512xf32>
    %c0_102 = arith.constant 0 : index
    %c0_103 = arith.constant 0 : index
    %128 = vector.load %arg16[%c0_102, %c0_103] : memref<8x512xf32, #tpu.memory_space<vmem>>, vector<8x512xf32>
    tpu.vector_store %arg16[%c0_102, %c0_103], %127 {strides = array<i32>} : memref<8x512xf32, #tpu.memory_space<vmem>>, vector<8x512xf32>,
    %c0_104 = arith.constant 0 : index
    %c0_105 = arith.constant 0 : index
    %129 = vector.load %arg17[%c0_104, %c0_105] : memref<8x512xf32, #tpu.memory_space<vmem>>, vector<8x512xf32>
    tpu.vector_store %arg17[%c0_104, %c0_105], %115 {strides = array<i32>} : memref<8x512xf32, #tpu.memory_space<vmem>>, vector<8x512xf32>,
    %c0_106 = arith.constant 0 : index
    %c0_107 = arith.constant 0 : index
    %c0_108 = arith.constant 0 : index
    %130 = vector.load %arg13[%c0_106, %c0_107, %c0_108] : memref<1x8x512xf32, #tpu.memory_space<vmem>>, vector<1x8x512xf32>
    %131 = vector.shape_cast %130 : vector<1x8x512xf32> to vector<8x512xf32>
    %132 = vector.shape_cast %127 : vector<8x512xf32> to vector<1x8x512xf32>
    tpu.vector_store %arg13[%c0_106, %c0_107, %c0_108], %132 {strides = array<i32>} : memref<1x8x512xf32, #tpu.memory_space<vmem>>, vector<1x8x512xf32>,
    %c0_109 = arith.constant 0 : index
    %c0_110 = arith.constant 0 : index
    %c0_111 = arith.constant 0 : index
    %133 = vector.load %arg14[%c0_109, %c0_110, %c0_111] : memref<1x8x1xf32, #tpu.memory_space<vmem>>, vector<1x8x1xf32>
    %134 = vector.shape_cast %133 : vector<1x8x1xf32> to vector<8x1xf32>
    %cst_112 = arith.constant dense<0.000000e+00> : vector<8xf32>
    %135 = vector.multi_reduction <add>, %127, %cst_112 [1] : vector<8x512xf32> to vector<8xf32>
    %136 = vector.shape_cast %135 : vector<8xf32> to vector<8x1xf32>
    %137 = arith.addf %134, %136 : vector<8x1xf32>
    %c0_113 = arith.constant 0 : index
    %c0_114 = arith.constant 0 : index
    %c0_115 = arith.constant 0 : index
    %138 = vector.load %arg14[%c0_113, %c0_114, %c0_115] : memref<1x8x1xf32, #tpu.memory_space<vmem>>, vector<1x8x1xf32>
    %139 = vector.shape_cast %138 : vector<1x8x1xf32> to vector<8x1xf32>
    %140 = vector.shape_cast %137 : vector<8x1xf32> to vector<1x8x1xf32>
    tpu.vector_store %arg14[%c0_113, %c0_114, %c0_115], %140 {strides = array<i32>} : memref<1x8x1xf32, #tpu.memory_space<vmem>>, vector<1x8x1xf32>,
    %c0_116 = arith.constant 0 : index
    %c0_117 = arith.constant 0 : index
    %c0_118 = arith.constant 0 : index
    %141 = vector.load %arg15[%c0_116, %c0_117, %c0_118] : memref<1x8x1xf32, #tpu.memory_space<vmem>>, vector<1x8x1xf32>
    %142 = vector.shape_cast %141 : vector<1x8x1xf32> to vector<8x1xf32>
    %143 = arith.mulf %127, %127 : vector<8x512xf32>
    %cst_119 = arith.constant dense<0.000000e+00> : vector<8xf32>
    %144 = vector.multi_reduction <add>, %143, %cst_119 [1] : vector<8x512xf32> to vector<8xf32>
    %145 = vector.shape_cast %144 : vector<8xf32> to vector<8x1xf32>
    %146 = arith.addf %142, %145 : vector<8x1xf32>
    %c0_120 = arith.constant 0 : index
    %c0_121 = arith.constant 0 : index
    %c0_122 = arith.constant 0 : index
    %147 = vector.load %arg15[%c0_120, %c0_121, %c0_122] : memref<1x8x1xf32, #tpu.memory_space<vmem>>, vector<1x8x1xf32>
    %148 = vector.shape_cast %147 : vector<1x8x1xf32> to vector<8x1xf32>
    %149 = vector.shape_cast %146 : vector<8x1xf32> to vector<1x8x1xf32>
    tpu.vector_store %arg15[%c0_120, %c0_121, %c0_122], %149 {strides = array<i32>} : memref<1x8x1xf32, #tpu.memory_space<vmem>>, vector<1x8x1xf32>,
    return
  }
  func.func @transform_0(%arg0: i32, %arg1: i32) -> (i32, i32, i32) {
    %c0_i32 = arith.constant 0 : i32
    %c0_i32_0 = arith.constant 0 : i32
    return %arg1, %c0_i32, %arg0 : i32, i32, i32
  }
  func.func @transform_1(%arg0: i32, %arg1: i32) -> (i32, i32) {
    %c0_i32 = arith.constant 0 : i32
    %c0_i32_0 = arith.constant 0 : i32
    %c0_i32_1 = arith.constant 0 : i32
    return %c0_i32, %c0_i32_0 : i32, i32
  }
  func.func @transform_2(%arg0: i32, %arg1: i32) -> (i32, i32) {
    %c0_i32 = arith.constant 0 : i32
    %c0_i32_0 = arith.constant 0 : i32
    %c0_i32_1 = arith.constant 0 : i32
    return %c0_i32, %c0_i32_0 : i32, i32
  }
  func.func @transform_3(%arg0: i32, %arg1: i32) -> (i32, i32) {
    %c0_i32 = arith.constant 0 : i32
    %c0_i32_0 = arith.constant 0 : i32
    %c0_i32_1 = arith.constant 0 : i32
    return %c0_i32, %c0_i32_0 : i32, i32
  }
  func.func @transform_4(%arg0: i32, %arg1: i32) -> (i32, i32) {
    %c0_i32 = arith.constant 0 : i32
    %c0_i32_0 = arith.constant 0 : i32
    %c0_i32_1 = arith.constant 0 : i32
    return %c0_i32, %c0_i32_0 : i32, i32
  }
  func.func @transform_5(%arg0: i32, %arg1: i32) -> (i32, i32) {
    %c0_i32 = arith.constant 0 : i32
    %c0_i32_0 = arith.constant 0 : i32
    %c0_i32_1 = arith.constant 0 : i32
    return %c0_i32, %c0_i32_0 : i32, i32
  }
  func.func @transform_6(%arg0: i32, %arg1: i32) -> (i32, i32) {
    %c0_i32 = arith.constant 0 : i32
    %c0_i32_0 = arith.constant 0 : i32
    %c0_i32_1 = arith.constant 0 : i32
    return %c0_i32, %c0_i32_0 : i32, i32
  }
  func.func @transform_7(%arg0: i32, %arg1: i32) -> (i32, i32) {
    %c0_i32 = arith.constant 0 : i32
    %c0_i32_0 = arith.constant 0 : i32
    %c0_i32_1 = arith.constant 0 : i32
    return %c0_i32, %c0_i32_0 : i32, i32
  }
  func.func @transform_8(%arg0: i32, %arg1: i32) -> (i32, i32) {
    %c0_i32 = arith.constant 0 : i32
    %c0_i32_0 = arith.constant 0 : i32
    %c0_i32_1 = arith.constant 0 : i32
    return %c0_i32, %c0_i32_0 : i32, i32
  }
  func.func @transform_9(%arg0: i32, %arg1: i32) -> (i32, i32) {
    %c0_i32 = arith.constant 0 : i32
    %c0_i32_0 = arith.constant 0 : i32
    %c0_i32_1 = arith.constant 0 : i32
    return %c0_i32, %c0_i32_0 : i32, i32
  }
  func.func @transform_10(%arg0: i32, %arg1: i32) -> (i32, i32) {
    %c0_i32 = arith.constant 0 : i32
    %c0_i32_0 = arith.constant 0 : i32
    %c0_i32_1 = arith.constant 0 : i32
    return %c0_i32, %c0_i32_0 : i32, i32
  }
  func.func @transform_11(%arg0: i32, %arg1: i32) -> (i32, i32, i32) {
    %c0_i32 = arith.constant 0 : i32
    %c0_i32_0 = arith.constant 0 : i32
    return %arg1, %c0_i32, %arg0 : i32, i32, i32
  }
  func.func @transform_12(%arg0: i32, %arg1: i32) -> (i32, i32, i32) {
    %c0_i32 = arith.constant 0 : i32
    %c0_i32_0 = arith.constant 0 : i32
    %c0_i32_1 = arith.constant 0 : i32
    return %arg0, %c0_i32, %c0_i32_0 : i32, i32, i32
  }
  func.func @transform_13(%arg0: i32, %arg1: i32) -> (i32, i32, i32) {
    %c0_i32 = arith.constant 0 : i32
    %c0_i32_0 = arith.constant 0 : i32
    %c0_i32_1 = arith.constant 0 : i32
    return %arg0, %c0_i32, %c0_i32_0 : i32, i32, i32
  }
}

</mosaic_0001>

<llo_original>
// kernel: seq2seq_forward.5
$region0: #{seq2seq_forward.5}
  #allocation0 [shape = 'u32[]', space=smem, size = 0x4, offset = 0x4, fixed_abs, tag = 'smem constant byte address 0x4 - core index']
  #allocation1 [shape = 'u32[144,128]{1,0:T(1,128)}', space=vmem, size = 0x12000, scoped, tag = 'internal scratch']
  #allocation2 [shape = 'f32[72,512]{1,0:T(8,128)}', space=vmem, size = 0x24000, scoped, tag = 'scratch operand']
  %s0 = inlined_call_operand.vmem [shape: f32[8,512], index: 0, kind: input, shape index: {}]
  %s1 = inlined_call_operand.vmem [shape: f32[8,1], index: 1, kind: input, shape index: {}]
  %s2 = inlined_call_operand.vmem [shape: f32[8,1], index: 2, kind: input, shape index: {}]
  %s3 = inlined_call_operand.vmem [shape: bf16[2,72], index: 3, kind: input, shape index: {}]
  %s4 = inlined_call_operand.vmem [shape: f32[2,1], index: 4, kind: input, shape index: {}]
  %s5 = inlined_call_operand.vmem [shape: f32[72,512], index: 5, kind: input, shape index: {}]
  %s6 = inlined_call_operand.vmem [shape: f32[2,512], index: 6, kind: output, shape index: {}]
  %s7 = sld [smem:[#allocation0]]
  $region34: #{seq2seq_forward.5} parent=0
    _
  %s9 = ssub.s32 1, %s7
  %s10 = scalar_select 0, %s9, %s7
  // Predicated region
  $region2: #{seq2seq_forward.5} parent=0 // pred_check
    _
  $region3: #{seq2seq_forward.5} parent=0 // pred_check_branch
    %12 = sbr.rel (0) target = $region5
  $region4: #{seq2seq_forward.5} parent=0 // pred_region
    _
  $region5: #{seq2seq_forward.5} parent=0 // pred_fallthru
    _
  // Predicated region
  $region6: #{seq2seq_forward.5} parent=0 // pred_check
    _
  $region7: #{seq2seq_forward.5} parent=0 // pred_check_branch
    %14 = sbr.rel (0) target = $region9
  $region8: #{seq2seq_forward.5} parent=0 // pred_region
    _
  $region9: #{seq2seq_forward.5} parent=0 // pred_fallthru
    _
  // Predicated region
  $region10: #{seq2seq_forward.5} parent=0 // pred_check
    _
  $region11: #{seq2seq_forward.5} parent=0 // pred_check_branch
    %16 = sbr.rel (0) target = $region13
  $region12: #{seq2seq_forward.5} parent=0 // pred_region
    _
  $region13: #{seq2seq_forward.5} parent=0 // pred_fallthru
    _
  // Predicated region
  $region14: #{seq2seq_forward.5} parent=0 // pred_check
    _
  $region15: #{seq2seq_forward.5} parent=0 // pred_check_branch
    %18 = sbr.rel (0) target = $region17
  $region16: #{seq2seq_forward.5} parent=0 // pred_region
    _
  $region17: #{seq2seq_forward.5} parent=0 // pred_fallthru
    _
  // Predicated region
  $region18: #{seq2seq_forward.5} parent=0 // pred_check
    _
  $region19: #{seq2seq_forward.5} parent=0 // pred_check_branch
    %20 = sbr.rel (0) target = $region21
  $region20: #{seq2seq_forward.5} parent=0 // pred_region
    _
  $region21: #{seq2seq_forward.5} parent=0 // pred_fallthru
    _
  // Predicated region
  $region22: #{seq2seq_forward.5} parent=0 // pred_check
    _
  $region23: #{seq2seq_forward.5} parent=0 // pred_check_branch
    %22 = sbr.rel (0) target = $region25
  $region24: #{seq2seq_forward.5} parent=0 // pred_region
    _
  $region25: #{seq2seq_forward.5} parent=0 // pred_fallthru
    _
  %v24 = vld [vmem:[%s0] sm:$0xff]
  %v25 = vld [vmem:[%s0 + $0x8] sm:$0xff]
  %v26 = vld [vmem:[%s0 + $0x10] sm:$0xff]
  %v27 = vld [vmem:[%s0 + $0x18] sm:$0xff]
  %v28 = vld [vmem:[%s1] sm:$0xff]
  %30 = vset.pattern.permute.xlu0 0
  %31 = vperm.xlu0 %30, %v28
  %v32 = vpop.permute.xlu0 %31
  %v34 = vmul.f32 %v24, %v32
  %v35 = vmul.f32 %v25, %v32
  %v36 = vmul.f32 %v26, %v32
  %v37 = vmul.f32 %v27, %v32
  %v38 = vld [vmem:[%s2] sm:$0xff]
  %40 = vset.pattern.permute.xlu0 0
  %41 = vperm.xlu0 %40, %v38
  %v42 = vpop.permute.xlu0 %41
  %v44 = vadd.f32 %v34, %v42
  %v45 = vadd.f32 %v35, %v42
  %v46 = vadd.f32 %v36, %v42
  %v47 = vadd.f32 %v37, %v42
  %48 = vrot.lane.b32.xlu0 %v44, 17
  %v49 = vpop.permute.xlu0 %48
  %50 = vrot.lane.b32.xlu0 %v45, 17
  %v51 = vpop.permute.xlu0 %50
  %52 = vrot.lane.b32.xlu0 %v46, 17
  %v53 = vpop.permute.xlu0 %52
  %54 = vrot.lane.b32.xlu0 %v47, 17
  %v55 = vpop.permute.xlu0 %54
  %v56 = vlaneseq
  %v57 = vand.u32 %v56, 127
  %vm58 = vcmp.lt.s32.totalorder %v57, 17
  %v59 = vsel %vm58, %v53, %v55
  %v60 = vsel %vm58, %v51, %v53
  %v61 = vsel %vm58, %v49, %v51
  %v62 = vsel %vm58, %v55, %v49
  %v63 = vld [vmem:[%s5] sm:$0xff]
  %v64 = vld [vmem:[%s5 + $0x8] sm:$0xff]
  %v65 = vld [vmem:[%s5 + $0x10] sm:$0xff]
  %v66 = vld [vmem:[%s5 + $0x18] sm:$0xff]
  %v67 = vmul.f32 %v62, %v63
  %v68 = vmul.f32 %v61, %v64
  %v69 = vmul.f32 %v60, %v65
  %v70 = vmul.f32 %v59, %v66
  %71 = vst [vmem:[#allocation2] sm:$0xff] %v67
  %72 = vst [vmem:[#allocation2 + $0x8] sm:$0xff] %v68
  %73 = vst [vmem:[#allocation2 + $0x10] sm:$0xff] %v69
  %74 = vst [vmem:[#allocation2 + $0x18] sm:$0xff] %v70
  %75 = vrot.lane.b32.xlu0 %v44, 16
  %v76 = vpop.permute.xlu0 %75
  %77 = vrot.lane.b32.xlu0 %v45, 16
  %v78 = vpop.permute.xlu0 %77
  %79 = vrot.lane.b32.xlu0 %v46, 16
  %v80 = vpop.permute.xlu0 %79
  %81 = vrot.lane.b32.xlu0 %v47, 16
  %v82 = vpop.permute.xlu0 %81
  %vm83 = vcmp.lt.s32.totalorder %v57, 16
  %v84 = vsel %vm83, %v80, %v82
  %v85 = vsel %vm83, %v78, %v80
  %v86 = vsel %vm83, %v76, %v78
  %v87 = vsel %vm83, %v82, %v76
  %v88 = vld [vmem:[%s5 + $0x20] sm:$0xff]
  %v89 = vld [vmem:[%s5 + $0x28] sm:$0xff]
  %v90 = vld [vmem:[%s5 + $0x30] sm:$0xff]
  %v91 = vld [vmem:[%s5 + $0x38] sm:$0xff]
  %v92 = vmul.f32 %v87, %v88
  %v93 = vmul.f32 %v86, %v89
  %v94 = vmul.f32 %v85, %v90
  %v95 = vmul.f32 %v84, %v91
  %96 = vst [vmem:[#allocation2 + $0x20] sm:$0xff] %v92
  %97 = vst [vmem:[#allocation2 + $0x28] sm:$0xff] %v93
  %98 = vst [vmem:[#allocation2 + $0x30] sm:$0xff] %v94
  %99 = vst [vmem:[#allocation2 + $0x38] sm:$0xff] %v95
  %100 = vrot.lane.b32.xlu0 %v44, 15
  %v101 = vpop.permute.xlu0 %100
  %102 = vrot.lane.b32.xlu0 %v45, 15
  %v103 = vpop.permute.xlu0 %102
  %104 = vrot.lane.b32.xlu0 %v46, 15
  %v105 = vpop.permute.xlu0 %104
  %106 = vrot.lane.b32.xlu0 %v47, 15
  %v107 = vpop.permute.xlu0 %106
  %vm108 = vcmp.lt.s32.totalorder %v57, 15
  %v109 = vsel %vm108, %v105, %v107
  %v110 = vsel %vm108, %v103, %v105
  %v111 = vsel %vm108, %v101, %v103
  %v112 = vsel %vm108, %v107, %v101
  %v113 = vld [vmem:[%s5 + $0x40] sm:$0xff]
  %v114 = vld [vmem:[%s5 + $0x48] sm:$0xff]
  %v115 = vld [vmem:[%s5 + $0x50] sm:$0xff]
  %v116 = vld [vmem:[%s5 + $0x58] sm:$0xff]
  %v117 = vmul.f32 %v112, %v113
  %v118 = vmul.f32 %v111, %v114
  %v119 = vmul.f32 %v110, %v115
  %v120 = vmul.f32 %v109, %v116
  %121 = vst [vmem:[#allocation2 + $0x40] sm:$0xff] %v117
  %122 = vst [vmem:[#allocation2 + $0x48] sm:$0xff] %v118
  %123 = vst [vmem:[#allocation2 + $0x50] sm:$0xff] %v119
  %124 = vst [vmem:[#allocation2 + $0x58] sm:$0xff] %v120
  %125 = vrot.lane.b32.xlu0 %v44, 1
  %v126 = vpop.permute.xlu0 %125
  %127 = vrot.lane.b32.xlu0 %v45, 1
  %v128 = vpop.permute.xlu0 %127
  %129 = vrot.lane.b32.xlu0 %v46, 1
  %v130 = vpop.permute.xlu0 %129
  %131 = vrot.lane.b32.xlu0 %v47, 1
  %v132 = vpop.permute.xlu0 %131
  %vm133 = vcmp.lt.s32.totalorder %v57, 1
  %v134 = vsel %vm133, %v130, %v132
  %v135 = vsel %vm133, %v128, %v130
  %v136 = vsel %vm133, %v126, %v128
  %v137 = vsel %vm133, %v132, %v126
  %v138 = vld [vmem:[%s5 + $0x60] sm:$0xff]
  %v139 = vld [vmem:[%s5 + $0x68] sm:$0xff]
  %v140 = vld [vmem:[%s5 + $0x70] sm:$0xff]
  %v141 = vld [vmem:[%s5 + $0x78] sm:$0xff]
  %v142 = vmul.f32 %v137, %v138
  %v143 = vmul.f32 %v136, %v139
  %v144 = vmul.f32 %v135, %v140
  %v145 = vmul.f32 %v134, %v141
  %146 = vst [vmem:[#allocation2 + $0x60] sm:$0xff] %v142
  %147 = vst [vmem:[#allocation2 + $0x68] sm:$0xff] %v143
  %148 = vst [vmem:[#allocation2 + $0x70] sm:$0xff] %v144
  %149 = vst [vmem:[#allocation2 + $0x78] sm:$0xff] %v145
  %150 = vst [vmem:[#allocation2 + $0x80] sm:$0xff] %v44
  %151 = vst [vmem:[#allocation2 + $0x88] sm:$0xff] %v45
  %152 = vst [vmem:[#allocation2 + $0x90] sm:$0xff] %v46
  %153 = vst [vmem:[#allocation2 + $0x98] sm:$0xff] %v47
  %154 = vrot.lane.b32.xlu0 %v44, 127
  %v155 = vpop.permute.xlu0 %154
  %156 = vrot.lane.b32.xlu0 %v45, 127
  %v157 = vpop.permute.xlu0 %156
  %158 = vrot.lane.b32.xlu0 %v46, 127
  %v159 = vpop.permute.xlu0 %158
  %160 = vrot.lane.b32.xlu0 %v47, 127
  %v161 = vpop.permute.xlu0 %160
  %vm162 = vcmp.lt.s32.totalorder %v57, 127
  %v163 = vsel %vm162, %v159, %v161
  %v164 = vsel %vm162, %v157, %v159
  %v165 = vsel %vm162, %v155, %v157
  %v166 = vsel %vm162, %v161, %v155
  %v167 = vld [vmem:[%s5 + $0xa0] sm:$0xff]
  %v168 = vld [vmem:[%s5 + $0xa8] sm:$0xff]
  %v169 = vld [vmem:[%s5 + $0xb0] sm:$0xff]
  %v170 = vld [vmem:[%s5 + $0xb8] sm:$0xff]
  %v171 = vmul.f32 %v165, %v167
  %v172 = vmul.f32 %v164, %v168
  %v173 = vmul.f32 %v163, %v169
  %v174 = vmul.f32 %v166, %v170
  %175 = vst [vmem:[#allocation2 + $0xa0] sm:$0xff] %v171
  %176 = vst [vmem:[#allocation2 + $0xa8] sm:$0xff] %v172
  %177 = vst [vmem:[#allocation2 + $0xb0] sm:$0xff] %v173
  %178 = vst [vmem:[#allocation2 + $0xb8] sm:$0xff] %v174
  %179 = vrot.lane.b32.xlu0 %v44, 113
  %v180 = vpop.permute.xlu0 %179
  %181 = vrot.lane.b32.xlu0 %v45, 113
  %v182 = vpop.permute.xlu0 %181
  %183 = vrot.lane.b32.xlu0 %v46, 113
  %v184 = vpop.permute.xlu0 %183
  %185 = vrot.lane.b32.xlu0 %v47, 113
  %v186 = vpop.permute.xlu0 %185
  %vm187 = vcmp.lt.s32.totalorder %v57, 113
  %v188 = vsel %vm187, %v184, %v186
  %v189 = vsel %vm187, %v182, %v184
  %v190 = vsel %vm187, %v180, %v182
  %v191 = vsel %vm187, %v186, %v180
  %v192 = vld [vmem:[%s5 + $0xc0] sm:$0xff]
  %v193 = vld [vmem:[%s5 + $0xc8] sm:$0xff]
  %v194 = vld [vmem:[%s5 + $0xd0] sm:$0xff]
  %v195 = vld [vmem:[%s5 + $0xd8] sm:$0xff]
  %v196 = vmul.f32 %v190, %v192
  %v197 = vmul.f32 %v189, %v193
  %v198 = vmul.f32 %v188, %v194
  %v199 = vmul.f32 %v191, %v195
  %200 = vst [vmem:[#allocation2 + $0xc0] sm:$0xff] %v196
  %201 = vst [vmem:[#allocation2 + $0xc8] sm:$0xff] %v197
  %202 = vst [vmem:[#allocation2 + $0xd0] sm:$0xff] %v198
  %203 = vst [vmem:[#allocation2 + $0xd8] sm:$0xff] %v199
  %204 = vrot.lane.b32.xlu0 %v44, 112
  %v205 = vpop.permute.xlu0 %204
  %206 = vrot.lane.b32.xlu0 %v45, 112
  %v207 = vpop.permute.xlu0 %206
  %208 = vrot.lane.b32.xlu0 %v46, 112
  %v209 = vpop.permute.xlu0 %208
  %210 = vrot.lane.b32.xlu0 %v47, 112
  %v211 = vpop.permute.xlu0 %210
  %vm212 = vcmp.lt.s32.totalorder %v57, 112
  %v213 = vsel %vm212, %v209, %v211
  %v214 = vsel %vm212, %v207, %v209
  %v215 = vsel %vm212, %v205, %v207
  %v216 = vsel %vm212, %v211, %v205
  %v217 = vld [vmem:[%s5 + $0xe0] sm:$0xff]
  %v218 = vld [vmem:[%s5 + $0xe8] sm:$0xff]
  %v219 = vld [vmem:[%s5 + $0xf0] sm:$0xff]
  %v220 = vld [vmem:[%s5 + $0xf8] sm:$0xff]
  %v221 = vmul.f32 %v215, %v217
  %v222 = vmul.f32 %v214, %v218
  %v223 = vmul.f32 %v213, %v219
  %v224 = vmul.f32 %v216, %v220
  %225 = vst [vmem:[#allocation2 + $0xe0] sm:$0xff] %v221
  %226 = vst [vmem:[#allocation2 + $0xe8] sm:$0xff] %v222
  %227 = vst [vmem:[#allocation2 + $0xf0] sm:$0xff] %v223
  %228 = vst [vmem:[#allocation2 + $0xf8] sm:$0xff] %v224
  %229 = vrot.lane.b32.xlu0 %v44, 111
  %v230 = vpop.permute.xlu0 %229
  %231 = vrot.lane.b32.xlu0 %v45, 111
  %v232 = vpop.permute.xlu0 %231
  %233 = vrot.lane.b32.xlu0 %v46, 111
  %v234 = vpop.permute.xlu0 %233
  %235 = vrot.lane.b32.xlu0 %v47, 111
  %v236 = vpop.permute.xlu0 %235
  %vm237 = vcmp.lt.s32.totalorder %v57, 111
  %v238 = vsel %vm237, %v234, %v236
  %v239 = vsel %vm237, %v232, %v234
  %v240 = vsel %vm237, %v230, %v232
  %v241 = vsel %vm237, %v236, %v230
  %v242 = vld [vmem:[%s5 + $0x100] sm:$0xff]
  %v243 = vld [vmem:[%s5 + $0x108] sm:$0xff]
  %v244 = vld [vmem:[%s5 + $0x110] sm:$0xff]
  %v245 = vld [vmem:[%s5 + $0x118] sm:$0xff]
  %v246 = vmul.f32 %v240, %v242
  %v247 = vmul.f32 %v239, %v243
  %v248 = vmul.f32 %v238, %v244
  %v249 = vmul.f32 %v241, %v245
  %250 = vst [vmem:[#allocation2 + $0x100] sm:$0xff] %v246
  %251 = vst [vmem:[#allocation2 + $0x108] sm:$0xff] %v247
  %252 = vst [vmem:[#allocation2 + $0x110] sm:$0xff] %v248
  %253 = vst [vmem:[#allocation2 + $0x118] sm:$0xff] %v249
  %v254 = vld [vmem:[%s3] sm:$0x1]
  %v255 = vld [vmem:[#allocation2] sm:$0xff]
  %v256 = vld [vmem:[#allocation2 + $0x8] sm:$0xff]
  %v257 = vld [vmem:[#allocation2 + $0x10] sm:$0xff]
  %v258 = vld [vmem:[#allocation2 + $0x18] sm:$0xff]
  %v259 = vld [vmem:[#allocation2 + $0x20] sm:$0xff]
  %v260 = vld [vmem:[#allocation2 + $0x28] sm:$0xff]
  %v261 = vld [vmem:[#allocation2 + $0x30] sm:$0xff]
  %v262 = vld [vmem:[#allocation2 + $0x38] sm:$0xff]
  %v263 = vld [vmem:[#allocation2 + $0x40] sm:$0xff]
  %v264 = vld [vmem:[#allocation2 + $0x48] sm:$0xff]
  %v265 = vld [vmem:[#allocation2 + $0x50] sm:$0xff]
  %v266 = vld [vmem:[#allocation2 + $0x58] sm:$0xff]
  %v267 = vld [vmem:[#allocation2 + $0x60] sm:$0xff]
  %v268 = vld [vmem:[#allocation2 + $0x68] sm:$0xff]
  %v269 = vld [vmem:[#allocation2 + $0x70] sm:$0xff]
  %v270 = vld [vmem:[#allocation2 + $0x78] sm:$0xff]
  %v271 = vld [vmem:[#allocation2 + $0x80] sm:$0xff]
  %v272 = vld [vmem:[#allocation2 + $0x88] sm:$0xff]
  %v273 = vld [vmem:[#allocation2 + $0x90] sm:$0xff]
  %v274 = vld [vmem:[#allocation2 + $0x98] sm:$0xff]
  %v275 = vld [vmem:[#allocation2 + $0xa0] sm:$0xff]
  %v276 = vld [vmem:[#allocation2 + $0xa8] sm:$0xff]
  %v277 = vld [vmem:[#allocation2 + $0xb0] sm:$0xff]
  %v278 = vld [vmem:[#allocation2 + $0xb8] sm:$0xff]
  %v279 = vld [vmem:[#allocation2 + $0xc0] sm:$0xff]
  %v280 = vld [vmem:[#allocation2 + $0xc8] sm:$0xff]
  %v281 = vld [vmem:[#allocation2 + $0xd0] sm:$0xff]
  %v282 = vld [vmem:[#allocation2 + $0xd8] sm:$0xff]
  %v283 = vld [vmem:[#allocation2 + $0xe0] sm:$0xff]
  %v284 = vld [vmem:[#allocation2 + $0xe8] sm:$0xff]
  %v285 = vld [vmem:[#allocation2 + $0xf0] sm:$0xff]
  %v286 = vld [vmem:[#allocation2 + $0xf8] sm:$0xff]
  %v287 = vld [vmem:[#allocation2 + $0x100] sm:$0xff]
  %v288 = vld [vmem:[#allocation2 + $0x108] sm:$0xff]
  %v289 = vld [vmem:[#allocation2 + $0x110] sm:$0xff]
  %v290 = vld [vmem:[#allocation2 + $0x118] sm:$0xff]
  %v291 = vpack.c.bf16 %v259, %v255
  %v292 = vpack.c.bf16 %v260, %v256
  %v293 = vpack.c.bf16 %v261, %v257
  %v294 = vpack.c.bf16 %v262, %v258
  %v295 = vpack.c.bf16 %v267, %v263
  %v296 = vpack.c.bf16 %v268, %v264
  %v297 = vpack.c.bf16 %v269, %v265
  %v298 = vpack.c.bf16 %v270, %v266
  %v299 = vpack.c.bf16 %v275, %v271
  %v300 = vpack.c.bf16 %v276, %v272
  %v301 = vpack.c.bf16 %v277, %v273
  %v302 = vpack.c.bf16 %v278, %v274
  %v303 = vpack.c.bf16 %v283, %v279
  %v304 = vpack.c.bf16 %v284, %v280
  %v305 = vpack.c.bf16 %v285, %v281
  %v306 = vpack.c.bf16 %v286, %v282
  %v307 = vpack.c.bf16 %v287, %v287
  %v308 = vpack.c.bf16 %v288, %v288
  %v309 = vpack.c.bf16 %v289, %v289
  %v310 = vpack.c.bf16 %v290, %v290
  %v311 = vld [vmem:[%s4] sm:$0x3]
  %313 = vset.pattern.permute.xlu0 0
  %314 = vperm.xlu0 %313, %v311
  %v315 = vpop.permute.xlu0 %314
  %vm317 = vcmask 588800
  %v319 = vsel %vm317, %v254, 0
  %vm321 = vcmask 1043456
  %v323 = vsel %vm321, %v307, 0
  %v326 = vsel %vm321, %v308, 0
  %v329 = vsel %vm321, %v309, 0
  %v332 = vsel %vm321, %v310, 0
  %334 = vmatprep.subr.bf16.mxu0 %v292
  %335 = vmatpush1.bf16.msra.mxu0 %v291
  %336 = vmatprep.subr.bf16.mxu0 %v296
  %337 = vmatpush1.bf16.msra.mxu0 %v295
  %338 = vmatprep.subr.bf16.mxu0 %v300
  %339 = vmatpush1.bf16.msra.mxu0 %v299
  %340 = vmatprep.subr.bf16.mxu0 %v304
  %341 = vmatpush1.bf16.msra.mxu0 %v303
  %342 = vmatprep.subr.bf16.mxu0 %v326
  %343 = vmatpush1.bf16.msra.mxu0 %v323
  %344 = vmatprep.subr.bf16.mxu0 0
  %345 = vmatpush1.bf16.msra.mxu0 0
  %346 = vmatprep.subr.bf16.mxu0 0
  %347 = vmatpush1.bf16.msra.mxu0 0
  %348 = vmatprep.subr.bf16.mxu0 0
  %349 = vmatpush1.bf16.msra.mxu0 0
  %350 = vmatprep.subr.bf16.mxu0 0
  %351 = vmatpush1.bf16.msra.mxu0 0
  %352 = vmatprep.subr.bf16.mxu0 0
  %353 = vmatpush1.bf16.msra.mxu0 0
  %354 = vmatprep.subr.bf16.mxu0 0
  %355 = vmatpush1.bf16.msra.mxu0 0
  %356 = vmatprep.subr.bf16.mxu0 0
  %357 = vmatpush1.bf16.msra.mxu0 0
  %358 = vmatprep.subr.bf16.mxu0 0
  %359 = vmatpush1.bf16.msra.mxu0 0
  %360 = vmatprep.subr.bf16.mxu0 0
  %361 = vmatpush1.bf16.msra.mxu0 0
  %362 = vmatprep.subr.bf16.mxu0 0
  %363 = vmatpush1.bf16.msra.mxu0 0
  %364 = vmatprep.subr.bf16.mxu0 0
  %365 = vmatpush1.bf16.msra.mxu0 0
  %366 = vmatprep.mubr.bf16.mxu0 0
  %367 = vmatmul.mubr.bf16.gmra.mrb[0].mxu0 %v319
  %v368 = vpop.f32.mrb[0].mxu0
  %v369 = vadd.f32 %v315, %v368
  %v370 = vpop.f32.mrb[0].mxu0
  %v371 = vadd.f32 %v315, %v370
  %v372 = vpop.f32.mrb[0].mxu0
  %v373 = vpop.f32.mrb[0].mxu0
  %374 = vdwg.mxu0
  %375 = vmatprep.subr.bf16.mxu0 %v294
  %376 = vmatpush1.bf16.msra.mxu0 %v293
  %377 = vmatprep.subr.bf16.mxu0 %v298
  %378 = vmatpush1.bf16.msra.mxu0 %v297
  %379 = vmatprep.subr.bf16.mxu0 %v302
  %380 = vmatpush1.bf16.msra.mxu0 %v301
  %381 = vmatprep.subr.bf16.mxu0 %v306
  %382 = vmatpush1.bf16.msra.mxu0 %v305
  %383 = vmatprep.subr.bf16.mxu0 %v332
  %384 = vmatpush1.bf16.msra.mxu0 %v329
  %385 = vmatprep.subr.bf16.mxu0 0
  %386 = vmatpush1.bf16.msra.mxu0 0
  %387 = vmatprep.subr.bf16.mxu0 0
  %388 = vmatpush1.bf16.msra.mxu0 0
  %389 = vmatprep.subr.bf16.mxu0 0
  %390 = vmatpush1.bf16.msra.mxu0 0
  %391 = vmatprep.subr.bf16.mxu0 0
  %392 = vmatpush1.bf16.msra.mxu0 0
  %393 = vmatprep.subr.bf16.mxu0 0
  %394 = vmatpush1.bf16.msra.mxu0 0
  %395 = vmatprep.subr.bf16.mxu0 0
  %396 = vmatpush1.bf16.msra.mxu0 0
  %397 = vmatprep.subr.bf16.mxu0 0
  %398 = vmatpush1.bf16.msra.mxu0 0
  %399 = vmatprep.subr.bf16.mxu0 0
  %400 = vmatpush1.bf16.msra.mxu0 0
  %401 = vmatprep.subr.bf16.mxu0 0
  %402 = vmatpush1.bf16.msra.mxu0 0
  %403 = vmatprep.subr.bf16.mxu0 0
  %404 = vmatpush1.bf16.msra.mxu0 0
  %405 = vmatprep.subr.bf16.mxu0 0
  %406 = vmatpush1.bf16.msra.mxu0 0
  %407 = vmatprep.mubr.bf16.mxu0 0
  %408 = vmatmul.mubr.bf16.gmra.mrb[0].mxu0 %v319
  %v409 = vpop.f32.mrb[0].mxu0
  %v410 = vadd.f32 %v315, %v409
  %v411 = vpop.f32.mrb[0].mxu0
  %v412 = vadd.f32 %v315, %v411
  %v413 = vpop.f32.mrb[0].mxu0
  %v414 = vpop.f32.mrb[0].mxu0
  %415 = vdwg.mxu0
  %v416 = vxor.u32 %v369, 2147483648
  %v417 = vxor.u32 %v371, 2147483648
  %v418 = vxor.u32 %v410, 2147483648
  %v419 = vxor.u32 %v412, 2147483648
  %v420 = vmul.f32 %v416, 1.442695
  %v421 = vpow.pop %v420
  %v422 = vmul.f32 %v417, 1.442695
  %v423 = vpow.pop %v422
  %v424 = vmul.f32 %v418, 1.442695
  %v425 = vpow.pop %v424
  %v426 = vmul.f32 %v419, 1.442695
  %v427 = vpow.pop %v426
  %v428 = vadd.f32 %v421, 1.0
  %v429 = vadd.f32 %v423, 1.0
  %v430 = vadd.f32 %v425, 1.0
  %v431 = vadd.f32 %v427, 1.0
  %v432 = vrcp.pop %v428
  %v433 = vmul.f32 1.0, %v432
  %v434 = vrcp.pop %v429
  %v435 = vmul.f32 1.0, %v434
  %v436 = vrcp.pop %v430
  %v437 = vmul.f32 1.0, %v436
  %v438 = vrcp.pop %v431
  %v439 = vmul.f32 1.0, %v438
  %v444 = vcombine.low %v433, %v435
  %v445 = vcombine.low %v437, %v439
  %v447 = vunpack.c.l.s4 1983009808
  %v448 = vunpack.c.0.s8 %v447
  %v449 = vlaneseq
  %v450 = vshrl.u32 %v449, 7
  %v451 = vsub.s32 %v448, %v450
  %v452 = vrot.slane %v444, %v451
  %v454 = vunpack.c.l.s4 1983009808
  %v455 = vunpack.c.0.s8 %v454
  %v456 = vlaneseq
  %v457 = vshrl.u32 %v456, 7
  %v458 = vsub.s32 %v455, %v457
  %v459 = vrot.slane %v445, %v458
  %v460 = vcombine.low %v452, %v459
  %462 = vst [vmem:[%s6] sm:$0xff] %v460
  // Predicated region
  $region26: #{seq2seq_forward.5} parent=0 // pred_check
    _
  $region27: #{seq2seq_forward.5} parent=0 // pred_check_branch
    %464 = sbr.rel (0) target = $region29
  $region28: #{seq2seq_forward.5} parent=0 // pred_region
    _
  $region29: #{seq2seq_forward.5} parent=0 // pred_fallthru
    _
  // Predicated region
  $region30: #{seq2seq_forward.5} parent=0 // pred_check
    _
  $region31: #{seq2seq_forward.5} parent=0 // pred_check_branch
    %466 = sbr.rel (0) target = $region33
  $region32: #{seq2seq_forward.5} parent=0 // pred_region
    _
  $region33: #{seq2seq_forward.5} parent=0 // pred_fallthru
    _

// kernel: seq2seq_forward.3
$region0: #{seq2seq_forward.3}
  #allocation0 [shape = 'u32[]', space=smem, size = 0x4, offset = 0x4, fixed_abs, tag = 'smem constant byte address 0x4 - core index']
  #allocation1 [shape = 'u32[144,128]{1,0:T(1,128)}', space=vmem, size = 0x12000, scoped, tag = 'internal scratch']
  #allocation2 [shape = 'f32[8,512]{1,0:T(8,128)}', space=vmem, size = 0x4000, scoped, tag = 'scratch operand']
  #allocation3 [shape = 'f32[8,512]{1,0:T(8,128)}', space=vmem, size = 0x4000, scoped, tag = 'scratch operand']
  #allocation4 [shape = 'f32[72,512]{1,0:T(8,128)}', space=vmem, size = 0x24000, scoped, tag = 'scratch operand']
  #allocation5 [shape = 'f32[72,512]{1,0:T(8,128)}', space=vmem, size = 0x24000, scoped, tag = 'scratch operand']
  %s0 = inlined_call_operand.vmem [shape: f32[4,8,512], index: 0, kind: input, shape index: {}]
  %s1 = inlined_call_operand.vmem [shape: bf16[32,72], index: 1, kind: input, shape index: {}]
  %s2 = inlined_call_operand.vmem [shape: bf16[32,72], index: 2, kind: input, shape index: {}]
  %s3 = inlined_call_operand.vmem [shape: f32[32,1], index: 3, kind: input, shape index: {}]
  %s4 = inlined_call_operand.vmem [shape: f32[8,512], index: 4, kind: input, shape index: {}]
  %s5 = inlined_call_operand.vmem [shape: f32[8,512], index: 5, kind: input, shape index: {}]
  %s6 = inlined_call_operand.vmem [shape: f32[8,512], index: 6, kind: input, shape index: {}]
  %s7 = inlined_call_operand.vmem [shape: f32[72,512], index: 7, kind: input, shape index: {}, may-alias: {7,8}]
  %s8 = inlined_call_operand.vmem [shape: f32[72,512], index: 8, kind: input, shape index: {}, may-alias: {7,8}]
  %s9 = inlined_call_operand.vmem [shape: f32[8,1], index: 9, kind: input, shape index: {}]
  %s10 = inlined_call_operand.vmem [shape: f32[8,1], index: 10, kind: input, shape index: {}]
  %s11 = inlined_call_operand.vmem [shape: f32[4,8,512], index: 11, kind: output, shape index: {0}]
  %s12 = inlined_call_operand.vmem [shape: f32[1,8,1], index: 12, kind: output, shape index: {1}]
  %s13 = inlined_call_operand.vmem [shape: f32[1,8,1], index: 13, kind: output, shape index: {2}]
  %14 = xla_tuple %s11, %s12, %s13
  %s15 = sld [smem:[#allocation0]]
  $region97: #{seq2seq_forward.3} parent=0
    _
  %s17 = ssub.s32 1, %s15
  %s18 = scalar_select 0, %s17, %s15
  loop: start=0, step=1, limit=6
  $region2: #{seq2seq_forward.3} parent=0 // loop_pre_header
    _
  $region3: #{seq2seq_forward.3} parent=0 // loop_header
    %s20 = sphi 0, %s24
    %p21 = scmp.ge.s32.totalorder %s20, 6
    %s27 = sphi 0, %s39
    %s28 = sphi 0, %s35
    %s29 = sphi 0, %s27
    %s30 = sphi 0, %s28
    %s31 = sphi 0, %s29
    %s32 = sphi 0, %s30
    %s44 = sphi 0, %s46
    %s47 = sphi 0, %s44
    %s48 = sphi 0, %s47
    %s64 = sphi 0, %s48
    %s68 = sphi 0, %s68
    %s70 = sphi 0, %s68
    %s71 = sphi 0, %s70
    %s85 = sphi 0, %s71
    %s89 = sphi 0, %s89
    %s91 = sphi 0, %s89
    %s92 = sphi 0, %s91
    %s106 = sphi 0, %s92
    %s110 = sphi 0, %s110
    %s112 = sphi 0, %s110
    %s113 = sphi 0, %s112
    %s127 = sphi 0, %s113
    %s131 = sphi 0, %s131
    %s133 = sphi 0, %s131
    %s134 = sphi 0, %s133
    %s148 = sphi 0, %s134
    %s152 = sphi 0, %s152
    %s154 = sphi 0, %s152
    %s155 = sphi 0, %s154
    %s169 = sphi 0, %s155
    %s173 = sphi 0, %s173
    %s175 = sphi 0, %s173
    %s176 = sphi 0, %s175
    %s190 = sphi 0, %s176
    %s194 = sphi 0, %s194
    %s196 = sphi 0, %s194
    %s197 = sphi 0, %s196
    %s211 = sphi 0, %s197
    %s215 = sphi 0, %s215
    %s217 = sphi 0, %s215
    %s218 = sphi 0, %s217
    %s232 = sphi 0, %s218
    %s236 = sphi 0, %s236
    %s238 = sphi 0, %s236
    %s239 = sphi 0, %s238
    %s253 = sphi 0, %s239
    %s257 = sphi 0, %s257
    %s259 = sphi 0, %s257
    %s260 = sphi 0, %s259
    %s274 = sphi 0, %s260
    %s282 = sphi 0, %s284
    %s285 = sphi 0, %s282
    %s286 = sphi 0, %s285
    %s302 = sphi 0, %s286
    %s308 = sphi 0, %s310
    %s311 = sphi 0, %s308
    %s312 = sphi 0, %s311
    %s328 = sphi 0, %s312
    %s334 = sphi 0, %s336
    %s337 = sphi 0, %s334
    %s338 = sphi 0, %s337
    %s354 = sphi 0, %s338
  $region4: #{seq2seq_forward.3} parent=0 // loop_header_branch
    %23 = sbr.rel (%p21) target = $region8
  $region5: #{seq2seq_forward.3} parent=0 // loop_body
    %s25 = ssub.s32 %s20, 1
    %s26 = ssub.s32 %s20, 2
    %s33 = sadd.s32 1, %s28
    %p34 = scmp.ge.s32.totalorder %s33, 4
    %s35 = scalar_select %p34, 0, %s33
    %s36 = sadd.s32 1, %s27
    %s37 = scalar_select %p34, %s36, %s27
    %p38 = scmp.ge.s32.totalorder %s37, 1
    %s39 = scalar_select %p38, 0, %s37
    %s40 = ssub.s32 %s28, %s35
    %s41 = ssub.s32 %s27, %s39
    %s42 = sor.u32 %s40, %s41
    %p43 = scmp.eq.s32.totalorder %s42, 0
    %s45 = sadd.s32 %s44, 1
    %s46 = scalar_select %p43, %s44, %s45
    %p49 = pneg %p43
    %p50 = scmp.eq.s32.totalorder %s20, 3
    %p51 = por %p49, %p50
    %p52 = scmp.ne.s32.totalorder %s44, %s47
    %p53 = scmp.eq.s32.totalorder %s20, 0
    %p54 = por %p52, %p53
    %p55 = scmp.ne.s32.totalorder %s44, %s47
    %p56 = scmp.eq.s32.totalorder %s25, 3
    %p57 = por %p55, %p56
    %p58 = scmp.ne.s32.totalorder %s47, %s48
    %p59 = scmp.eq.s32.totalorder %s25, 0
    %p60 = por %p58, %p59
    %p61 = scmp.ne.s32.totalorder %s47, %s48
    %p62 = scmp.eq.s32.totalorder %s26, 3
    %p63 = por %p61, %p62
    %p65 = scmp.ne.s32.totalorder %s48, %s64
    %p66 = scmp.eq.s32.totalorder %s26, 0
    %p67 = por %p65, %p66
    %s69 = sadd.s32 %s68, 1
    %p72 = scmp.eq.s32.totalorder %s20, 3
    %p73 = scmp.ne.s32.totalorder %s68, %s70
    %p74 = scmp.eq.s32.totalorder %s20, 0
    %p75 = por %p73, %p74
    %p76 = scmp.ne.s32.totalorder %s68, %s70
    %p77 = scmp.eq.s32.totalorder %s25, 3
    %p78 = por %p76, %p77
    %p79 = scmp.ne.s32.totalorder %s70, %s71
    %p80 = scmp.eq.s32.totalorder %s25, 0
    %p81 = por %p79, %p80
    %p82 = scmp.ne.s32.totalorder %s70, %s71
    %p83 = scmp.eq.s32.totalorder %s26, 3
    %p84 = por %p82, %p83
    %p86 = scmp.ne.s32.totalorder %s71, %s85
    %p87 = scmp.eq.s32.totalorder %s26, 0
    %p88 = por %p86, %p87
    %s90 = sadd.s32 %s89, 1
    %p93 = scmp.eq.s32.totalorder %s20, 3
    %p94 = scmp.ne.s32.totalorder %s89, %s91
    %p95 = scmp.eq.s32.totalorder %s20, 0
    %p96 = por %p94, %p95
    %p97 = scmp.ne.s32.totalorder %s89, %s91
    %p98 = scmp.eq.s32.totalorder %s25, 3
    %p99 = por %p97, %p98
    %p100 = scmp.ne.s32.totalorder %s91, %s92
    %p101 = scmp.eq.s32.totalorder %s25, 0
    %p102 = por %p100, %p101
    %p103 = scmp.ne.s32.totalorder %s91, %s92
    %p104 = scmp.eq.s32.totalorder %s26, 3
    %p105 = por %p103, %p104
    %p107 = scmp.ne.s32.totalorder %s92, %s106
    %p108 = scmp.eq.s32.totalorder %s26, 0
    %p109 = por %p107, %p108
    %s111 = sadd.s32 %s110, 1
    %p114 = scmp.eq.s32.totalorder %s20, 3
    %p115 = scmp.ne.s32.totalorder %s110, %s112
    %p116 = scmp.eq.s32.totalorder %s20, 0
    %p117 = por %p115, %p116
    %p118 = scmp.ne.s32.totalorder %s110, %s112
    %p119 = scmp.eq.s32.totalorder %s25, 3
    %p120 = por %p118, %p119
    %p121 = scmp.ne.s32.totalorder %s112, %s113
    %p122 = scmp.eq.s32.totalorder %s25, 0
    %p123 = por %p121, %p122
    %p124 = scmp.ne.s32.totalorder %s112, %s113
    %p125 = scmp.eq.s32.totalorder %s26, 3
    %p126 = por %p124, %p125
    %p128 = scmp.ne.s32.totalorder %s113, %s127
    %p129 = scmp.eq.s32.totalorder %s26, 0
    %p130 = por %p128, %p129
    %s132 = sadd.s32 %s131, 1
    %p135 = scmp.eq.s32.totalorder %s20, 3
    %p136 = scmp.ne.s32.totalorder %s131, %s133
    %p137 = scmp.eq.s32.totalorder %s20, 0
    %p138 = por %p136, %p137
    %p139 = scmp.ne.s32.totalorder %s131, %s133
    %p140 = scmp.eq.s32.totalorder %s25, 3
    %p141 = por %p139, %p140
    %p142 = scmp.ne.s32.totalorder %s133, %s134
    %p143 = scmp.eq.s32.totalorder %s25, 0
    %p144 = por %p142, %p143
    %p145 = scmp.ne.s32.totalorder %s133, %s134
    %p146 = scmp.eq.s32.totalorder %s26, 3
    %p147 = por %p145, %p146
    %p149 = scmp.ne.s32.totalorder %s134, %s148
    %p150 = scmp.eq.s32.totalorder %s26, 0
    %p151 = por %p149, %p150
    %s153 = sadd.s32 %s152, 1
    %p156 = scmp.eq.s32.totalorder %s20, 3
    %p157 = scmp.ne.s32.totalorder %s152, %s154
    %p158 = scmp.eq.s32.totalorder %s20, 0
    %p159 = por %p157, %p158
    %p160 = scmp.ne.s32.totalorder %s152, %s154
    %p161 = scmp.eq.s32.totalorder %s25, 3
    %p162 = por %p160, %p161
    %p163 = scmp.ne.s32.totalorder %s154, %s155
    %p164 = scmp.eq.s32.totalorder %s25, 0
    %p165 = por %p163, %p164
    %p166 = scmp.ne.s32.totalorder %s154, %s155
    %p167 = scmp.eq.s32.totalorder %s26, 3
    %p168 = por %p166, %p167
    %p170 = scmp.ne.s32.totalorder %s155, %s169
    %p171 = scmp.eq.s32.totalorder %s26, 0
    %p172 = por %p170, %p171
    %s174 = sadd.s32 %s173, 1
    %p177 = scmp.eq.s32.totalorder %s20, 3
    %p178 = scmp.ne.s32.totalorder %s173, %s175
    %p179 = scmp.eq.s32.totalorder %s20, 0
    %p180 = por %p178, %p179
    %p181 = scmp.ne.s32.totalorder %s173, %s175
    %p182 = scmp.eq.s32.totalorder %s25, 3
    %p183 = por %p181, %p182
    %p184 = scmp.ne.s32.totalorder %s175, %s176
    %p185 = scmp.eq.s32.totalorder %s25, 0
    %p186 = por %p184, %p185
    %p187 = scmp.ne.s32.totalorder %s175, %s176
    %p188 = scmp.eq.s32.totalorder %s26, 3
    %p189 = por %p187, %p188
    %p191 = scmp.ne.s32.totalorder %s176, %s190
    %p192 = scmp.eq.s32.totalorder %s26, 0
    %p193 = por %p191, %p192
    %s195 = sadd.s32 %s194, 1
    %p198 = scmp.eq.s32.totalorder %s20, 3
    %p199 = scmp.ne.s32.totalorder %s194, %s196
    %p200 = scmp.eq.s32.totalorder %s20, 0
    %p201 = por %p199, %p200
    %p202 = scmp.ne.s32.totalorder %s194, %s196
    %p203 = scmp.eq.s32.totalorder %s25, 3
    %p204 = por %p202, %p203
    %p205 = scmp.ne.s32.totalorder %s196, %s197
    %p206 = scmp.eq.s32.totalorder %s25, 0
    %p207 = por %p205, %p206
    %p208 = scmp.ne.s32.totalorder %s196, %s197
    %p209 = scmp.eq.s32.totalorder %s26, 3
    %p210 = por %p208, %p209
    %p212 = scmp.ne.s32.totalorder %s197, %s211
    %p213 = scmp.eq.s32.totalorder %s26, 0
    %p214 = por %p212, %p213
    %s216 = sadd.s32 %s215, 1
    %p219 = scmp.eq.s32.totalorder %s20, 3
    %p220 = scmp.ne.s32.totalorder %s215, %s217
    %p221 = scmp.eq.s32.totalorder %s20, 0
    %p222 = por %p220, %p221
    %p223 = scmp.ne.s32.totalorder %s215, %s217
    %p224 = scmp.eq.s32.totalorder %s25, 3
    %p225 = por %p223, %p224
    %p226 = scmp.ne.s32.totalorder %s217, %s218
    %p227 = scmp.eq.s32.totalorder %s25, 0
    %p228 = por %p226, %p227
    %p229 = scmp.ne.s32.totalorder %s217, %s218
    %p230 = scmp.eq.s32.totalorder %s26, 3
    %p231 = por %p229, %p230
    %p233 = scmp.ne.s32.totalorder %s218, %s232
    %p234 = scmp.eq.s32.totalorder %s26, 0
    %p235 = por %p233, %p234
    %s237 = sadd.s32 %s236, 1
    %p240 = scmp.eq.s32.totalorder %s20, 3
    %p241 = scmp.ne.s32.totalorder %s236, %s238
    %p242 = scmp.eq.s32.totalorder %s20, 0
    %p243 = por %p241, %p242
    %p244 = scmp.ne.s32.totalorder %s236, %s238
    %p245 = scmp.eq.s32.totalorder %s25, 3
    %p246 = por %p244, %p245
    %p247 = scmp.ne.s32.totalorder %s238, %s239
    %p248 = scmp.eq.s32.totalorder %s25, 0
    %p249 = por %p247, %p248
    %p250 = scmp.ne.s32.totalorder %s238, %s239
    %p251 = scmp.eq.s32.totalorder %s26, 3
    %p252 = por %p250, %p251
    %p254 = scmp.ne.s32.totalorder %s239, %s253
    %p255 = scmp.eq.s32.totalorder %s26, 0
    %p256 = por %p254, %p255
    %s258 = sadd.s32 %s257, 1
    %p261 = scmp.eq.s32.totalorder %s20, 3
    %p262 = scmp.ne.s32.totalorder %s257, %s259
    %p263 = scmp.eq.s32.totalorder %s20, 0
    %p264 = por %p262, %p263
    %p265 = scmp.ne.s32.totalorder %s257, %s259
    %p266 = scmp.eq.s32.totalorder %s25, 3
    %p267 = por %p265, %p266
    %p268 = scmp.ne.s32.totalorder %s259, %s260
    %p269 = scmp.eq.s32.totalorder %s25, 0
    %p270 = por %p268, %p269
    %p271 = scmp.ne.s32.totalorder %s259, %s260
    %p272 = scmp.eq.s32.totalorder %s26, 3
    %p273 = por %p271, %p272
    %p275 = scmp.ne.s32.totalorder %s260, %s274
    %p276 = scmp.eq.s32.totalorder %s26, 0
    %p277 = por %p275, %p276
    %s278 = ssub.s32 %s28, %s35
    %s279 = ssub.s32 %s27, %s39
    %s280 = sor.u32 %s278, %s279
    %p281 = scmp.eq.s32.totalorder %s280, 0
    %s283 = sadd.s32 %s282, 1
    %s284 = scalar_select %p281, %s282, %s283
    %p287 = pneg %p281
    %p288 = scmp.eq.s32.totalorder %s20, 3
    %p289 = por %p287, %p288
    %p290 = scmp.ne.s32.totalorder %s282, %s285
    %p291 = scmp.eq.s32.totalorder %s20, 0
    %p292 = por %p290, %p291
    %p293 = scmp.ne.s32.totalorder %s282, %s285
    %p294 = scmp.eq.s32.totalorder %s25, 3
    %p295 = por %p293, %p294
    %p296 = scmp.ne.s32.totalorder %s285, %s286
    %p297 = scmp.eq.s32.totalorder %s25, 0
    %p298 = por %p296, %p297
    %p299 = scmp.ne.s32.totalorder %s285, %s286
    %p300 = scmp.eq.s32.totalorder %s26, 3
    %p301 = por %p299, %p300
    %p303 = scmp.ne.s32.totalorder %s286, %s302
    %p304 = scmp.eq.s32.totalorder %s26, 0
    %p305 = por %p303, %p304
    %s306 = ssub.s32 %s27, %s39
    %p307 = scmp.eq.s32.totalorder %s306, 0
    %s309 = sadd.s32 %s308, 1
    %s310 = scalar_select %p307, %s308, %s309
    %p313 = pneg %p307
    %p314 = scmp.eq.s32.totalorder %s20, 3
    %p315 = por %p313, %p314
    %p316 = scmp.ne.s32.totalorder %s308, %s311
    %p317 = scmp.eq.s32.totalorder %s20, 0
    %p318 = por %p316, %p317
    %p319 = scmp.ne.s32.totalorder %s308, %s311
    %p320 = scmp.eq.s32.totalorder %s25, 3
    %p321 = por %p319, %p320
    %p322 = scmp.ne.s32.totalorder %s311, %s312
    %p323 = scmp.eq.s32.totalorder %s25, 0
    %p324 = por %p322, %p323
    %p325 = scmp.ne.s32.totalorder %s311, %s312
    %p326 = scmp.eq.s32.totalorder %s26, 3
    %p327 = por %p325, %p326
    %p329 = scmp.ne.s32.totalorder %s312, %s328
    %p330 = scmp.eq.s32.totalorder %s26, 0
    %p331 = por %p329, %p330
    %s332 = ssub.s32 %s27, %s39
    %p333 = scmp.eq.s32.totalorder %s332, 0
    %s335 = sadd.s32 %s334, 1
    %s336 = scalar_select %p333, %s334, %s335
    %p339 = pneg %p333
    %p340 = scmp.eq.s32.totalorder %s20, 3
    %p341 = por %p339, %p340
    %p342 = scmp.ne.s32.totalorder %s334, %s337
    %p343 = scmp.eq.s32.totalorder %s20, 0
    %p344 = por %p342, %p343
    %p345 = scmp.ne.s32.totalorder %s334, %s337
    %p346 = scmp.eq.s32.totalorder %s25, 3
    %p347 = por %p345, %p346
    %p348 = scmp.ne.s32.totalorder %s337, %s338
    %p349 = scmp.eq.s32.totalorder %s25, 0
    %p350 = por %p348, %p349
    %p351 = scmp.ne.s32.totalorder %s337, %s338
    %p352 = scmp.eq.s32.totalorder %s26, 3
    %p353 = por %p351, %p352
    %p355 = scmp.ne.s32.totalorder %s338, %s354
    %p356 = scmp.eq.s32.totalorder %s26, 0
    %p357 = por %p355, %p356
    %p358 = scmp.le.s32.totalorder 1, %s20
    %p359 = scmp.lt.s32.totalorder %s20, 5
    %p360 = pnand %p358, %p359
    %p361 = pneg %p360
    // Predicated region
    $region9: #{seq2seq_forward.3} parent=5 // pred_check
      _
    $region10: #{seq2seq_forward.3} parent=5 // pred_check_branch
      %363 = sbr.rel (%p360) target = $region12
    $region11: #{seq2seq_forward.3} parent=5 // pred_region
      %s364 = ssub.s32 %s20, 1
      // Predicated region
      $region13: #{seq2seq_forward.3} parent=11 // pred_check
        %p365 = pneg %p81
      $region14: #{seq2seq_forward.3} parent=11 // pred_check_branch
        %367 = sbr.rel (%p365) target = $region16
      $region15: #{seq2seq_forward.3} parent=11 // pred_region
        _
      $region16: #{seq2seq_forward.3} parent=11 // pred_fallthru
        _
      // Predicated region
      $region17: #{seq2seq_forward.3} parent=11 // pred_check
        %p368 = pneg %p102
      $region18: #{seq2seq_forward.3} parent=11 // pred_check_branch
        %370 = sbr.rel (%p368) target = $region20
      $region19: #{seq2seq_forward.3} parent=11 // pred_region
        _
      $region20: #{seq2seq_forward.3} parent=11 // pred_fallthru
        _
      // Predicated region
      $region21: #{seq2seq_forward.3} parent=11 // pred_check
        %p371 = pneg %p123
      $region22: #{seq2seq_forward.3} parent=11 // pred_check_branch
        %373 = sbr.rel (%p371) target = $region24
      $region23: #{seq2seq_forward.3} parent=11 // pred_region
        _
      $region24: #{seq2seq_forward.3} parent=11 // pred_fallthru
        _
      // Predicated region
      $region25: #{seq2seq_forward.3} parent=11 // pred_check
        %p374 = pneg %p144
      $region26: #{seq2seq_forward.3} parent=11 // pred_check_branch
        %376 = sbr.rel (%p374) target = $region28
      $region27: #{seq2seq_forward.3} parent=11 // pred_region
        _
      $region28: #{seq2seq_forward.3} parent=11 // pred_fallthru
        _
      // Predicated region
      $region29: #{seq2seq_forward.3} parent=11 // pred_check
        %p377 = pneg %p165
      $region30: #{seq2seq_forward.3} parent=11 // pred_check_branch
        %379 = sbr.rel (%p377) target = $region32
      $region31: #{seq2seq_forward.3} parent=11 // pred_region
        _
      $region32: #{seq2seq_forward.3} parent=11 // pred_fallthru
        _
      // Predicated region
      $region33: #{seq2seq_forward.3} parent=11 // pred_check
        %p380 = pneg %p186
      $region34: #{seq2seq_forward.3} parent=11 // pred_check_branch
        %382 = sbr.rel (%p380) target = $region36
      $region35: #{seq2seq_forward.3} parent=11 // pred_region
        _
      $region36: #{seq2seq_forward.3} parent=11 // pred_fallthru
        _
      // Predicated region
      $region37: #{seq2seq_forward.3} parent=11 // pred_check
        %p383 = pneg %p207
      $region38: #{seq2seq_forward.3} parent=11 // pred_check_branch
        %385 = sbr.rel (%p383) target = $region40
      $region39: #{seq2seq_forward.3} parent=11 // pred_region
        _
      $region40: #{seq2seq_forward.3} parent=11 // pred_fallthru
        _
      // Predicated region
      $region41: #{seq2seq_forward.3} parent=11 // pred_check
        %p386 = pneg %p228
      $region42: #{seq2seq_forward.3} parent=11 // pred_check_branch
        %388 = sbr.rel (%p386) target = $region44
      $region43: #{seq2seq_forward.3} parent=11 // pred_region
        _
      $region44: #{seq2seq_forward.3} parent=11 // pred_fallthru
        _
      // Predicated region
      $region45: #{seq2seq_forward.3} parent=11 // pred_check
        %p389 = pneg %p249
      $region46: #{seq2seq_forward.3} parent=11 // pred_check_branch
        %391 = sbr.rel (%p389) target = $region48
      $region47: #{seq2seq_forward.3} parent=11 // pred_region
        _
      $region48: #{seq2seq_forward.3} parent=11 // pred_fallthru
        _
      // Predicated region
      $region49: #{seq2seq_forward.3} parent=11 // pred_check
        %p392 = pneg %p270
      $region50: #{seq2seq_forward.3} parent=11 // pred_check_branch
        %394 = sbr.rel (%p392) target = $region52
      $region51: #{seq2seq_forward.3} parent=11 // pred_region
        _
      $region52: #{seq2seq_forward.3} parent=11 // pred_fallthru
        _
    $region12: #{seq2seq_forward.3} parent=5 // pred_fallthru
      _
    %p395 = scmp.lt.s32.totalorder %s20, 4
    // Predicated region
    $region53: #{seq2seq_forward.3} parent=5 // pred_check
      %p396 = pneg %p395
    $region54: #{seq2seq_forward.3} parent=5 // pred_check_branch
      %398 = sbr.rel (%p396) target = $region56
    $region55: #{seq2seq_forward.3} parent=5 // pred_region
      // Predicated region
      $region57: #{seq2seq_forward.3} parent=55 // pred_check
        %p399 = pneg %p54
      $region58: #{seq2seq_forward.3} parent=55 // pred_check_branch
        %401 = sbr.rel (%p399) target = $region60
      $region59: #{seq2seq_forward.3} parent=55 // pred_region
        %s402 = smul.u32 4, %s27
        %p403 = scmp.lt.s32.totalorder %s28, 3
        %s404 = scalar_select %p403, %s28, 3
        %p405 = scmp.lt.s32.totalorder %s402, 3
        %s406 = scalar_select %p405, %s402, 3
        %s407 = smul.addr %s404, 4
        %s408 = sadd.s32 %s406, %s407
        %s409 = smul.addr %s408, 8
        %s410 = scalar_lea.vmem %s0, %s409
        %s411 = smul.u32 4, %s27
      $region60: #{seq2seq_forward.3} parent=55 // pred_fallthru
        _
    $region56: #{seq2seq_forward.3} parent=5 // pred_fallthru
      _
    %p412 = scmp.le.s32.totalorder 1, %s20
    %p413 = scmp.lt.s32.totalorder %s20, 5
    %p414 = pnand %p412, %p413
    %p415 = pneg %p414
    // Predicated region
    $region61: #{seq2seq_forward.3} parent=5 // pred_check
      _
    $region62: #{seq2seq_forward.3} parent=5 // pred_check_branch
      %417 = sbr.rel (%p414) target = $region64
    $region63: #{seq2seq_forward.3} parent=5 // pred_region
      %s418 = ssub.s32 %s20, 1
      %s419 = smul.u32 4, %s29
      %p420 = scmp.lt.s32.totalorder %s30, 3
      %s421 = scalar_select %p420, %s30, 3
      %p422 = scmp.lt.s32.totalorder %s419, 3
      %s423 = scalar_select %p422, %s419, 3
      %s424 = smul.addr %s421, 4
      %s425 = sadd.s32 %s423, %s424
      %s426 = smul.addr %s425, 8
      %s427 = scalar_lea.vmem %s0, %s426
      %p428 = pneg %p60
      %p429 = pneg %p57
      %p430 = pneg %p81
      %p431 = pneg %p78
      %p432 = pneg %p102
      %p433 = pneg %p99
      %p434 = pneg %p123
      %p435 = pneg %p120
      %p436 = pneg %p144
      %p437 = pneg %p141
      %p438 = pneg %p165
      %p439 = pneg %p162
      %p440 = pneg %p186
      %p441 = pneg %p183
      %p442 = pneg %p207
      %p443 = pneg %p204
      %p444 = pneg %p228
      %p445 = pneg %p225
      %p446 = pneg %p249
      %p447 = pneg %p246
      %p448 = pneg %p270
      %p449 = pneg %p267
      %p450 = pneg %p298
      %p451 = pneg %p295
      %s452 = smul.u32 4, %s29
      %p453 = scmp.lt.s32.totalorder %s30, 3
      %s454 = scalar_select %p453, %s30, 3
      %p455 = scmp.lt.s32.totalorder %s452, 3
      %s456 = scalar_select %p455, %s452, 3
      %s457 = smul.addr %s454, 4
      %s458 = sadd.s32 %s456, %s457
      %s459 = smul.addr %s458, 8
      %s460 = scalar_lea.vmem %s11, %s459
      %p461 = pneg %p324
      %p462 = pneg %p321
      %p463 = scmp.lt.s32.totalorder %s29, 0
      %s464 = scalar_select %p463, %s29, 0
      %s465 = smul.addr %s464, 8
      %s466 = scalar_lea.vmem %s12, %s465
      %p467 = pneg %p350
      %p468 = pneg %p347
      %p469 = scmp.lt.s32.totalorder %s29, 0
      %s470 = scalar_select %p469, %s29, 0
      %s471 = smul.addr %s470, 8
      %s472 = scalar_lea.vmem %s13, %s471
      %s473 = smul.u32 4, %s29
      %p474 = scmp.lt.s32.totalorder %s30, 3
      %s475 = scalar_select %p474, %s30, 3
      %p476 = scmp.lt.s32.totalorder %s473, 3
      %s477 = scalar_select %p476, %s473, 3
      %s478 = smul.addr %s475, 4
      %s479 = sadd.s32 %s477, %s478
      %s480 = smul.addr %s479, 8
      %s481 = scalar_lea.vmem %s0, %s480
      %s482 = smul.u32 4, %s29
      %s483 = smul.u32 4, %s29
      %p484 = scmp.lt.s32.totalorder %s30, 3
      %s485 = scalar_select %p484, %s30, 3
      %p486 = scmp.lt.s32.totalorder %s483, 3
      %s487 = scalar_select %p486, %s483, 3
      %s488 = smul.addr %s485, 4
      %s489 = sadd.s32 %s487, %s488
      %s490 = smul.addr %s489, 8
      %s491 = scalar_lea.vmem %s11, %s490
      %s492 = smul.u32 4, %s29
      %p493 = scmp.lt.s32.totalorder %s29, 0
      %s494 = scalar_select %p493, %s29, 0
      %s495 = smul.addr %s494, 8
      %s496 = scalar_lea.vmem %s12, %s495
      %p497 = scmp.lt.s32.totalorder %s29, 0
      %s498 = scalar_select %p497, %s29, 0
      %s499 = smul.addr %s498, 8
      %s500 = scalar_lea.vmem %s13, %s499
      %p502 = scmp.eq.s32.totalorder %s30, 0
      // Predicated region
      $region65: #{seq2seq_forward.3} parent=63 // pred_check
        %p503 = pneg %p502
      $region66: #{seq2seq_forward.3} parent=63 // pred_check_branch
        %505 = sbr.rel (%p503) target = $region68
      $region67: #{seq2seq_forward.3} parent=63 // pred_region
        %506 = vst [vmem:[#allocation2] sm:$0xff] 0.0
        %507 = vst [vmem:[#allocation2 + $0x8] sm:$0xff] 0.0
        %508 = vst [vmem:[#allocation2 + $0x10] sm:$0xff] 0.0
        %509 = vst [vmem:[#allocation2 + $0x18] sm:$0xff] 0.0
        %510 = vst [vmem:[#allocation3] sm:$0xff] 0.0
        %511 = vst [vmem:[#allocation3 + $0x8] sm:$0xff] 0.0
        %512 = vst [vmem:[#allocation3 + $0x10] sm:$0xff] 0.0
        %513 = vst [vmem:[#allocation3 + $0x18] sm:$0xff] 0.0
        %vm514 = vcmask 7168
        %515 = vst.msk [vmem:[%s496] sm:$0xff] %vm514, 0.0
        %516 = vst.msk [vmem:[%s500] sm:$0xff] %vm514, 0.0
      $region68: #{seq2seq_forward.3} parent=63 // pred_fallthru
        _
      %v517 = vld [vmem:[%s481] sm:$0xff]
      %v518 = vld [vmem:[%s481 + $0x8] sm:$0xff]
      %v519 = vld [vmem:[%s481 + $0x10] sm:$0xff]
      %v520 = vld [vmem:[%s481 + $0x18] sm:$0xff]
      %v521 = vld [vmem:[%s9] sm:$0xff]
      %523 = vset.pattern.permute.xlu0 0
      %524 = vperm.xlu0 %523, %v521
      %v525 = vpop.permute.xlu0 %524
      %v527 = vmul.f32 %v517, %v525
      %v528 = vmul.f32 %v518, %v525
      %v529 = vmul.f32 %v519, %v525
      %v530 = vmul.f32 %v520, %v525
      %v531 = vld [vmem:[%s10] sm:$0xff]
      %533 = vset.pattern.permute.xlu0 0
      %534 = vperm.xlu0 %533, %v531
      %v535 = vpop.permute.xlu0 %534
      %v537 = vadd.f32 %v527, %v535
      %v538 = vadd.f32 %v528, %v535
      %v539 = vadd.f32 %v529, %v535
      %v540 = vadd.f32 %v530, %v535
      %541 = vrot.lane.b32.xlu0 %v537, 17
      %v542 = vpop.permute.xlu0 %541
      %543 = vrot.lane.b32.xlu0 %v538, 17
      %v544 = vpop.permute.xlu0 %543
      %545 = vrot.lane.b32.xlu0 %v539, 17
      %v546 = vpop.permute.xlu0 %545
      %547 = vrot.lane.b32.xlu0 %v540, 17
      %v548 = vpop.permute.xlu0 %547
      %v549 = vlaneseq
      %v550 = vand.u32 %v549, 127
      %vm551 = vcmp.lt.s32.totalorder %v550, 17
      %v552 = vsel %vm551, %v546, %v548
      %v553 = vsel %vm551, %v544, %v546
      %v554 = vsel %vm551, %v542, %v544
      %v555 = vsel %vm551, %v548, %v542
      %v556 = vld [vmem:[%s7] sm:$0xff]
      %v557 = vld [vmem:[%s7 + $0x8] sm:$0xff]
      %v558 = vld [vmem:[%s7 + $0x10] sm:$0xff]
      %v559 = vld [vmem:[%s7 + $0x18] sm:$0xff]
      %v560 = vmul.f32 %v555, %v556
      %v561 = vmul.f32 %v554, %v557
      %v562 = vmul.f32 %v553, %v558
      %v563 = vmul.f32 %v552, %v559
      %564 = vst [vmem:[#allocation4] sm:$0xff] %v560
      %565 = vst [vmem:[#allocation4 + $0x8] sm:$0xff] %v561
      %566 = vst [vmem:[#allocation4 + $0x10] sm:$0xff] %v562
      %567 = vst [vmem:[#allocation4 + $0x18] sm:$0xff] %v563
      %568 = vrot.lane.b32.xlu0 %v537, 16
      %v569 = vpop.permute.xlu0 %568
      %570 = vrot.lane.b32.xlu0 %v538, 16
      %v571 = vpop.permute.xlu0 %570
      %572 = vrot.lane.b32.xlu0 %v539, 16
      %v573 = vpop.permute.xlu0 %572
      %574 = vrot.lane.b32.xlu0 %v540, 16
      %v575 = vpop.permute.xlu0 %574
      %vm576 = vcmp.lt.s32.totalorder %v550, 16
      %v577 = vsel %vm576, %v573, %v575
      %v578 = vsel %vm576, %v571, %v573
      %v579 = vsel %vm576, %v569, %v571
      %v580 = vsel %vm576, %v575, %v569
      %v581 = vld [vmem:[%s7 + $0x20] sm:$0xff]
      %v582 = vld [vmem:[%s7 + $0x28] sm:$0xff]
      %v583 = vld [vmem:[%s7 + $0x30] sm:$0xff]
      %v584 = vld [vmem:[%s7 + $0x38] sm:$0xff]
      %v585 = vmul.f32 %v580, %v581
      %v586 = vmul.f32 %v579, %v582
      %v587 = vmul.f32 %v578, %v583
      %v588 = vmul.f32 %v577, %v584
      %589 = vst [vmem:[#allocation4 + $0x20] sm:$0xff] %v585
      %590 = vst [vmem:[#allocation4 + $0x28] sm:$0xff] %v586
      %591 = vst [vmem:[#allocation4 + $0x30] sm:$0xff] %v587
      %592 = vst [vmem:[#allocation4 + $0x38] sm:$0xff] %v588
      %593 = vrot.lane.b32.xlu0 %v537, 15
      %v594 = vpop.permute.xlu0 %593
      %595 = vrot.lane.b32.xlu0 %v538, 15
      %v596 = vpop.permute.xlu0 %595
      %597 = vrot.lane.b32.xlu0 %v539, 15
      %v598 = vpop.permute.xlu0 %597
      %599 = vrot.lane.b32.xlu0 %v540, 15
      %v600 = vpop.permute.xlu0 %599
      %vm601 = vcmp.lt.s32.totalorder %v550, 15
      %v602 = vsel %vm601, %v598, %v600
      %v603 = vsel %vm601, %v596, %v598
      %v604 = vsel %vm601, %v594, %v596
      %v605 = vsel %vm601, %v600, %v594
      %v606 = vld [vmem:[%s7 + $0x40] sm:$0xff]
      %v607 = vld [vmem:[%s7 + $0x48] sm:$0xff]
      %v608 = vld [vmem:[%s7 + $0x50] sm:$0xff]
      %v609 = vld [vmem:[%s7 + $0x58] sm:$0xff]
      %v610 = vmul.f32 %v605, %v606
      %v611 = vmul.f32 %v604, %v607
      %v612 = vmul.f32 %v603, %v608
      %v613 = vmul.f32 %v602, %v609
      %614 = vst [vmem:[#allocation4 + $0x40] sm:$0xff] %v610
      %615 = vst [vmem:[#allocation4 + $0x48] sm:$0xff] %v611
      %616 = vst [vmem:[#allocation4 + $0x50] sm:$0xff] %v612
      %617 = vst [vmem:[#allocation4 + $0x58] sm:$0xff] %v613
      %618 = vrot.lane.b32.xlu0 %v537, 1
      %v619 = vpop.permute.xlu0 %618
      %620 = vrot.lane.b32.xlu0 %v538, 1
      %v621 = vpop.permute.xlu0 %620
      %622 = vrot.lane.b32.xlu0 %v539, 1
      %v623 = vpop.permute.xlu0 %622
      %624 = vrot.lane.b32.xlu0 %v540, 1
      %v625 = vpop.permute.xlu0 %624
      %vm626 = vcmp.lt.s32.totalorder %v550, 1
      %v627 = vsel %vm626, %v623, %v625
      %v628 = vsel %vm626, %v621, %v623
      %v629 = vsel %vm626, %v619, %v621
      %v630 = vsel %vm626, %v625, %v619
      %v631 = vld [vmem:[%s7 + $0x60] sm:$0xff]
      %v632 = vld [vmem:[%s7 + $0x68] sm:$0xff]
      %v633 = vld [vmem:[%s7 + $0x70] sm:$0xff]
      %v634 = vld [vmem:[%s7 + $0x78] sm:$0xff]
      %v635 = vmul.f32 %v630, %v631
      %v636 = vmul.f32 %v629, %v632
      %v637 = vmul.f32 %v628, %v633
      %v638 = vmul.f32 %v627, %v634
      %639 = vst [vmem:[#allocation4 + $0x60] sm:$0xff] %v635
      %640 = vst [vmem:[#allocation4 + $0x68] sm:$0xff] %v636
      %641 = vst [vmem:[#allocation4 + $0x70] sm:$0xff] %v637
      %642 = vst [vmem:[#allocation4 + $0x78] sm:$0xff] %v638
      %643 = vst [vmem:[#allocation4 + $0x80] sm:$0xff] %v537
      %644 = vst [vmem:[#allocation4 + $0x88] sm:$0xff] %v538
      %645 = vst [vmem:[#allocation4 + $0x90] sm:$0xff] %v539
      %646 = vst [vmem:[#allocation4 + $0x98] sm:$0xff] %v540
      %647 = vrot.lane.b32.xlu0 %v537, 127
      %v648 = vpop.permute.xlu0 %647
      %649 = vrot.lane.b32.xlu0 %v538, 127
      %v650 = vpop.permute.xlu0 %649
      %651 = vrot.lane.b32.xlu0 %v539, 127
      %v652 = vpop.permute.xlu0 %651
      %653 = vrot.lane.b32.xlu0 %v540, 127
      %v654 = vpop.permute.xlu0 %653
      %vm655 = vcmp.lt.s32.totalorder %v550, 127
      %v656 = vsel %vm655, %v652, %v654
      %v657 = vsel %vm655, %v650, %v652
      %v658 = vsel %vm655, %v648, %v650
      %v659 = vsel %vm655, %v654, %v648
      %v660 = vld [vmem:[%s7 + $0xa0] sm:$0xff]
      %v661 = vld [vmem:[%s7 + $0xa8] sm:$0xff]
      %v662 = vld [vmem:[%s7 + $0xb0] sm:$0xff]
      %v663 = vld [vmem:[%s7 + $0xb8] sm:$0xff]
      %v664 = vmul.f32 %v658, %v660
      %v665 = vmul.f32 %v657, %v661
      %v666 = vmul.f32 %v656, %v662
      %v667 = vmul.f32 %v659, %v663
      %668 = vst [vmem:[#allocation4 + $0xa0] sm:$0xff] %v664
      %669 = vst [vmem:[#allocation4 + $0xa8] sm:$0xff] %v665
      %670 = vst [vmem:[#allocation4 + $0xb0] sm:$0xff] %v666
      %671 = vst [vmem:[#allocation4 + $0xb8] sm:$0xff] %v667
      %672 = vrot.lane.b32.xlu0 %v537, 113
      %v673 = vpop.permute.xlu0 %672
      %674 = vrot.lane.b32.xlu0 %v538, 113
      %v675 = vpop.permute.xlu0 %674
      %676 = vrot.lane.b32.xlu0 %v539, 113
      %v677 = vpop.permute.xlu0 %676
      %678 = vrot.lane.b32.xlu0 %v540, 113
      %v679 = vpop.permute.xlu0 %678
      %vm680 = vcmp.lt.s32.totalorder %v550, 113
      %v681 = vsel %vm680, %v677, %v679
      %v682 = vsel %vm680, %v675, %v677
      %v683 = vsel %vm680, %v673, %v675
      %v684 = vsel %vm680, %v679, %v673
      %v685 = vld [vmem:[%s7 + $0xc0] sm:$0xff]
      %v686 = vld [vmem:[%s7 + $0xc8] sm:$0xff]
      %v687 = vld [vmem:[%s7 + $0xd0] sm:$0xff]
      %v688 = vld [vmem:[%s7 + $0xd8] sm:$0xff]
      %v689 = vmul.f32 %v683, %v685
      %v690 = vmul.f32 %v682, %v686
      %v691 = vmul.f32 %v681, %v687
      %v692 = vmul.f32 %v684, %v688
      %693 = vst [vmem:[#allocation4 + $0xc0] sm:$0xff] %v689
      %694 = vst [vmem:[#allocation4 + $0xc8] sm:$0xff] %v690
      %695 = vst [vmem:[#allocation4 + $0xd0] sm:$0xff] %v691
      %696 = vst [vmem:[#allocation4 + $0xd8] sm:$0xff] %v692
      %697 = vrot.lane.b32.xlu0 %v537, 112
      %v698 = vpop.permute.xlu0 %697
      %699 = vrot.lane.b32.xlu0 %v538, 112
      %v700 = vpop.permute.xlu0 %699
      %701 = vrot.lane.b32.xlu0 %v539, 112
      %v702 = vpop.permute.xlu0 %701
      %703 = vrot.lane.b32.xlu0 %v540, 112
      %v704 = vpop.permute.xlu0 %703
      %vm705 = vcmp.lt.s32.totalorder %v550, 112
      %v706 = vsel %vm705, %v702, %v704
      %v707 = vsel %vm705, %v700, %v702
      %v708 = vsel %vm705, %v698, %v700
      %v709 = vsel %vm705, %v704, %v698
      %v710 = vld [vmem:[%s7 + $0xe0] sm:$0xff]
      %v711 = vld [vmem:[%s7 + $0xe8] sm:$0xff]
      %v712 = vld [vmem:[%s7 + $0xf0] sm:$0xff]
      %v713 = vld [vmem:[%s7 + $0xf8] sm:$0xff]
      %v714 = vmul.f32 %v708, %v710
      %v715 = vmul.f32 %v707, %v711
      %v716 = vmul.f32 %v706, %v712
      %v717 = vmul.f32 %v709, %v713
      %718 = vst [vmem:[#allocation4 + $0xe0] sm:$0xff] %v714
      %719 = vst [vmem:[#allocation4 + $0xe8] sm:$0xff] %v715
      %720 = vst [vmem:[#allocation4 + $0xf0] sm:$0xff] %v716
      %721 = vst [vmem:[#allocation4 + $0xf8] sm:$0xff] %v717
      %722 = vrot.lane.b32.xlu0 %v537, 111
      %v723 = vpop.permute.xlu0 %722
      %724 = vrot.lane.b32.xlu0 %v538, 111
      %v725 = vpop.permute.xlu0 %724
      %726 = vrot.lane.b32.xlu0 %v539, 111
      %v727 = vpop.permute.xlu0 %726
      %728 = vrot.lane.b32.xlu0 %v540, 111
      %v729 = vpop.permute.xlu0 %728
      %vm730 = vcmp.lt.s32.totalorder %v550, 111
      %v731 = vsel %vm730, %v727, %v729
      %v732 = vsel %vm730, %v725, %v727
      %v733 = vsel %vm730, %v723, %v725
      %v734 = vsel %vm730, %v729, %v723
      %v735 = vld [vmem:[%s7 + $0x100] sm:$0xff]
      %v736 = vld [vmem:[%s7 + $0x108] sm:$0xff]
      %v737 = vld [vmem:[%s7 + $0x110] sm:$0xff]
      %v738 = vld [vmem:[%s7 + $0x118] sm:$0xff]
      %v739 = vmul.f32 %v733, %v735
      %v740 = vmul.f32 %v732, %v736
      %v741 = vmul.f32 %v731, %v737
      %v742 = vmul.f32 %v734, %v738
      %743 = vst [vmem:[#allocation4 + $0x100] sm:$0xff] %v739
      %744 = vst [vmem:[#allocation4 + $0x108] sm:$0xff] %v740
      %745 = vst [vmem:[#allocation4 + $0x110] sm:$0xff] %v741
      %746 = vst [vmem:[#allocation4 + $0x118] sm:$0xff] %v742
      %v747 = vld [vmem:[#allocation2] sm:$0xff]
      %v748 = vld [vmem:[#allocation2 + $0x8] sm:$0xff]
      %v749 = vld [vmem:[#allocation2 + $0x10] sm:$0xff]
      %v750 = vld [vmem:[#allocation2 + $0x18] sm:$0xff]
      %v751 = vld [vmem:[#allocation3] sm:$0xff]
      %v752 = vld [vmem:[#allocation3 + $0x8] sm:$0xff]
      %v753 = vld [vmem:[#allocation3 + $0x10] sm:$0xff]
      %v754 = vld [vmem:[#allocation3 + $0x18] sm:$0xff]
      %755 = vrot.lane.b32.xlu0 %v747, 17
      %v756 = vpop.permute.xlu0 %755
      %757 = vrot.lane.b32.xlu0 %v748, 17
      %v758 = vpop.permute.xlu0 %757
      %759 = vrot.lane.b32.xlu0 %v749, 17
      %v760 = vpop.permute.xlu0 %759
      %761 = vrot.lane.b32.xlu0 %v750, 17
      %v762 = vpop.permute.xlu0 %761
      %v763 = vsel %vm551, %v760, %v762
      %v764 = vsel %vm551, %v758, %v760
      %v765 = vsel %vm551, %v756, %v758
      %v766 = vsel %vm551, %v762, %v756
      %v767 = vld [vmem:[%s8] sm:$0xff]
      %v768 = vld [vmem:[%s8 + $0x8] sm:$0xff]
      %v769 = vld [vmem:[%s8 + $0x10] sm:$0xff]
      %v770 = vld [vmem:[%s8 + $0x18] sm:$0xff]
      %v771 = vmul.f32 %v766, %v767
      %v772 = vmul.f32 %v765, %v768
      %v773 = vmul.f32 %v764, %v769
      %v774 = vmul.f32 %v763, %v770
      %775 = vst [vmem:[#allocation5] sm:$0xff] %v771
      %776 = vst [vmem:[#allocation5 + $0x8] sm:$0xff] %v772
      %777 = vst [vmem:[#allocation5 + $0x10] sm:$0xff] %v773
      %778 = vst [vmem:[#allocation5 + $0x18] sm:$0xff] %v774
      %779 = vrot.lane.b32.xlu0 %v747, 16
      %v780 = vpop.permute.xlu0 %779
      %781 = vrot.lane.b32.xlu0 %v748, 16
      %v782 = vpop.permute.xlu0 %781
      %783 = vrot.lane.b32.xlu0 %v749, 16
      %v784 = vpop.permute.xlu0 %783
      %785 = vrot.lane.b32.xlu0 %v750, 16
      %v786 = vpop.permute.xlu0 %785
      %v787 = vsel %vm576, %v784, %v786
      %v788 = vsel %vm576, %v782, %v784
      %v789 = vsel %vm576, %v780, %v782
      %v790 = vsel %vm576, %v786, %v780
      %v791 = vld [vmem:[%s8 + $0x20] sm:$0xff]
      %v792 = vld [vmem:[%s8 + $0x28] sm:$0xff]
      %v793 = vld [vmem:[%s8 + $0x30] sm:$0xff]
      %v794 = vld [vmem:[%s8 + $0x38] sm:$0xff]
      %v795 = vmul.f32 %v790, %v791
      %v796 = vmul.f32 %v789, %v792
      %v797 = vmul.f32 %v788, %v793
      %v798 = vmul.f32 %v787, %v794
      %799 = vst [vmem:[#allocation5 + $0x20] sm:$0xff] %v795
      %800 = vst [vmem:[#allocation5 + $0x28] sm:$0xff] %v796
      %801 = vst [vmem:[#allocation5 + $0x30] sm:$0xff] %v797
      %802 = vst [vmem:[#allocation5 + $0x38] sm:$0xff] %v798
      %803 = vrot.lane.b32.xlu0 %v747, 15
      %v804 = vpop.permute.xlu0 %803
      %805 = vrot.lane.b32.xlu0 %v748, 15
      %v806 = vpop.permute.xlu0 %805
      %807 = vrot.lane.b32.xlu0 %v749, 15
      %v808 = vpop.permute.xlu0 %807
      %809 = vrot.lane.b32.xlu0 %v750, 15
      %v810 = vpop.permute.xlu0 %809
      %v811 = vsel %vm601, %v808, %v810
      %v812 = vsel %vm601, %v806, %v808
      %v813 = vsel %vm601, %v804, %v806
      %v814 = vsel %vm601, %v810, %v804
      %v815 = vld [vmem:[%s8 + $0x40] sm:$0xff]
      %v816 = vld [vmem:[%s8 + $0x48] sm:$0xff]
      %v817 = vld [vmem:[%s8 + $0x50] sm:$0xff]
      %v818 = vld [vmem:[%s8 + $0x58] sm:$0xff]
      %v819 = vmul.f32 %v814, %v815
      %v820 = vmul.f32 %v813, %v816
      %v821 = vmul.f32 %v812, %v817
      %v822 = vmul.f32 %v811, %v818
      %823 = vst [vmem:[#allocation5 + $0x40] sm:$0xff] %v819
      %824 = vst [vmem:[#allocation5 + $0x48] sm:$0xff] %v820
      %825 = vst [vmem:[#allocation5 + $0x50] sm:$0xff] %v821
      %826 = vst [vmem:[#allocation5 + $0x58] sm:$0xff] %v822
      %827 = vrot.lane.b32.xlu0 %v747, 1
      %v828 = vpop.permute.xlu0 %827
      %829 = vrot.lane.b32.xlu0 %v748, 1
      %v830 = vpop.permute.xlu0 %829
      %831 = vrot.lane.b32.xlu0 %v749, 1
      %v832 = vpop.permute.xlu0 %831
      %833 = vrot.lane.b32.xlu0 %v750, 1
      %v834 = vpop.permute.xlu0 %833
      %v835 = vsel %vm626, %v832, %v834
      %v836 = vsel %vm626, %v830, %v832
      %v837 = vsel %vm626, %v828, %v830
      %v838 = vsel %vm626, %v834, %v828
      %v839 = vld [vmem:[%s8 + $0x60] sm:$0xff]
      %v840 = vld [vmem:[%s8 + $0x68] sm:$0xff]
      %v841 = vld [vmem:[%s8 + $0x70] sm:$0xff]
      %v842 = vld [vmem:[%s8 + $0x78] sm:$0xff]
      %v843 = vmul.f32 %v838, %v839
      %v844 = vmul.f32 %v837, %v840
      %v845 = vmul.f32 %v836, %v841
      %v846 = vmul.f32 %v835, %v842
      %847 = vst [vmem:[#allocation5 + $0x60] sm:$0xff] %v843
      %848 = vst [vmem:[#allocation5 + $0x68] sm:$0xff] %v844
      %849 = vst [vmem:[#allocation5 + $0x70] sm:$0xff] %v845
      %850 = vst [vmem:[#allocation5 + $0x78] sm:$0xff] %v846
      %851 = vst [vmem:[#allocation5 + $0x80] sm:$0xff] %v747
      %852 = vst [vmem:[#allocation5 + $0x88] sm:$0xff] %v748
      %853 = vst [vmem:[#allocation5 + $0x90] sm:$0xff] %v749
      %854 = vst [vmem:[#allocation5 + $0x98] sm:$0xff] %v750
      %855 = vrot.lane.b32.xlu0 %v747, 127
      %v856 = vpop.permute.xlu0 %855
      %857 = vrot.lane.b32.xlu0 %v748, 127
      %v858 = vpop.permute.xlu0 %857
      %859 = vrot.lane.b32.xlu0 %v749, 127
      %v860 = vpop.permute.xlu0 %859
      %861 = vrot.lane.b32.xlu0 %v750, 127
      %v862 = vpop.permute.xlu0 %861
      %v863 = vsel %vm655, %v860, %v862
      %v864 = vsel %vm655, %v858, %v860
      %v865 = vsel %vm655, %v856, %v858
      %v866 = vsel %vm655, %v862, %v856
      %v867 = vld [vmem:[%s8 + $0xa0] sm:$0xff]
      %v868 = vld [vmem:[%s8 + $0xa8] sm:$0xff]
      %v869 = vld [vmem:[%s8 + $0xb0] sm:$0xff]
      %v870 = vld [vmem:[%s8 + $0xb8] sm:$0xff]
      %v871 = vmul.f32 %v865, %v867
      %v872 = vmul.f32 %v864, %v868
      %v873 = vmul.f32 %v863, %v869
      %v874 = vmul.f32 %v866, %v870
      %875 = vst [vmem:[#allocation5 + $0xa0] sm:$0xff] %v871
      %876 = vst [vmem:[#allocation5 + $0xa8] sm:$0xff] %v872
      %877 = vst [vmem:[#allocation5 + $0xb0] sm:$0xff] %v873
      %878 = vst [vmem:[#allocation5 + $0xb8] sm:$0xff] %v874
      %879 = vrot.lane.b32.xlu0 %v747, 113
      %v880 = vpop.permute.xlu0 %879
      %881 = vrot.lane.b32.xlu0 %v748, 113
      %v882 = vpop.permute.xlu0 %881
      %883 = vrot.lane.b32.xlu0 %v749, 113
      %v884 = vpop.permute.xlu0 %883
      %885 = vrot.lane.b32.xlu0 %v750, 113
      %v886 = vpop.permute.xlu0 %885
      %v887 = vsel %vm680, %v884, %v886
      %v888 = vsel %vm680, %v882, %v884
      %v889 = vsel %vm680, %v880, %v882
      %v890 = vsel %vm680, %v886, %v880
      %v891 = vld [vmem:[%s8 + $0xc0] sm:$0xff]
      %v892 = vld [vmem:[%s8 + $0xc8] sm:$0xff]
      %v893 = vld [vmem:[%s8 + $0xd0] sm:$0xff]
      %v894 = vld [vmem:[%s8 + $0xd8] sm:$0xff]
      %v895 = vmul.f32 %v889, %v891
      %v896 = vmul.f32 %v888, %v892
      %v897 = vmul.f32 %v887, %v893
      %v898 = vmul.f32 %v890, %v894
      %899 = vst [vmem:[#allocation5 + $0xc0] sm:$0xff] %v895
      %900 = vst [vmem:[#allocation5 + $0xc8] sm:$0xff] %v896
      %901 = vst [vmem:[#allocation5 + $0xd0] sm:$0xff] %v897
      %902 = vst [vmem:[#allocation5 + $0xd8] sm:$0xff] %v898
      %903 = vrot.lane.b32.xlu0 %v747, 112
      %v904 = vpop.permute.xlu0 %903
      %905 = vrot.lane.b32.xlu0 %v748, 112
      %v906 = vpop.permute.xlu0 %905
      %907 = vrot.lane.b32.xlu0 %v749, 112
      %v908 = vpop.permute.xlu0 %907
      %909 = vrot.lane.b32.xlu0 %v750, 112
      %v910 = vpop.permute.xlu0 %909
      %v911 = vsel %vm705, %v908, %v910
      %v912 = vsel %vm705, %v906, %v908
      %v913 = vsel %vm705, %v904, %v906
      %v914 = vsel %vm705, %v910, %v904
      %v915 = vld [vmem:[%s8 + $0xe0] sm:$0xff]
      %v916 = vld [vmem:[%s8 + $0xe8] sm:$0xff]
      %v917 = vld [vmem:[%s8 + $0xf0] sm:$0xff]
      %v918 = vld [vmem:[%s8 + $0xf8] sm:$0xff]
      %v919 = vmul.f32 %v913, %v915
      %v920 = vmul.f32 %v912, %v916
      %v921 = vmul.f32 %v911, %v917
      %v922 = vmul.f32 %v914, %v918
      %923 = vst [vmem:[#allocation5 + $0xe0] sm:$0xff] %v919
      %924 = vst [vmem:[#allocation5 + $0xe8] sm:$0xff] %v920
      %925 = vst [vmem:[#allocation5 + $0xf0] sm:$0xff] %v921
      %926 = vst [vmem:[#allocation5 + $0xf8] sm:$0xff] %v922
      %927 = vrot.lane.b32.xlu0 %v747, 111
      %v928 = vpop.permute.xlu0 %927
      %929 = vrot.lane.b32.xlu0 %v748, 111
      %v930 = vpop.permute.xlu0 %929
      %931 = vrot.lane.b32.xlu0 %v749, 111
      %v932 = vpop.permute.xlu0 %931
      %933 = vrot.lane.b32.xlu0 %v750, 111
      %v934 = vpop.permute.xlu0 %933
      %v935 = vsel %vm730, %v932, %v934
      %v936 = vsel %vm730, %v930, %v932
      %v937 = vsel %vm730, %v928, %v930
      %v938 = vsel %vm730, %v934, %v928
      %v939 = vld [vmem:[%s8 + $0x100] sm:$0xff]
      %v940 = vld [vmem:[%s8 + $0x108] sm:$0xff]
      %v941 = vld [vmem:[%s8 + $0x110] sm:$0xff]
      %v942 = vld [vmem:[%s8 + $0x118] sm:$0xff]
      %v943 = vmul.f32 %v937, %v939
      %v944 = vmul.f32 %v936, %v940
      %v945 = vmul.f32 %v935, %v941
      %v946 = vmul.f32 %v938, %v942
      %947 = vst [vmem:[#allocation5 + $0x100] sm:$0xff] %v943
      %948 = vst [vmem:[#allocation5 + $0x108] sm:$0xff] %v944
      %949 = vst [vmem:[#allocation5 + $0x110] sm:$0xff] %v945
      %950 = vst [vmem:[#allocation5 + $0x118] sm:$0xff] %v946
      %v951 = vld [vmem:[%s1] sm:$0xf]
      %v952 = vld [vmem:[%s1 + $0x4] sm:$0xf]
      %v953 = vld [vmem:[%s1 + $0x8] sm:$0xf]
      %v954 = vld [vmem:[%s1 + $0xc] sm:$0xf]
      %v955 = vld [vmem:[#allocation4] sm:$0xff]
      %v956 = vld [vmem:[#allocation4 + $0x8] sm:$0xff]
      %v957 = vld [vmem:[#allocation4 + $0x10] sm:$0xff]
      %v958 = vld [vmem:[#allocation4 + $0x18] sm:$0xff]
      %v959 = vld [vmem:[#allocation4 + $0x20] sm:$0xff]
      %v960 = vld [vmem:[#allocation4 + $0x28] sm:$0xff]
      %v961 = vld [vmem:[#allocation4 + $0x30] sm:$0xff]
      %v962 = vld [vmem:[#allocation4 + $0x38] sm:$0xff]
      %v963 = vld [vmem:[#allocation4 + $0x40] sm:$0xff]
      %v964 = vld [vmem:[#allocation4 + $0x48] sm:$0xff]
      %v965 = vld [vmem:[#allocation4 + $0x50] sm:$0xff]
      %v966 = vld [vmem:[#allocation4 + $0x58] sm:$0xff]
      %v967 = vld [vmem:[#allocation4 + $0x60] sm:$0xff]
      %v968 = vld [vmem:[#allocation4 + $0x68] sm:$0xff]
      %v969 = vld [vmem:[#allocation4 + $0x70] sm:$0xff]
      %v970 = vld [vmem:[#allocation4 + $0x78] sm:$0xff]
      %v971 = vld [vmem:[#allocation4 + $0x80] sm:$0xff]
      %v972 = vld [vmem:[#allocation4 + $0x88] sm:$0xff]
      %v973 = vld [vmem:[#allocation4 + $0x90] sm:$0xff]
      %v974 = vld [vmem:[#allocation4 + $0x98] sm:$0xff]
      %v975 = vld [vmem:[#allocation4 + $0xa0] sm:$0xff]
      %v976 = vld [vmem:[#allocation4 + $0xa8] sm:$0xff]
      %v977 = vld [vmem:[#allocation4 + $0xb0] sm:$0xff]
      %v978 = vld [vmem:[#allocation4 + $0xb8] sm:$0xff]
      %v979 = vld [vmem:[#allocation4 + $0xc0] sm:$0xff]
      %v980 = vld [vmem:[#allocation4 + $0xc8] sm:$0xff]
      %v981 = vld [vmem:[#allocation4 + $0xd0] sm:$0xff]
      %v982 = vld [vmem:[#allocation4 + $0xd8] sm:$0xff]
      %v983 = vld [vmem:[#allocation4 + $0xe0] sm:$0xff]
      %v984 = vld [vmem:[#allocation4 + $0xe8] sm:$0xff]
      %v985 = vld [vmem:[#allocation4 + $0xf0] sm:$0xff]
      %v986 = vld [vmem:[#allocation4 + $0xf8] sm:$0xff]
      %v987 = vld [vmem:[#allocation4 + $0x100] sm:$0xff]
      %v988 = vld [vmem:[#allocation4 + $0x108] sm:$0xff]
      %v989 = vld [vmem:[#allocation4 + $0x110] sm:$0xff]
      %v990 = vld [vmem:[#allocation4 + $0x118] sm:$0xff]
      %v991 = vpack.c.bf16 %v959, %v955
      %v992 = vpack.c.bf16 %v960, %v956
      %v993 = vpack.c.bf16 %v961, %v957
      %v994 = vpack.c.bf16 %v962, %v958
      %v995 = vpack.c.bf16 %v967, %v963
      %v996 = vpack.c.bf16 %v968, %v964
      %v997 = vpack.c.bf16 %v969, %v965
      %v998 = vpack.c.bf16 %v970, %v966
      %v999 = vpack.c.bf16 %v975, %v971
      %v1000 = vpack.c.bf16 %v976, %v972
      %v1001 = vpack.c.bf16 %v977, %v973
      %v1002 = vpack.c.bf16 %v978, %v974
      %v1003 = vpack.c.bf16 %v983, %v979
      %v1004 = vpack.c.bf16 %v984, %v980
      %v1005 = vpack.c.bf16 %v985, %v981
      %v1006 = vpack.c.bf16 %v986, %v982
      %v1007 = vpack.c.bf16 %v987, %v987
      %v1008 = vpack.c.bf16 %v988, %v988
      %v1009 = vpack.c.bf16 %v989, %v989
      %v1010 = vpack.c.bf16 %v990, %v990
      %v1011 = vld [vmem:[%s2] sm:$0xf]
      %v1012 = vld [vmem:[%s2 + $0x4] sm:$0xf]
      %v1013 = vld [vmem:[%s2 + $0x8] sm:$0xf]
      %v1014 = vld [vmem:[%s2 + $0xc] sm:$0xf]
      %v1015 = vld [vmem:[#allocation5] sm:$0xff]
      %v1016 = vld [vmem:[#allocation5 + $0x8] sm:$0xff]
      %v1017 = vld [vmem:[#allocation5 + $0x10] sm:$0xff]
      %v1018 = vld [vmem:[#allocation5 + $0x18] sm:$0xff]
      %v1019 = vld [vmem:[#allocation5 + $0x20] sm:$0xff]
      %v1020 = vld [vmem:[#allocation5 + $0x28] sm:$0xff]
      %v1021 = vld [vmem:[#allocation5 + $0x30] sm:$0xff]
      %v1022 = vld [vmem:[#allocation5 + $0x38] sm:$0xff]
      %v1023 = vld [vmem:[#allocation5 + $0x40] sm:$0xff]
      %v1024 = vld [vmem:[#allocation5 + $0x48] sm:$0xff]
      %v1025 = vld [vmem:[#allocation5 + $0x50] sm:$0xff]
      %v1026 = vld [vmem:[#allocation5 + $0x58] sm:$0xff]
      %v1027 = vld [vmem:[#allocation5 + $0x60] sm:$0xff]
      %v1028 = vld [vmem:[#allocation5 + $0x68] sm:$0xff]
      %v1029 = vld [vmem:[#allocation5 + $0x70] sm:$0xff]
      %v1030 = vld [vmem:[#allocation5 + $0x78] sm:$0xff]
      %v1031 = vld [vmem:[#allocation5 + $0x80] sm:$0xff]
      %v1032 = vld [vmem:[#allocation5 + $0x88] sm:$0xff]
      %v1033 = vld [vmem:[#allocation5 + $0x90] sm:$0xff]
      %v1034 = vld [vmem:[#allocation5 + $0x98] sm:$0xff]
      %v1035 = vld [vmem:[#allocation5 + $0xa0] sm:$0xff]
      %v1036 = vld [vmem:[#allocation5 + $0xa8] sm:$0xff]
      %v1037 = vld [vmem:[#allocation5 + $0xb0] sm:$0xff]
      %v1038 = vld [vmem:[#allocation5 + $0xb8] sm:$0xff]
      %v1039 = vld [vmem:[#allocation5 + $0xc0] sm:$0xff]
      %v1040 = vld [vmem:[#allocation5 + $0xc8] sm:$0xff]
      %v1041 = vld [vmem:[#allocation5 + $0xd0] sm:$0xff]
      %v1042 = vld [vmem:[#allocation5 + $0xd8] sm:$0xff]
      %v1043 = vld [vmem:[#allocation5 + $0xe0] sm:$0xff]
      %v1044 = vld [vmem:[#allocation5 + $0xe8] sm:$0xff]
      %v1045 = vld [vmem:[#allocation5 + $0xf0] sm:$0xff]
      %v1046 = vld [vmem:[#allocation5 + $0xf8] sm:$0xff]
      %v1047 = vld [vmem:[#allocation5 + $0x100] sm:$0xff]
      %v1048 = vld [vmem:[#allocation5 + $0x108] sm:$0xff]
      %v1049 = vld [vmem:[#allocation5 + $0x110] sm:$0xff]
      %v1050 = vld [vmem:[#allocation5 + $0x118] sm:$0xff]
      %v1051 = vpack.c.bf16 %v1019, %v1015
      %v1052 = vpack.c.bf16 %v1020, %v1016
      %v1053 = vpack.c.bf16 %v1021, %v1017
      %v1054 = vpack.c.bf16 %v1022, %v1018
      %v1055 = vpack.c.bf16 %v1027, %v1023
      %v1056 = vpack.c.bf16 %v1028, %v1024
      %v1057 = vpack.c.bf16 %v1029, %v1025
      %v1058 = vpack.c.bf16 %v1030, %v1026
      %v1059 = vpack.c.bf16 %v1035, %v1031
      %v1060 = vpack.c.bf16 %v1036, %v1032
      %v1061 = vpack.c.bf16 %v1037, %v1033
      %v1062 = vpack.c.bf16 %v1038, %v1034
      %v1063 = vpack.c.bf16 %v1043, %v1039
      %v1064 = vpack.c.bf16 %v1044, %v1040
      %v1065 = vpack.c.bf16 %v1045, %v1041
      %v1066 = vpack.c.bf16 %v1046, %v1042
      %v1067 = vpack.c.bf16 %v1047, %v1047
      %v1068 = vpack.c.bf16 %v1048, %v1048
      %v1069 = vpack.c.bf16 %v1049, %v1049
      %v1070 = vpack.c.bf16 %v1050, %v1050
      %v1075 = vunpack.c.l.b16 %v1011
      %v1076 = vunpack.c.l.b16 %v1012
      %v1077 = vunpack.c.l.b16 %v1013
      %v1078 = vunpack.c.l.b16 %v1014
      %v1079 = vpack.c.b16 %v1076, %v1075
      %v1080 = vpack.c.b16 %v1078, %v1077
      %vm1081 = vcmask 588800
      %v1083 = vsel %vm1081, %v1079, 0
      %v1086 = vsel %vm1081, %v1080, 0
      %vm1088 = vcmask 1043456
      %v1090 = vsel %vm1088, %v1067, 0
      %v1093 = vsel %vm1088, %v1068, 0
      %v1096 = vsel %vm1088, %v1069, 0
      %v1099 = vsel %vm1088, %v1070, 0
      %1101 = vmatprep.subr.bf16.mxu0 %v1052
      %1102 = vmatpush1.bf16.msra.mxu0 %v1051
      %1103 = vmatprep.subr.bf16.mxu0 %v1056
      %1104 = vmatpush1.bf16.msra.mxu0 %v1055
      %1105 = vmatprep.subr.bf16.mxu0 %v1060
      %1106 = vmatpush1.bf16.msra.mxu0 %v1059
      %1107 = vmatprep.subr.bf16.mxu0 %v1064
      %1108 = vmatpush1.bf16.msra.mxu0 %v1063
      %1109 = vmatprep.subr.bf16.mxu0 %v1093
      %1110 = vmatpush1.bf16.msra.mxu0 %v1090
      %1111 = vmatprep.subr.bf16.mxu0 0
      %1112 = vmatpush1.bf16.msra.mxu0 0
      %1113 = vmatprep.subr.bf16.mxu0 0
      %1114 = vmatpush1.bf16.msra.mxu0 0
      %1115 = vmatprep.subr.bf16.mxu0 0
      %1116 = vmatpush1.bf16.msra.mxu0 0
      %1117 = vmatprep.subr.bf16.mxu0 0
      %1118 = vmatpush1.bf16.msra.mxu0 0
      %1119 = vmatprep.subr.bf16.mxu0 0
      %1120 = vmatpush1.bf16.msra.mxu0 0
      %1121 = vmatprep.subr.bf16.mxu0 0
      %1122 = vmatpush1.bf16.msra.mxu0 0
      %1123 = vmatprep.subr.bf16.mxu0 0
      %1124 = vmatpush1.bf16.msra.mxu0 0
      %1125 = vmatprep.subr.bf16.mxu0 0
      %1126 = vmatpush1.bf16.msra.mxu0 0
      %1127 = vmatprep.subr.bf16.mxu0 0
      %1128 = vmatpush1.bf16.msra.mxu0 0
      %1129 = vmatprep.subr.bf16.mxu0 0
      %1130 = vmatpush1.bf16.msra.mxu0 0
      %1131 = vmatprep.subr.bf16.mxu0 0
      %1132 = vmatpush1.bf16.msra.mxu0 0
      %1133 = vmatprep.mubr.bf16.mxu0 0
      %1134 = vmatmul.mubr.bf16.gmra.mrb[0].mxu0 %v1083
      %v1135 = vpop.f32.mrb[0].mxu0
      %v1136 = vadd.f32 0.0, %v1135
      %v1137 = vpop.f32.mrb[0].mxu0
      %v1138 = vadd.f32 0.0, %v1137
      %v1139 = vpop.f32.mrb[0].mxu0
      %v1140 = vadd.f32 0.0, %v1139
      %v1141 = vpop.f32.mrb[0].mxu0
      %v1142 = vadd.f32 0.0, %v1141
      %1143 = vmatprep.mubr.bf16.mxu0 0
      %1144 = vmatmul.mubr.bf16.gmra.mrb[0].mxu0 %v1086
      %v1145 = vpop.f32.mrb[0].mxu0
      %v1146 = vadd.f32 0.0, %v1145
      %v1147 = vpop.f32.mrb[0].mxu0
      %v1148 = vadd.f32 0.0, %v1147
      %v1149 = vpop.f32.mrb[0].mxu0
      %v1150 = vadd.f32 0.0, %v1149
      %v1151 = vpop.f32.mrb[0].mxu0
      %v1152 = vadd.f32 0.0, %v1151
      %1153 = vdwg.mxu0
      %1154 = vmatprep.subr.bf16.mxu0 %v1054
      %1155 = vmatpush1.bf16.msra.mxu0 %v1053
      %1156 = vmatprep.subr.bf16.mxu0 %v1058
      %1157 = vmatpush1.bf16.msra.mxu0 %v1057
      %1158 = vmatprep.subr.bf16.mxu0 %v1062
      %1159 = vmatpush1.bf16.msra.mxu0 %v1061
      %1160 = vmatprep.subr.bf16.mxu0 %v1066
      %1161 = vmatpush1.bf16.msra.mxu0 %v1065
      %1162 = vmatprep.subr.bf16.mxu0 %v1099
      %1163 = vmatpush1.bf16.msra.mxu0 %v1096
      %1164 = vmatprep.subr.bf16.mxu0 0
      %1165 = vmatpush1.bf16.msra.mxu0 0
      %1166 = vmatprep.subr.bf16.mxu0 0
      %1167 = vmatpush1.bf16.msra.mxu0 0
      %1168 = vmatprep.subr.bf16.mxu0 0
      %1169 = vmatpush1.bf16.msra.mxu0 0
      %1170 = vmatprep.subr.bf16.mxu0 0
      %1171 = vmatpush1.bf16.msra.mxu0 0
      %1172 = vmatprep.subr.bf16.mxu0 0
      %1173 = vmatpush1.bf16.msra.mxu0 0
      %1174 = vmatprep.subr.bf16.mxu0 0
      %1175 = vmatpush1.bf16.msra.mxu0 0
      %1176 = vmatprep.subr.bf16.mxu0 0
      %1177 = vmatpush1.bf16.msra.mxu0 0
      %1178 = vmatprep.subr.bf16.mxu0 0
      %1179 = vmatpush1.bf16.msra.mxu0 0
      %1180 = vmatprep.subr.bf16.mxu0 0
      %1181 = vmatpush1.bf16.msra.mxu0 0
      %1182 = vmatprep.subr.bf16.mxu0 0
      %1183 = vmatpush1.bf16.msra.mxu0 0
      %1184 = vmatprep.subr.bf16.mxu0 0
      %1185 = vmatpush1.bf16.msra.mxu0 0
      %1186 = vmatprep.mubr.bf16.mxu0 0
      %1187 = vmatmul.mubr.bf16.gmra.mrb[0].mxu0 %v1083
      %v1188 = vpop.f32.mrb[0].mxu0
      %v1189 = vadd.f32 0.0, %v1188
      %v1190 = vpop.f32.mrb[0].mxu0
      %v1191 = vadd.f32 0.0, %v1190
      %v1192 = vpop.f32.mrb[0].mxu0
      %v1193 = vadd.f32 0.0, %v1192
      %v1194 = vpop.f32.mrb[0].mxu0
      %v1195 = vadd.f32 0.0, %v1194
      %1196 = vmatprep.mubr.bf16.mxu0 0
      %1197 = vmatmul.mubr.bf16.gmra.mrb[0].mxu0 %v1086
      %v1198 = vpop.f32.mrb[0].mxu0
      %v1199 = vadd.f32 0.0, %v1198
      %v1200 = vpop.f32.mrb[0].mxu0
      %v1201 = vadd.f32 0.0, %v1200
      %v1202 = vpop.f32.mrb[0].mxu0
      %v1203 = vadd.f32 0.0, %v1202
      %v1204 = vpop.f32.mrb[0].mxu0
      %v1205 = vadd.f32 0.0, %v1204
      %1206 = vdwg.mxu0
      %v1211 = vunpack.c.l.b16 %v951
      %v1212 = vunpack.c.l.b16 %v952
      %v1213 = vunpack.c.l.b16 %v953
      %v1214 = vunpack.c.l.b16 %v954
      %v1215 = vpack.c.b16 %v1212, %v1211
      %v1216 = vpack.c.b16 %v1214, %v1213
      %v1218 = vsel %vm1081, %v1215, 0
      %v1221 = vsel %vm1081, %v1216, 0
      %v1224 = vsel %vm1088, %v1007, 0
      %v1227 = vsel %vm1088, %v1008, 0
      %v1230 = vsel %vm1088, %v1009, 0
      %v1233 = vsel %vm1088, %v1010, 0
      %1235 = vmatprep.subr.bf16.mxu0 %v992
      %1236 = vmatpush1.bf16.msra.mxu0 %v991
      %1237 = vmatprep.subr.bf16.mxu0 %v996
      %1238 = vmatpush1.bf16.msra.mxu0 %v995
      %1239 = vmatprep.subr.bf16.mxu0 %v1000
      %1240 = vmatpush1.bf16.msra.mxu0 %v999
      %1241 = vmatprep.subr.bf16.mxu0 %v1004
      %1242 = vmatpush1.bf16.msra.mxu0 %v1003
      %1243 = vmatprep.subr.bf16.mxu0 %v1227
      %1244 = vmatpush1.bf16.msra.mxu0 %v1224
      %1245 = vmatprep.subr.bf16.mxu0 0
      %1246 = vmatpush1.bf16.msra.mxu0 0
      %1247 = vmatprep.subr.bf16.mxu0 0
      %1248 = vmatpush1.bf16.msra.mxu0 0
      %1249 = vmatprep.subr.bf16.mxu0 0
      %1250 = vmatpush1.bf16.msra.mxu0 0
      %1251 = vmatprep.subr.bf16.mxu0 0
      %1252 = vmatpush1.bf16.msra.mxu0 0
      %1253 = vmatprep.subr.bf16.mxu0 0
      %1254 = vmatpush1.bf16.msra.mxu0 0
      %1255 = vmatprep.subr.bf16.mxu0 0
      %1256 = vmatpush1.bf16.msra.mxu0 0
      %1257 = vmatprep.subr.bf16.mxu0 0
      %1258 = vmatpush1.bf16.msra.mxu0 0
      %1259 = vmatprep.subr.bf16.mxu0 0
      %1260 = vmatpush1.bf16.msra.mxu0 0
      %1261 = vmatprep.subr.bf16.mxu0 0
      %1262 = vmatpush1.bf16.msra.mxu0 0
      %1263 = vmatprep.subr.bf16.mxu0 0
      %1264 = vmatpush1.bf16.msra.mxu0 0
      %1265 = vmatprep.subr.bf16.mxu0 0
      %1266 = vmatpush1.bf16.msra.mxu0 0
      %1267 = vmatprep.mubr.bf16.mxu0 0
      %1268 = vmatmul.mubr.bf16.gmra.mrb[0].mxu0 %v1218
      %v1269 = vpop.f32.mrb[0].mxu0
      %v1270 = vadd.f32 %v1136, %v1269
      %v1271 = vpop.f32.mrb[0].mxu0
      %v1272 = vadd.f32 %v1138, %v1271
      %v1273 = vpop.f32.mrb[0].mxu0
      %v1274 = vadd.f32 %v1140, %v1273
      %v1275 = vpop.f32.mrb[0].mxu0
      %v1276 = vadd.f32 %v1142, %v1275
      %1277 = vmatprep.mubr.bf16.mxu0 0
      %1278 = vmatmul.mubr.bf16.gmra.mrb[0].mxu0 %v1221
      %v1279 = vpop.f32.mrb[0].mxu0
      %v1280 = vadd.f32 %v1146, %v1279
      %v1281 = vpop.f32.mrb[0].mxu0
      %v1282 = vadd.f32 %v1148, %v1281
      %v1283 = vpop.f32.mrb[0].mxu0
      %v1284 = vadd.f32 %v1150, %v1283
      %v1285 = vpop.f32.mrb[0].mxu0
      %v1286 = vadd.f32 %v1152, %v1285
      %1287 = vdwg.mxu0
      %1288 = vmatprep.subr.bf16.mxu0 %v994
      %1289 = vmatpush1.bf16.msra.mxu0 %v993
      %1290 = vmatprep.subr.bf16.mxu0 %v998
      %1291 = vmatpush1.bf16.msra.mxu0 %v997
      %1292 = vmatprep.subr.bf16.mxu0 %v1002
      %1293 = vmatpush1.bf16.msra.mxu0 %v1001
      %1294 = vmatprep.subr.bf16.mxu0 %v1006
      %1295 = vmatpush1.bf16.msra.mxu0 %v1005
      %1296 = vmatprep.subr.bf16.mxu0 %v1233
      %1297 = vmatpush1.bf16.msra.mxu0 %v1230
      %1298 = vmatprep.subr.bf16.mxu0 0
      %1299 = vmatpush1.bf16.msra.mxu0 0
      %1300 = vmatprep.subr.bf16.mxu0 0
      %1301 = vmatpush1.bf16.msra.mxu0 0
      %1302 = vmatprep.subr.bf16.mxu0 0
      %1303 = vmatpush1.bf16.msra.mxu0 0
      %1304 = vmatprep.subr.bf16.mxu0 0
      %1305 = vmatpush1.bf16.msra.mxu0 0
      %1306 = vmatprep.subr.bf16.mxu0 0
      %1307 = vmatpush1.bf16.msra.mxu0 0
      %1308 = vmatprep.subr.bf16.mxu0 0
      %1309 = vmatpush1.bf16.msra.mxu0 0
      %1310 = vmatprep.subr.bf16.mxu0 0
      %1311 = vmatpush1.bf16.msra.mxu0 0
      %1312 = vmatprep.subr.bf16.mxu0 0
      %1313 = vmatpush1.bf16.msra.mxu0 0
      %1314 = vmatprep.subr.bf16.mxu0 0
      %1315 = vmatpush1.bf16.msra.mxu0 0
      %1316 = vmatprep.subr.bf16.mxu0 0
      %1317 = vmatpush1.bf16.msra.mxu0 0
      %1318 = vmatprep.subr.bf16.mxu0 0
      %1319 = vmatpush1.bf16.msra.mxu0 0
      %1320 = vmatprep.mubr.bf16.mxu0 0
      %1321 = vmatmul.mubr.bf16.gmra.mrb[0].mxu0 %v1218
      %v1322 = vpop.f32.mrb[0].mxu0
      %v1323 = vadd.f32 %v1189, %v1322
      %v1324 = vpop.f32.mrb[0].mxu0
      %v1325 = vadd.f32 %v1191, %v1324
      %v1326 = vpop.f32.mrb[0].mxu0
      %v1327 = vadd.f32 %v1193, %v1326
      %v1328 = vpop.f32.mrb[0].mxu0
      %v1329 = vadd.f32 %v1195, %v1328
      %1330 = vmatprep.mubr.bf16.mxu0 0
      %1331 = vmatmul.mubr.bf16.gmra.mrb[0].mxu0 %v1221
      %v1332 = vpop.f32.mrb[0].mxu0
      %v1333 = vadd.f32 %v1199, %v1332
      %v1334 = vpop.f32.mrb[0].mxu0
      %v1335 = vadd.f32 %v1201, %v1334
      %v1336 = vpop.f32.mrb[0].mxu0
      %v1337 = vadd.f32 %v1203, %v1336
      %v1338 = vpop.f32.mrb[0].mxu0
      %v1339 = vadd.f32 %v1205, %v1338
      %1340 = vdwg.mxu0
      %v1341 = vld [vmem:[%s3] sm:$0xff]
      %v1342 = vld [vmem:[%s3 + $0x8] sm:$0xff]
      %v1343 = vld [vmem:[%s3 + $0x10] sm:$0xff]
      %v1344 = vld [vmem:[%s3 + $0x18] sm:$0xff]
      %1346 = vset.pattern.permute.xlu0 0
      %1347 = vperm.xlu0 %1346, %v1341
      %v1348 = vpop.permute.xlu0 %1347
      %1351 = vset.pattern.permute.xlu0 0
      %1352 = vperm.xlu0 %1351, %v1342
      %v1353 = vpop.permute.xlu0 %1352
      %1356 = vset.pattern.permute.xlu0 0
      %1357 = vperm.xlu0 %1356, %v1343
      %v1358 = vpop.permute.xlu0 %1357
      %1361 = vset.pattern.permute.xlu0 0
      %1362 = vperm.xlu0 %1361, %v1344
      %v1363 = vpop.permute.xlu0 %1362
      %v1365 = vadd.f32 %v1270, %v1348
      %v1366 = vadd.f32 %v1272, %v1348
      %v1367 = vadd.f32 %v1323, %v1348
      %v1368 = vadd.f32 %v1325, %v1348
      %v1369 = vadd.f32 %v1274, %v1353
      %v1370 = vadd.f32 %v1276, %v1353
      %v1371 = vadd.f32 %v1327, %v1353
      %v1372 = vadd.f32 %v1329, %v1353
      %v1373 = vadd.f32 %v1280, %v1358
      %v1374 = vadd.f32 %v1282, %v1358
      %v1375 = vadd.f32 %v1333, %v1358
      %v1376 = vadd.f32 %v1335, %v1358
      %v1377 = vadd.f32 %v1284, %v1363
      %v1378 = vadd.f32 %v1286, %v1363
      %v1379 = vadd.f32 %v1337, %v1363
      %v1380 = vadd.f32 %v1339, %v1363
      %v1381 = vld [vmem:[%s4] sm:$0xff]
      %v1382 = vld [vmem:[%s4 + $0x8] sm:$0xff]
      %v1383 = vld [vmem:[%s4 + $0x10] sm:$0xff]
      %v1384 = vld [vmem:[%s4 + $0x18] sm:$0xff]
      %v1385 = vmul.f32 %v1381, %v751
      %v1386 = vmul.f32 %v1382, %v752
      %v1387 = vmul.f32 %v1383, %v753
      %v1388 = vmul.f32 %v1384, %v754
      %v1389 = vadd.f32 %v1365, %v1385
      %v1390 = vadd.f32 %v1366, %v1386
      %v1391 = vadd.f32 %v1367, %v1387
      %v1392 = vadd.f32 %v1368, %v1388
      %v1393 = vsub.f32 0.0, %v1389
      %v1394 = vsub.f32 0.0, %v1390
      %v1395 = vsub.f32 0.0, %v1391
      %v1396 = vsub.f32 0.0, %v1392
      %v1397 = vmul.f32 %v1393, 1.442695
      %v1398 = vpow.pop %v1397
      %v1399 = vmul.f32 %v1394, 1.442695
      %v1400 = vpow.pop %v1399
      %v1401 = vmul.f32 %v1395, 1.442695
      %v1402 = vpow.pop %v1401
      %v1403 = vmul.f32 %v1396, 1.442695
      %v1404 = vpow.pop %v1403
      %v1405 = vadd.f32 %v1398, 1.0
      %v1406 = vadd.f32 %v1400, 1.0
      %v1407 = vadd.f32 %v1402, 1.0
      %v1408 = vadd.f32 %v1404, 1.0
      %v1409 = vrcp.pop %v1405
      %v1410 = vrcp.pop %v1406
      %v1411 = vrcp.pop %v1407
      %v1412 = vrcp.pop %v1408
      %v1413 = vld [vmem:[%s5] sm:$0xff]
      %v1414 = vld [vmem:[%s5 + $0x8] sm:$0xff]
      %v1415 = vld [vmem:[%s5 + $0x10] sm:$0xff]
      %v1416 = vld [vmem:[%s5 + $0x18] sm:$0xff]
      %v1417 = vmul.f32 %v1413, %v751
      %v1418 = vmul.f32 %v1414, %v752
      %v1419 = vmul.f32 %v1415, %v753
      %v1420 = vmul.f32 %v1416, %v754
      %v1421 = vadd.f32 %v1369, %v1417
      %v1422 = vadd.f32 %v1370, %v1418
      %v1423 = vadd.f32 %v1371, %v1419
      %v1424 = vadd.f32 %v1372, %v1420
      %v1425 = vsub.f32 0.0, %v1421
      %v1426 = vsub.f32 0.0, %v1422
      %v1427 = vsub.f32 0.0, %v1423
      %v1428 = vsub.f32 0.0, %v1424
      %v1429 = vmul.f32 %v1425, 1.442695
      %v1430 = vpow.pop %v1429
      %v1431 = vmul.f32 %v1426, 1.442695
      %v1432 = vpow.pop %v1431
      %v1433 = vmul.f32 %v1427, 1.442695
      %v1434 = vpow.pop %v1433
      %v1435 = vmul.f32 %v1428, 1.442695
      %v1436 = vpow.pop %v1435
      %v1437 = vadd.f32 %v1430, 1.0
      %v1438 = vadd.f32 %v1432, 1.0
      %v1439 = vadd.f32 %v1434, 1.0
      %v1440 = vadd.f32 %v1436, 1.0
      %v1441 = vrcp.pop %v1437
      %v1442 = vrcp.pop %v1438
      %v1443 = vrcp.pop %v1439
      %v1444 = vrcp.pop %v1440
      %v1445 = vmul.f32 %v1441, %v751
      %v1446 = vmul.f32 %v1442, %v752
      %v1447 = vmul.f32 %v1443, %v753
      %v1448 = vmul.f32 %v1444, %v754
      %v1449 = vtanh.pop %v1373
      %v1450 = vtanh.pop %v1374
      %v1451 = vtanh.pop %v1375
      %v1452 = vtanh.pop %v1376
      %v1453 = vmul.f32 %v1409, %v1449
      %v1454 = vmul.f32 %v1410, %v1450
      %v1455 = vmul.f32 %v1411, %v1451
      %v1456 = vmul.f32 %v1412, %v1452
      %v1457 = vadd.f32 %v1445, %v1453
      %v1458 = vadd.f32 %v1446, %v1454
      %v1459 = vadd.f32 %v1447, %v1455
      %v1460 = vadd.f32 %v1448, %v1456
      %v1461 = vld [vmem:[%s6] sm:$0xff]
      %v1462 = vld [vmem:[%s6 + $0x8] sm:$0xff]
      %v1463 = vld [vmem:[%s6 + $0x10] sm:$0xff]
      %v1464 = vld [vmem:[%s6 + $0x18] sm:$0xff]
      %v1465 = vmul.f32 %v1461, %v1457
      %v1466 = vmul.f32 %v1462, %v1458
      %v1467 = vmul.f32 %v1463, %v1459
      %v1468 = vmul.f32 %v1464, %v1460
      %v1469 = vadd.f32 %v1377, %v1465
      %v1470 = vadd.f32 %v1378, %v1466
      %v1471 = vadd.f32 %v1379, %v1467
      %v1472 = vadd.f32 %v1380, %v1468
      %v1473 = vsub.f32 0.0, %v1469
      %v1474 = vsub.f32 0.0, %v1470
      %v1475 = vsub.f32 0.0, %v1471
      %v1476 = vsub.f32 0.0, %v1472
      %v1477 = vmul.f32 %v1473, 1.442695
      %v1478 = vpow.pop %v1477
      %v1479 = vmul.f32 %v1474, 1.442695
      %v1480 = vpow.pop %v1479
      %v1481 = vmul.f32 %v1475, 1.442695
      %v1482 = vpow.pop %v1481
      %v1483 = vmul.f32 %v1476, 1.442695
      %v1484 = vpow.pop %v1483
      %v1485 = vadd.f32 %v1478, 1.0
      %v1486 = vadd.f32 %v1480, 1.0
      %v1487 = vadd.f32 %v1482, 1.0
      %v1488 = vadd.f32 %v1484, 1.0
      %v1489 = vrcp.pop %v1485
      %v1490 = vrcp.pop %v1486
      %v1491 = vrcp.pop %v1487
      %v1492 = vrcp.pop %v1488
      %v1493 = vtanh.pop %v1457
      %v1494 = vtanh.pop %v1458
      %v1495 = vtanh.pop %v1459
      %v1496 = vtanh.pop %v1460
      %v1497 = vmul.f32 %v1489, %v1493
      %v1498 = vmul.f32 %v1490, %v1494
      %v1499 = vmul.f32 %v1491, %v1495
      %v1500 = vmul.f32 %v1492, %v1496
      %1501 = vst [vmem:[#allocation2] sm:$0xff] %v1497
      %1502 = vst [vmem:[#allocation2 + $0x8] sm:$0xff] %v1498
      %1503 = vst [vmem:[#allocation2 + $0x10] sm:$0xff] %v1499
      %1504 = vst [vmem:[#allocation2 + $0x18] sm:$0xff] %v1500
      %1505 = vst [vmem:[#allocation3] sm:$0xff] %v1457
      %1506 = vst [vmem:[#allocation3 + $0x8] sm:$0xff] %v1458
      %1507 = vst [vmem:[#allocation3 + $0x10] sm:$0xff] %v1459
      %1508 = vst [vmem:[#allocation3 + $0x18] sm:$0xff] %v1460
      %1509 = vst [vmem:[%s491] sm:$0xff] %v1497
      %1510 = vst [vmem:[%s491 + $0x8] sm:$0xff] %v1498
      %1511 = vst [vmem:[%s491 + $0x10] sm:$0xff] %v1499
      %1512 = vst [vmem:[%s491 + $0x18] sm:$0xff] %v1500
      %v1513 = vld [vmem:[%s496] sm:$0xff]
      %v1514 = vadd.f32 %v1497, %v1498
      %v1515 = vadd.f32 %v1514, %v1499
      %v1516 = vadd.f32 %v1515, %v1500
      %1517 = vadd.xlane.f32.xlu0 %v1516
      %v1518 = vpop.xlane.xlu0 %1517
      %v1519 = vadd.f32 %v1513, %v1518
      %vm1520 = vcmask 7168
      %1521 = vst.msk [vmem:[%s496] sm:$0xff] %vm1520, %v1519
      %v1522 = vld [vmem:[%s500] sm:$0xff]
      %v1523 = vmul.f32 %v1497, %v1497
      %v1524 = vmul.f32 %v1498, %v1498
      %v1525 = vmul.f32 %v1499, %v1499
      %v1526 = vmul.f32 %v1500, %v1500
      %v1527 = vadd.f32 %v1523, %v1524
      %v1528 = vadd.f32 %v1527, %v1525
      %v1529 = vadd.f32 %v1528, %v1526
      %1530 = vadd.xlane.f32.xlu0 %v1529
      %v1531 = vpop.xlane.xlu0 %1530
      %v1532 = vadd.f32 %v1522, %v1531
      %1533 = vst.msk [vmem:[%s500] sm:$0xff] %vm1520, %v1532
      %s1534 = smul.u32 4, %s29
      %p1535 = scmp.lt.s32.totalorder %s30, 3
      %s1536 = scalar_select %p1535, %s30, 3
      %p1537 = scmp.lt.s32.totalorder %s1534, 3
      %s1538 = scalar_select %p1537, %s1534, 3
      %s1539 = smul.addr %s1536, 4
      %s1540 = sadd.s32 %s1538, %s1539
      %s1541 = smul.addr %s1540, 8
      %s1542 = scalar_lea.vmem %s11, %s1541
      %p1543 = scmp.lt.s32.totalorder %s29, 0
      %s1544 = scalar_select %p1543, %s29, 0
      %s1545 = smul.addr %s1544, 8
      %s1546 = scalar_lea.vmem %s12, %s1545
      %p1547 = scmp.lt.s32.totalorder %s29, 0
      %s1548 = scalar_select %p1547, %s29, 0
      %s1549 = smul.addr %s1548, 8
      %s1550 = scalar_lea.vmem %s13, %s1549
      // Predicated region
      $region69: #{seq2seq_forward.3} parent=63 // pred_check
        %p1551 = pneg %p295
      $region70: #{seq2seq_forward.3} parent=63 // pred_check_branch
        %1553 = sbr.rel (%p1551) target = $region72
      $region71: #{seq2seq_forward.3} parent=63 // pred_region
        %s1554 = smul.u32 4, %s29
      $region72: #{seq2seq_forward.3} parent=63 // pred_fallthru
        _
      // Predicated region
      $region73: #{seq2seq_forward.3} parent=63 // pred_check
        %p1555 = pneg %p321
      $region74: #{seq2seq_forward.3} parent=63 // pred_check_branch
        %1557 = sbr.rel (%p1555) target = $region76
      $region75: #{seq2seq_forward.3} parent=63 // pred_region
        _
      $region76: #{seq2seq_forward.3} parent=63 // pred_fallthru
        _
      // Predicated region
      $region77: #{seq2seq_forward.3} parent=63 // pred_check
        %p1558 = pneg %p347
      $region78: #{seq2seq_forward.3} parent=63 // pred_check_branch
        %1560 = sbr.rel (%p1558) target = $region80
      $region79: #{seq2seq_forward.3} parent=63 // pred_region
        _
      $region80: #{seq2seq_forward.3} parent=63 // pred_fallthru
        _
      // Predicated region
      $region81: #{seq2seq_forward.3} parent=63 // pred_check
        %p1561 = pneg %p321
      $region82: #{seq2seq_forward.3} parent=63 // pred_check_branch
        %1563 = sbr.rel (%p1561) target = $region84
      $region83: #{seq2seq_forward.3} parent=63 // pred_region
        %p1564 = scmp.lt.s32.totalorder %s29, 0
        %s1565 = scalar_select %p1564, %s29, 0
        %s1566 = smul.addr %s1565, 8
        %s1567 = scalar_lea.vmem %s12, %s1566
      $region84: #{seq2seq_forward.3} parent=63 // pred_fallthru
        _
      // Predicated region
      $region85: #{seq2seq_forward.3} parent=63 // pred_check
        %p1568 = pneg %p347
      $region86: #{seq2seq_forward.3} parent=63 // pred_check_branch
        %1570 = sbr.rel (%p1568) target = $region88
      $region87: #{seq2seq_forward.3} parent=63 // pred_region
        %p1571 = scmp.lt.s32.totalorder %s29, 0
        %s1572 = scalar_select %p1571, %s29, 0
        %s1573 = smul.addr %s1572, 8
        %s1574 = scalar_lea.vmem %s13, %s1573
      $region88: #{seq2seq_forward.3} parent=63 // pred_fallthru
        _
    $region64: #{seq2seq_forward.3} parent=5 // pred_fallthru
      _
    %p1575 = scmp.le.s32.totalorder 2, %s20
    // Predicated region
    $region89: #{seq2seq_forward.3} parent=5 // pred_check
      %p1576 = pneg %p1575
    $region90: #{seq2seq_forward.3} parent=5 // pred_check_branch
      %1578 = sbr.rel (%p1576) target = $region92
    $region91: #{seq2seq_forward.3} parent=5 // pred_region
      %s1579 = ssub.s32 %s20, 2
      // Predicated region
      $region93: #{seq2seq_forward.3} parent=91 // pred_check
        %p1580 = pneg %p301
      $region94: #{seq2seq_forward.3} parent=91 // pred_check_branch
        %1582 = sbr.rel (%p1580) target = $region96
      $region95: #{seq2seq_forward.3} parent=91 // pred_region
        %s1583 = smul.u32 4, %s31
        %p1584 = scmp.lt.s32.totalorder %s32, 3
        %s1585 = scalar_select %p1584, %s32, 3
        %p1586 = scmp.lt.s32.totalorder %s1583, 3
        %s1587 = scalar_select %p1586, %s1583, 3
        %s1588 = smul.addr %s1585, 4
        %s1589 = sadd.s32 %s1587, %s1588
        %s1590 = smul.addr %s1589, 8
        %s1591 = scalar_lea.vmem %s11, %s1590
      $region96: #{seq2seq_forward.3} parent=91 // pred_fallthru
        _
    $region92: #{seq2seq_forward.3} parent=5 // pred_fallthru
      _
  $region6: #{seq2seq_forward.3} parent=0 // loop_footer
    %s24 = sadd.s32 1, %s20
  $region7: #{seq2seq_forward.3} parent=0 // loop_footer_branch
    %19 = sbr.rel target = $region3
  $region8: #{seq2seq_forward.3} parent=0 // loop_exit
    _

</llo_original>
